<compile_context>
chip_gen: v5e
topology: v5e:2x2
jax: 0.10.0
libtpu: 0.0.40
codegen_flags: <defaults>
</compile_context>

<pallas_src>
import functools

import jax
import jax.numpy as jnp
from jax.experimental import pallas as pl
from jax.experimental.pallas import tpu as pltpu

_EPS = 1e-5
_NEG_SLOPE = 0.2
_VMEM_LIMIT = 32 * 1024 * 1024  # safe on v5e/v6e (128 MiB) and v7x (64 MiB)


def _round_up(n, m):
    return ((n + m - 1) // m) * m


def _choose_tm(M):
    """Largest row-tile <= 512 that divides M (fallback: whole M)."""
    for cand in (512, 256, 128, 64, 32, 16, 8):
        if M % cand == 0:
            return cand
    return M


# ----------------------------------------------------------------------------
# Kernels
# ----------------------------------------------------------------------------
def _gemm_act_kernel(p_ref, w_ref, o_ref, *, use_lrelu):
    """(tm, K) @ (K, N) on the MXU, optional LeakyReLU(0.2)."""
    x = jnp.dot(p_ref[...], w_ref[...], preferred_element_type=jnp.float32)
    if use_lrelu:
        x = jnp.maximum(x, _NEG_SLOPE * x)
    o_ref[...] = x.astype(o_ref.dtype)


def _gemm_stats_kernel(p_ref, w_ref, y_ref, sum_ref, sq_ref):
    """GEMM block + per-channel sum / sum-of-squares accumulation (for BN)."""
    i = pl.program_id(0)

    @pl.when(i == 0)
    def _():
        sum_ref[...] = jnp.zeros_like(sum_ref)
        sq_ref[...] = jnp.zeros_like(sq_ref)

    x = jnp.dot(p_ref[...], w_ref[...], preferred_element_type=jnp.float32)
    y_ref[...] = x.astype(y_ref.dtype)
    sum_ref[...] += jnp.sum(x, axis=0, keepdims=True)
    sq_ref[...] += jnp.sum(x * x, axis=0, keepdims=True)


def _affine_lrelu_kernel(y_ref, scale_ref, shift_ref, o_ref):
    """y * scale + shift followed by LeakyReLU(0.2) (BN normalize pass)."""
    x = y_ref[...] * scale_ref[...] + shift_ref[...]
    x = jnp.maximum(x, _NEG_SLOPE * x)
    o_ref[...] = x.astype(o_ref.dtype)


# ----------------------------------------------------------------------------
# pallas_call wrappers
# ----------------------------------------------------------------------------
def _conv_gemm(patches, wmat, *, use_lrelu, out_dtype):
    M, K = patches.shape
    Np = wmat.shape[1]
    tm = _choose_tm(M)
    return pl.pallas_call(
        functools.partial(_gemm_act_kernel, use_lrelu=use_lrelu),
        out_shape=jax.ShapeDtypeStruct((M, Np), out_dtype),
        grid=(M // tm,),
        in_specs=[
            pl.BlockSpec((tm, K), lambda i: (i, 0)),
            pl.BlockSpec((K, Np), lambda i: (0, 0)),
        ],
        out_specs=pl.BlockSpec((tm, Np), lambda i: (i, 0)),
        compiler_params=pltpu.CompilerParams(
            dimension_semantics=("parallel",),
            vmem_limit_bytes=_VMEM_LIMIT),
    )(patches, wmat)


def _conv_gemm_stats(patches, wmat):
    M, K = patches.shape
    Np = wmat.shape[1]
    tm = _choose_tm(M)
    return pl.pallas_call(
        _gemm_stats_kernel,
        out_shape=(
            jax.ShapeDtypeStruct((M, Np), jnp.float32),
            jax.ShapeDtypeStruct((1, Np), jnp.float32),
            jax.ShapeDtypeStruct((1, Np), jnp.float32),
        ),
        grid=(M // tm,),
        in_specs=[
            pl.BlockSpec((tm, K), lambda i: (i, 0)),
            pl.BlockSpec((K, Np), lambda i: (0, 0)),
        ],
        out_specs=(
            pl.BlockSpec((tm, Np), lambda i: (i, 0)),
            pl.BlockSpec((1, Np), lambda i: (0, 0)),   # resident accumulator
            pl.BlockSpec((1, Np), lambda i: (0, 0)),   # resident accumulator
        ),
        compiler_params=pltpu.CompilerParams(
            dimension_semantics=("arbitrary",),        # stats accumulate over M
            vmem_limit_bytes=_VMEM_LIMIT),
    )(patches, wmat)


def _affine_lrelu(y, scale, shift, out_dtype):
    M, Np = y.shape
    tm = _choose_tm(M)
    return pl.pallas_call(
        _affine_lrelu_kernel,
        out_shape=jax.ShapeDtypeStruct((M, Np), out_dtype),
        grid=(M // tm,),
        in_specs=[
            pl.BlockSpec((tm, Np), lambda i: (i, 0)),
            pl.BlockSpec((1, Np), lambda i: (0, 0)),
            pl.BlockSpec((1, Np), lambda i: (0, 0)),
        ],
        out_specs=pl.BlockSpec((tm, Np), lambda i: (i, 0)),
        compiler_params=pltpu.CompilerParams(
            dimension_semantics=("parallel",),
            vmem_limit_bytes=_VMEM_LIMIT),
    )(y, scale, shift)


# ----------------------------------------------------------------------------
# im2col (NHWC, lane-contiguous) and layer wrappers
# ----------------------------------------------------------------------------
def _im2col_nhwc(x, kh=4, kw=4, stride=2, pad=1):
    """x: (B, H, W, C) -> patches (B*Ho*Wo, kh*kw*C), column order (kh, kw, C)."""
    B, H, W, C = x.shape
    xp = jnp.pad(x, ((0, 0), (pad, pad), (pad, pad), (0, 0)))
    Ho = (H + 2 * pad - kh) // stride + 1
    Wo = (W + 2 * pad - kw) // stride + 1
    cols = []
    for i in range(kh):
        for j in range(kw):
            cols.append(xp[:, i:i + stride * Ho:stride, j:j + stride * Wo:stride, :])
    patches = jnp.stack(cols, axis=3)                  # (B, Ho, Wo, kh*kw, C)
    return patches.reshape(B * Ho * Wo, kh * kw * C), Ho, Wo


def conv_block(x_nhwc, wmat, *, use_lrelu, out_dtype=jnp.bfloat16):
    B = x_nhwc.shape[0]
    patches, Ho, Wo = _im2col_nhwc(x_nhwc)
    out = _conv_gemm(patches.astype(jnp.bfloat16), wmat,
                     use_lrelu=use_lrelu, out_dtype=out_dtype)
    return out.reshape(B, Ho, Wo, wmat.shape[1])


def conv_bn_lrelu_block(x_nhwc, wmat, gamma_p, beta_p):
    """Conv + training-mode BatchNorm (biased batch stats) + LeakyReLU(0.2)."""
    B = x_nhwc.shape[0]
    patches, Ho, Wo = _im2col_nhwc(x_nhwc)
    M = patches.shape[0]
    y, s, sq = _conv_gemm_stats(patches.astype(jnp.bfloat16), wmat)
    mean = s / M
    var = jnp.maximum(sq / M - mean * mean, 0.0)       # E[x^2] - mean^2
    scale = gamma_p * jax.lax.rsqrt(var + _EPS)
    shift = beta_p - mean * scale
    out = _affine_lrelu(y, scale, shift, jnp.bfloat16)
    return out.reshape(B, Ho, Wo, wmat.shape[1])


# ----------------------------------------------------------------------------
# Parameters
# ----------------------------------------------------------------------------
def init_params(key, n_channels, ndf):
    """Deterministic synthetic parameters in PyTorch layout."""
    k1, k2, k3, k4 = jax.random.split(key, 4)
    std = 0.02
    return {
        "w1": std * jax.random.normal(k1, (ndf, n_channels, 4, 4), jnp.float32),
        "w2": std * jax.random.normal(k2, (ndf * 2, ndf, 4, 4), jnp.float32),
        "g2": jnp.ones((ndf * 2,), jnp.float32),
        "b2": jnp.zeros((ndf * 2,), jnp.float32),
        "w3": std * jax.random.normal(k3, (ndf * 4, ndf * 2, 4, 4), jnp.float32),
        "g3": jnp.ones((ndf * 4,), jnp.float32),
        "b3": jnp.zeros((ndf * 4,), jnp.float32),
        "w4": std * jax.random.normal(k4, (1, ndf * 4, 4, 4), jnp.float32),
    }


def _prep_weight(w, cin_pad, cout_pad):
    """(Cout, Cin, 4, 4) -> zero-padded (16*cin_pad, cout_pad) bf16 GEMM matrix."""
    cout, cin, kh, kw = w.shape
    w = jnp.pad(w, ((0, cout_pad - cout), (0, cin_pad - cin), (0, 0), (0, 0)))
    w = jnp.transpose(w, (2, 3, 1, 0)).reshape(kh * kw * cin_pad, cout_pad)
    return w.astype(jnp.bfloat16)


def _prep_affine(v, cpad):
    return jnp.pad(v, (0, cpad - v.shape[0])).reshape(1, cpad).astype(jnp.float32)


def prepare_params(params, n_channels, ndf):
    """Hoisted, one-time weight repacking (pad channels, (K,N) layout, bf16)."""
    cin0 = _round_up(n_channels, 8)         # K1 = 16*cin0 is a multiple of 128
    c1 = _round_up(ndf, 128)
    c2 = _round_up(ndf * 2, 128)
    c3 = _round_up(ndf * 4, 128)
    c4 = 128                                # lane-dense head (true Cout = 1)
    return {
        "w1": _prep_weight(params["w1"], cin0, c1),
        "w2": _prep_weight(params["w2"], c1, c2),
        "g2": _prep_affine(params["g2"], c2),
        "b2": _prep_affine(params["b2"], c2),
        "w3": _prep_weight(params["w3"], c2, c3),
        "g3": _prep_affine(params["g3"], c3),
        "b3": _prep_affine(params["b3"], c3),
        "w4": _prep_weight(params["w4"], c3, c4),
    }


# ----------------------------------------------------------------------------
# Forward pass
# ----------------------------------------------------------------------------
def patch_image_discriminator(prep, x_nchw):
    """Forward pass (use_noise=False => Noise layers are identity)."""
    # TODO(synk): stochastic Noise layers not implemented (use_noise=False
    # default); add pltpu.prng_seed/prng_random_bits if ever needed.
    cin_pad = prep["w1"].shape[0] // 16
    x = jnp.transpose(x_nchw, (0, 2, 3, 1))                       # NCHW -> NHWC once
    x = jnp.pad(x, ((0, 0), (0, 0), (0, 0), (0, cin_pad - x.shape[-1])))
    x = x.astype(jnp.bfloat16)

    h = conv_block(x, prep["w1"], use_lrelu=True)
    h = conv_bn_lrelu_block(h, prep["w2"], prep["g2"], prep["b2"])
    h = conv_bn_lrelu_block(h, prep["w3"], prep["g3"], prep["b3"])
    h = conv_block(h, prep["w4"], use_lrelu=False, out_dtype=jnp.float32)

    h = h[..., 0]          # drop the zero-padded head channels -> (B, Ho, Wo)
    h = jnp.squeeze(h)     # matches torch .squeeze()
    return h, None


if __name__ == "__main__":
    key = jax.random.PRNGKey(0)
    pkey, xkey = jax.random.split(key)

    n_channels, ndf = 3, 32            # small ndf for a quick synthetic run
    B, H, W = 2, 32, 32                # spatial 32 -> 16 -> 8 -> 4 -> 2

    params = init_params(pkey, n_channels, ndf)
    prep = prepare_params(params, n_channels, ndf)     # one-time weight prep
    x = jax.random.normal(xkey, (B, n_channels, H, W), jnp.float32)

    fwd = jax.jit(patch_image_discriminator)
    h, aux = fwd(prep, x)
    jax.block_until_ready(h)
    assert h.shape == (B, 2, 2) and aux is None
    print("KERNEL_OK")
</pallas_src>

<mosaic_0001>
module attributes {stable_mosaic.version = 11 : i64} {
  func.func @_gemm_act_kernel(%arg0: i32, %arg1: memref<512x128xbf16, #tpu.memory_space<vmem>>, %arg2: memref<128x128xbf16, #tpu.memory_space<vmem>>, %arg3: memref<512x128xbf16, #tpu.memory_space<vmem>>) attributes {dimension_semantics = [#tpu.dimension_semantics<parallel>], iteration_bounds = array<i64: 1>, scalar_prefetch = 0 : i64, scratch_operands = 0 : i64, tpu.core_type = #tpu.core_type<tc>, window_params = [{transform_indices = @transform_0, window_bounds = array<i64: 512, 128>}, {pipeline_mode = #tpu.pipeline_mode<synchronous>, transform_indices = @transform_1, window_bounds = array<i64: 128, 128>}, {transform_indices = @transform_2, window_bounds = array<i64: 512, 128>}]} {
    %c0 = arith.constant 0 : index
    %c0_0 = arith.constant 0 : index
    %0 = vector.load %arg1[%c0, %c0_0] : memref<512x128xbf16, #tpu.memory_space<vmem>>, vector<512x128xbf16>
    %c0_1 = arith.constant 0 : index
    %c0_2 = arith.constant 0 : index
    %1 = vector.load %arg2[%c0_1, %c0_2] : memref<128x128xbf16, #tpu.memory_space<vmem>>, vector<128x128xbf16>
    %cst = arith.constant dense<0.000000e+00> : vector<512x128xf32>
    %2 = tpu.matmul %0, %1, %cst {dimension_numbers = #tpu.dot_dimension_numbers<[1], [0], [0], [1], [0, 0, 1, 1], [], []>} : vector<512x128xbf16>, vector<128x128xbf16>, vector<512x128xf32> -> vector<512x128xf32>
    %cst_3 = arith.constant 2.000000e-01 : f32
    %3 = vector.broadcast %cst_3 : f32 to vector<512x128xf32>
    %4 = arith.mulf %3, %2 : vector<512x128xf32>
    %5 = arith.maximumf %2, %4 : vector<512x128xf32>
    %6 = arith.truncf %5 : vector<512x128xf32> to vector<512x128xbf16>
    %c0_4 = arith.constant 0 : index
    %c0_5 = arith.constant 0 : index
    %7 = vector.load %arg3[%c0_4, %c0_5] : memref<512x128xbf16, #tpu.memory_space<vmem>>, vector<512x128xbf16>
    tpu.vector_store %arg3[%c0_4, %c0_5], %6 {strides = array<i32>} : memref<512x128xbf16, #tpu.memory_space<vmem>>, vector<512x128xbf16>,
    return
  }
  func.func @transform_0(%arg0: i32) -> (i32, i32) {
    %c0_i32 = arith.constant 0 : i32
    %c0_i32_0 = arith.constant 0 : i32
    return %arg0, %c0_i32 : i32, i32
  }
  func.func @transform_1(%arg0: i32) -> (i32, i32) {
    %c0_i32 = arith.constant 0 : i32
    %c0_i32_0 = arith.constant 0 : i32
    %c0_i32_1 = arith.constant 0 : i32
    return %c0_i32, %c0_i32_0 : i32, i32
  }
  func.func @transform_2(%arg0: i32) -> (i32, i32) {
    %c0_i32 = arith.constant 0 : i32
    %c0_i32_0 = arith.constant 0 : i32
    return %arg0, %c0_i32 : i32, i32
  }
}

module attributes {stable_mosaic.version = 11 : i64} {
  func.func @_affine_lrelu_kernel(%arg0: i32, %arg1: memref<128x128xf32, #tpu.memory_space<vmem>>, %arg2: memref<1x128xf32, #tpu.memory_space<vmem>>, %arg3: memref<1x128xf32, #tpu.memory_space<vmem>>, %arg4: memref<128x128xbf16, #tpu.memory_space<vmem>>) attributes {dimension_semantics = [#tpu.dimension_semantics<parallel>], iteration_bounds = array<i64: 1>, scalar_prefetch = 0 : i64, scratch_operands = 0 : i64, tpu.core_type = #tpu.core_type<tc>, window_params = [{transform_indices = @transform_0, window_bounds = array<i64: 128, 128>}, {pipeline_mode = #tpu.pipeline_mode<synchronous>, transform_indices = @transform_1, window_bounds = array<i64: 1, 128>}, {pipeline_mode = #tpu.pipeline_mode<synchronous>, transform_indices = @transform_2, window_bounds = array<i64: 1, 128>}, {transform_indices = @transform_3, window_bounds = array<i64: 128, 128>}]} {
    %c0 = arith.constant 0 : index
    %c0_0 = arith.constant 0 : index
    %0 = vector.load %arg1[%c0, %c0_0] : memref<128x128xf32, #tpu.memory_space<vmem>>, vector<128x128xf32>
    %c0_1 = arith.constant 0 : index
    %c0_2 = arith.constant 0 : index
    %1 = vector.load %arg2[%c0_1, %c0_2] : memref<1x128xf32, #tpu.memory_space<vmem>>, vector<1x128xf32>
    %2 = vector.broadcast %1 : vector<1x128xf32> to vector<128x128xf32>
    %3 = arith.mulf %0, %2 : vector<128x128xf32>
    %c0_3 = arith.constant 0 : index
    %c0_4 = arith.constant 0 : index
    %4 = vector.load %arg3[%c0_3, %c0_4] : memref<1x128xf32, #tpu.memory_space<vmem>>, vector<1x128xf32>
    %5 = vector.broadcast %4 : vector<1x128xf32> to vector<128x128xf32>
    %6 = arith.addf %3, %5 : vector<128x128xf32>
    %cst = arith.constant 2.000000e-01 : f32
    %7 = vector.broadcast %cst : f32 to vector<128x128xf32>
    %8 = arith.mulf %7, %6 : vector<128x128xf32>
    %9 = arith.maximumf %6, %8 : vector<128x128xf32>
    %10 = arith.truncf %9 : vector<128x128xf32> to vector<128x128xbf16>
    %c0_5 = arith.constant 0 : index
    %c0_6 = arith.constant 0 : index
    %11 = vector.load %arg4[%c0_5, %c0_6] : memref<128x128xbf16, #tpu.memory_space<vmem>>, vector<128x128xbf16>
    tpu.vector_store %arg4[%c0_5, %c0_6], %10 {strides = array<i32>} : memref<128x128xbf16, #tpu.memory_space<vmem>>, vector<128x128xbf16>,
    return
  }
  func.func @transform_0(%arg0: i32) -> (i32, i32) {
    %c0_i32 = arith.constant 0 : i32
    %c0_i32_0 = arith.constant 0 : i32
    return %arg0, %c0_i32 : i32, i32
  }
  func.func @transform_1(%arg0: i32) -> (i32, i32) {
    %c0_i32 = arith.constant 0 : i32
    %c0_i32_0 = arith.constant 0 : i32
    %c0_i32_1 = arith.constant 0 : i32
    return %c0_i32, %c0_i32_0 : i32, i32
  }
  func.func @transform_2(%arg0: i32) -> (i32, i32) {
    %c0_i32 = arith.constant 0 : i32
    %c0_i32_0 = arith.constant 0 : i32
    %c0_i32_1 = arith.constant 0 : i32
    return %c0_i32, %c0_i32_0 : i32, i32
  }
  func.func @transform_3(%arg0: i32) -> (i32, i32) {
    %c0_i32 = arith.constant 0 : i32
    %c0_i32_0 = arith.constant 0 : i32
    return %arg0, %c0_i32 : i32, i32
  }
}

module attributes {stable_mosaic.version = 11 : i64} {
  func.func @_gemm_stats_kernel(%arg0: i32, %arg1: memref<128x2048xbf16, #tpu.memory_space<vmem>>, %arg2: memref<2048x128xbf16, #tpu.memory_space<vmem>>, %arg3: memref<128x128xf32, #tpu.memory_space<vmem>>, %arg4: memref<1x128xf32, #tpu.memory_space<vmem>>, %arg5: memref<1x128xf32, #tpu.memory_space<vmem>>) attributes {dimension_semantics = [#tpu.dimension_semantics<arbitrary>], iteration_bounds = array<i64: 1>, scalar_prefetch = 0 : i64, scratch_operands = 0 : i64, tpu.core_type = #tpu.core_type<tc>, window_params = [{transform_indices = @transform_0, window_bounds = array<i64: 128, 2048>}, {pipeline_mode = #tpu.pipeline_mode<synchronous>, transform_indices = @transform_1, window_bounds = array<i64: 2048, 128>}, {transform_indices = @transform_2, window_bounds = array<i64: 128, 128>}, {pipeline_mode = #tpu.pipeline_mode<synchronous>, transform_indices = @transform_3, window_bounds = array<i64: 1, 128>}, {pipeline_mode = #tpu.pipeline_mode<synchronous>, transform_indices = @transform_4, window_bounds = array<i64: 1, 128>}]} {
    %c0_i32 = arith.constant 0 : i32
    %0 = arith.cmpi eq, %arg0, %c0_i32 : i32
    %1 = arith.extui %0 : i1 to i32
    %c0_i32_0 = arith.constant 0 : i32
    %2 = arith.cmpi ne, %1, %c0_i32_0 : i32
    scf.if %2 {
      %cst_16 = arith.constant 0.000000e+00 : f32
      %18 = vector.broadcast %cst_16 : f32 to vector<1x128xf32>
      %c0_17 = arith.constant 0 : index
      %c0_18 = arith.constant 0 : index
      %19 = vector.load %arg4[%c0_17, %c0_18] : memref<1x128xf32, #tpu.memory_space<vmem>>, vector<1x128xf32>
      tpu.vector_store %arg4[%c0_17, %c0_18], %18 {strides = array<i32>} : memref<1x128xf32, #tpu.memory_space<vmem>>, vector<1x128xf32>,
      %cst_19 = arith.constant 0.000000e+00 : f32
      %20 = vector.broadcast %cst_19 : f32 to vector<1x128xf32>
      %c0_20 = arith.constant 0 : index
      %c0_21 = arith.constant 0 : index
      %21 = vector.load %arg5[%c0_20, %c0_21] : memref<1x128xf32, #tpu.memory_space<vmem>>, vector<1x128xf32>
      tpu.vector_store %arg5[%c0_20, %c0_21], %20 {strides = array<i32>} : memref<1x128xf32, #tpu.memory_space<vmem>>, vector<1x128xf32>,
    } else {
    }
    %c0 = arith.constant 0 : index
    %c0_1 = arith.constant 0 : index
    %3 = vector.load %arg1[%c0, %c0_1] : memref<128x2048xbf16, #tpu.memory_space<vmem>>, vector<128x2048xbf16>
    %c0_2 = arith.constant 0 : index
    %c0_3 = arith.constant 0 : index
    %4 = vector.load %arg2[%c0_2, %c0_3] : memref<2048x128xbf16, #tpu.memory_space<vmem>>, vector<2048x128xbf16>
    %cst = arith.constant dense<0.000000e+00> : vector<128x128xf32>
    %5 = tpu.matmul %3, %4, %cst {dimension_numbers = #tpu.dot_dimension_numbers<[1], [0], [0], [1], [0, 0, 1, 1], [], []>} : vector<128x2048xbf16>, vector<2048x128xbf16>, vector<128x128xf32> -> vector<128x128xf32>
    %c0_4 = arith.constant 0 : index
    %c0_5 = arith.constant 0 : index
    %6 = vector.load %arg3[%c0_4, %c0_5] : memref<128x128xf32, #tpu.memory_space<vmem>>, vector<128x128xf32>
    tpu.vector_store %arg3[%c0_4, %c0_5], %5 {strides = array<i32>} : memref<128x128xf32, #tpu.memory_space<vmem>>, vector<128x128xf32>,
    %c0_6 = arith.constant 0 : index
    %c0_7 = arith.constant 0 : index
    %7 = vector.load %arg4[%c0_6, %c0_7] : memref<1x128xf32, #tpu.memory_space<vmem>>, vector<1x128xf32>
    %cst_8 = arith.constant dense<0.000000e+00> : vector<128xf32>
    %8 = vector.multi_reduction <add>, %5, %cst_8 [0] : vector<128x128xf32> to vector<128xf32>
    %9 = vector.shape_cast %8 : vector<128xf32> to vector<1x128xf32>
    %10 = arith.addf %7, %9 : vector<1x128xf32>
    %c0_9 = arith.constant 0 : index
    %c0_10 = arith.constant 0 : index
    %11 = vector.load %arg4[%c0_9, %c0_10] : memref<1x128xf32, #tpu.memory_space<vmem>>, vector<1x128xf32>
    tpu.vector_store %arg4[%c0_9, %c0_10], %10 {strides = array<i32>} : memref<1x128xf32, #tpu.memory_space<vmem>>, vector<1x128xf32>,
    %c0_11 = arith.constant 0 : index
    %c0_12 = arith.constant 0 : index
    %12 = vector.load %arg5[%c0_11, %c0_12] : memref<1x128xf32, #tpu.memory_space<vmem>>, vector<1x128xf32>
    %13 = arith.mulf %5, %5 : vector<128x128xf32>
    %cst_13 = arith.constant dense<0.000000e+00> : vector<128xf32>
    %14 = vector.multi_reduction <add>, %13, %cst_13 [0] : vector<128x128xf32> to vector<128xf32>
    %15 = vector.shape_cast %14 : vector<128xf32> to vector<1x128xf32>
    %16 = arith.addf %12, %15 : vector<1x128xf32>
    %c0_14 = arith.constant 0 : index
    %c0_15 = arith.constant 0 : index
    %17 = vector.load %arg5[%c0_14, %c0_15] : memref<1x128xf32, #tpu.memory_space<vmem>>, vector<1x128xf32>
    tpu.vector_store %arg5[%c0_14, %c0_15], %16 {strides = array<i32>} : memref<1x128xf32, #tpu.memory_space<vmem>>, vector<1x128xf32>,
    return
  }
  func.func @transform_0(%arg0: i32) -> (i32, i32) {
    %c0_i32 = arith.constant 0 : i32
    %c0_i32_0 = arith.constant 0 : i32
    return %arg0, %c0_i32 : i32, i32
  }
  func.func @transform_1(%arg0: i32) -> (i32, i32) {
    %c0_i32 = arith.constant 0 : i32
    %c0_i32_0 = arith.constant 0 : i32
    %c0_i32_1 = arith.constant 0 : i32
    return %c0_i32, %c0_i32_0 : i32, i32
  }
  func.func @transform_2(%arg0: i32) -> (i32, i32) {
    %c0_i32 = arith.constant 0 : i32
    %c0_i32_0 = arith.constant 0 : i32
    return %arg0, %c0_i32 : i32, i32
  }
  func.func @transform_3(%arg0: i32) -> (i32, i32) {
    %c0_i32 = arith.constant 0 : i32
    %c0_i32_0 = arith.constant 0 : i32
    %c0_i32_1 = arith.constant 0 : i32
    return %c0_i32, %c0_i32_0 : i32, i32
  }
  func.func @transform_4(%arg0: i32) -> (i32, i32) {
    %c0_i32 = arith.constant 0 : i32
    %c0_i32_0 = arith.constant 0 : i32
    %c0_i32_1 = arith.constant 0 : i32
    return %c0_i32, %c0_i32_0 : i32, i32
  }
}

module attributes {stable_mosaic.version = 11 : i64} {
  func.func @_gemm_stats_kernel(%arg0: i32, %arg1: memref<32x2048xbf16, #tpu.memory_space<vmem>>, %arg2: memref<2048x128xbf16, #tpu.memory_space<vmem>>, %arg3: memref<32x128xf32, #tpu.memory_space<vmem>>, %arg4: memref<1x128xf32, #tpu.memory_space<vmem>>, %arg5: memref<1x128xf32, #tpu.memory_space<vmem>>) attributes {dimension_semantics = [#tpu.dimension_semantics<arbitrary>], iteration_bounds = array<i64: 1>, scalar_prefetch = 0 : i64, scratch_operands = 0 : i64, tpu.core_type = #tpu.core_type<tc>, window_params = [{transform_indices = @transform_0, window_bounds = array<i64: 32, 2048>}, {pipeline_mode = #tpu.pipeline_mode<synchronous>, transform_indices = @transform_1, window_bounds = array<i64: 2048, 128>}, {transform_indices = @transform_2, window_bounds = array<i64: 32, 128>}, {pipeline_mode = #tpu.pipeline_mode<synchronous>, transform_indices = @transform_3, window_bounds = array<i64: 1, 128>}, {pipeline_mode = #tpu.pipeline_mode<synchronous>, transform_indices = @transform_4, window_bounds = array<i64: 1, 128>}]} {
    %c0_i32 = arith.constant 0 : i32
    %0 = arith.cmpi eq, %arg0, %c0_i32 : i32
    %1 = arith.extui %0 : i1 to i32
    %c0_i32_0 = arith.constant 0 : i32
    %2 = arith.cmpi ne, %1, %c0_i32_0 : i32
    scf.if %2 {
      %cst_16 = arith.constant 0.000000e+00 : f32
      %18 = vector.broadcast %cst_16 : f32 to vector<1x128xf32>
      %c0_17 = arith.constant 0 : index
      %c0_18 = arith.constant 0 : index
      %19 = vector.load %arg4[%c0_17, %c0_18] : memref<1x128xf32, #tpu.memory_space<vmem>>, vector<1x128xf32>
      tpu.vector_store %arg4[%c0_17, %c0_18], %18 {strides = array<i32>} : memref<1x128xf32, #tpu.memory_space<vmem>>, vector<1x128xf32>,
      %cst_19 = arith.constant 0.000000e+00 : f32
      %20 = vector.broadcast %cst_19 : f32 to vector<1x128xf32>
      %c0_20 = arith.constant 0 : index
      %c0_21 = arith.constant 0 : index
      %21 = vector.load %arg5[%c0_20, %c0_21] : memref<1x128xf32, #tpu.memory_space<vmem>>, vector<1x128xf32>
      tpu.vector_store %arg5[%c0_20, %c0_21], %20 {strides = array<i32>} : memref<1x128xf32, #tpu.memory_space<vmem>>, vector<1x128xf32>,
    } else {
    }
    %c0 = arith.constant 0 : index
    %c0_1 = arith.constant 0 : index
    %3 = vector.load %arg1[%c0, %c0_1] : memref<32x2048xbf16, #tpu.memory_space<vmem>>, vector<32x2048xbf16>
    %c0_2 = arith.constant 0 : index
    %c0_3 = arith.constant 0 : index
    %4 = vector.load %arg2[%c0_2, %c0_3] : memref<2048x128xbf16, #tpu.memory_space<vmem>>, vector<2048x128xbf16>
    %cst = arith.constant dense<0.000000e+00> : vector<32x128xf32>
    %5 = tpu.matmul %3, %4, %cst {dimension_numbers = #tpu.dot_dimension_numbers<[1], [0], [0], [1], [0, 0, 1, 1], [], []>} : vector<32x2048xbf16>, vector<2048x128xbf16>, vector<32x128xf32> -> vector<32x128xf32>
    %c0_4 = arith.constant 0 : index
    %c0_5 = arith.constant 0 : index
    %6 = vector.load %arg3[%c0_4, %c0_5] : memref<32x128xf32, #tpu.memory_space<vmem>>, vector<32x128xf32>
    tpu.vector_store %arg3[%c0_4, %c0_5], %5 {strides = array<i32>} : memref<32x128xf32, #tpu.memory_space<vmem>>, vector<32x128xf32>,
    %c0_6 = arith.constant 0 : index
    %c0_7 = arith.constant 0 : index
    %7 = vector.load %arg4[%c0_6, %c0_7] : memref<1x128xf32, #tpu.memory_space<vmem>>, vector<1x128xf32>
    %cst_8 = arith.constant dense<0.000000e+00> : vector<128xf32>
    %8 = vector.multi_reduction <add>, %5, %cst_8 [0] : vector<32x128xf32> to vector<128xf32>
    %9 = vector.shape_cast %8 : vector<128xf32> to vector<1x128xf32>
    %10 = arith.addf %7, %9 : vector<1x128xf32>
    %c0_9 = arith.constant 0 : index
    %c0_10 = arith.constant 0 : index
    %11 = vector.load %arg4[%c0_9, %c0_10] : memref<1x128xf32, #tpu.memory_space<vmem>>, vector<1x128xf32>
    tpu.vector_store %arg4[%c0_9, %c0_10], %10 {strides = array<i32>} : memref<1x128xf32, #tpu.memory_space<vmem>>, vector<1x128xf32>,
    %c0_11 = arith.constant 0 : index
    %c0_12 = arith.constant 0 : index
    %12 = vector.load %arg5[%c0_11, %c0_12] : memref<1x128xf32, #tpu.memory_space<vmem>>, vector<1x128xf32>
    %13 = arith.mulf %5, %5 : vector<32x128xf32>
    %cst_13 = arith.constant dense<0.000000e+00> : vector<128xf32>
    %14 = vector.multi_reduction <add>, %13, %cst_13 [0] : vector<32x128xf32> to vector<128xf32>
    %15 = vector.shape_cast %14 : vector<128xf32> to vector<1x128xf32>
    %16 = arith.addf %12, %15 : vector<1x128xf32>
    %c0_14 = arith.constant 0 : index
    %c0_15 = arith.constant 0 : index
    %17 = vector.load %arg5[%c0_14, %c0_15] : memref<1x128xf32, #tpu.memory_space<vmem>>, vector<1x128xf32>
    tpu.vector_store %arg5[%c0_14, %c0_15], %16 {strides = array<i32>} : memref<1x128xf32, #tpu.memory_space<vmem>>, vector<1x128xf32>,
    return
  }
  func.func @transform_0(%arg0: i32) -> (i32, i32) {
    %c0_i32 = arith.constant 0 : i32
    %c0_i32_0 = arith.constant 0 : i32
    return %arg0, %c0_i32 : i32, i32
  }
  func.func @transform_1(%arg0: i32) -> (i32, i32) {
    %c0_i32 = arith.constant 0 : i32
    %c0_i32_0 = arith.constant 0 : i32
    %c0_i32_1 = arith.constant 0 : i32
    return %c0_i32, %c0_i32_0 : i32, i32
  }
  func.func @transform_2(%arg0: i32) -> (i32, i32) {
    %c0_i32 = arith.constant 0 : i32
    %c0_i32_0 = arith.constant 0 : i32
    return %arg0, %c0_i32 : i32, i32
  }
  func.func @transform_3(%arg0: i32) -> (i32, i32) {
    %c0_i32 = arith.constant 0 : i32
    %c0_i32_0 = arith.constant 0 : i32
    %c0_i32_1 = arith.constant 0 : i32
    return %c0_i32, %c0_i32_0 : i32, i32
  }
  func.func @transform_4(%arg0: i32) -> (i32, i32) {
    %c0_i32 = arith.constant 0 : i32
    %c0_i32_0 = arith.constant 0 : i32
    %c0_i32_1 = arith.constant 0 : i32
    return %c0_i32, %c0_i32_0 : i32, i32
  }
}

module attributes {stable_mosaic.version = 11 : i64} {
  func.func @_affine_lrelu_kernel(%arg0: i32, %arg1: memref<32x128xf32, #tpu.memory_space<vmem>>, %arg2: memref<1x128xf32, #tpu.memory_space<vmem>>, %arg3: memref<1x128xf32, #tpu.memory_space<vmem>>, %arg4: memref<32x128xbf16, #tpu.memory_space<vmem>>) attributes {dimension_semantics = [#tpu.dimension_semantics<parallel>], iteration_bounds = array<i64: 1>, scalar_prefetch = 0 : i64, scratch_operands = 0 : i64, tpu.core_type = #tpu.core_type<tc>, window_params = [{transform_indices = @transform_0, window_bounds = array<i64: 32, 128>}, {pipeline_mode = #tpu.pipeline_mode<synchronous>, transform_indices = @transform_1, window_bounds = array<i64: 1, 128>}, {pipeline_mode = #tpu.pipeline_mode<synchronous>, transform_indices = @transform_2, window_bounds = array<i64: 1, 128>}, {transform_indices = @transform_3, window_bounds = array<i64: 32, 128>}]} {
    %c0 = arith.constant 0 : index
    %c0_0 = arith.constant 0 : index
    %0 = vector.load %arg1[%c0, %c0_0] : memref<32x128xf32, #tpu.memory_space<vmem>>, vector<32x128xf32>
    %c0_1 = arith.constant 0 : index
    %c0_2 = arith.constant 0 : index
    %1 = vector.load %arg2[%c0_1, %c0_2] : memref<1x128xf32, #tpu.memory_space<vmem>>, vector<1x128xf32>
    %2 = vector.broadcast %1 : vector<1x128xf32> to vector<32x128xf32>
    %3 = arith.mulf %0, %2 : vector<32x128xf32>
    %c0_3 = arith.constant 0 : index
    %c0_4 = arith.constant 0 : index
    %4 = vector.load %arg3[%c0_3, %c0_4] : memref<1x128xf32, #tpu.memory_space<vmem>>, vector<1x128xf32>
    %5 = vector.broadcast %4 : vector<1x128xf32> to vector<32x128xf32>
    %6 = arith.addf %3, %5 : vector<32x128xf32>
    %cst = arith.constant 2.000000e-01 : f32
    %7 = vector.broadcast %cst : f32 to vector<32x128xf32>
    %8 = arith.mulf %7, %6 : vector<32x128xf32>
    %9 = arith.maximumf %6, %8 : vector<32x128xf32>
    %10 = arith.truncf %9 : vector<32x128xf32> to vector<32x128xbf16>
    %c0_5 = arith.constant 0 : index
    %c0_6 = arith.constant 0 : index
    %11 = vector.load %arg4[%c0_5, %c0_6] : memref<32x128xbf16, #tpu.memory_space<vmem>>, vector<32x128xbf16>
    tpu.vector_store %arg4[%c0_5, %c0_6], %10 {strides = array<i32>} : memref<32x128xbf16, #tpu.memory_space<vmem>>, vector<32x128xbf16>,
    return
  }
  func.func @transform_0(%arg0: i32) -> (i32, i32) {
    %c0_i32 = arith.constant 0 : i32
    %c0_i32_0 = arith.constant 0 : i32
    return %arg0, %c0_i32 : i32, i32
  }
  func.func @transform_1(%arg0: i32) -> (i32, i32) {
    %c0_i32 = arith.constant 0 : i32
    %c0_i32_0 = arith.constant 0 : i32
    %c0_i32_1 = arith.constant 0 : i32
    return %c0_i32, %c0_i32_0 : i32, i32
  }
  func.func @transform_2(%arg0: i32) -> (i32, i32) {
    %c0_i32 = arith.constant 0 : i32
    %c0_i32_0 = arith.constant 0 : i32
    %c0_i32_1 = arith.constant 0 : i32
    return %c0_i32, %c0_i32_0 : i32, i32
  }
  func.func @transform_3(%arg0: i32) -> (i32, i32) {
    %c0_i32 = arith.constant 0 : i32
    %c0_i32_0 = arith.constant 0 : i32
    return %arg0, %c0_i32 : i32, i32
  }
}

module attributes {stable_mosaic.version = 11 : i64} {
  func.func @_gemm_act_kernel(%arg0: i32, %arg1: memref<8x2048xbf16, #tpu.memory_space<vmem>>, %arg2: memref<2048x128xbf16, #tpu.memory_space<vmem>>, %arg3: memref<8x128xf32, #tpu.memory_space<vmem>>) attributes {dimension_semantics = [#tpu.dimension_semantics<parallel>], iteration_bounds = array<i64: 1>, scalar_prefetch = 0 : i64, scratch_operands = 0 : i64, tpu.core_type = #tpu.core_type<tc>, window_params = [{transform_indices = @transform_0, window_bounds = array<i64: 8, 2048>}, {pipeline_mode = #tpu.pipeline_mode<synchronous>, transform_indices = @transform_1, window_bounds = array<i64: 2048, 128>}, {transform_indices = @transform_2, window_bounds = array<i64: 8, 128>}]} {
    %c0 = arith.constant 0 : index
    %c0_0 = arith.constant 0 : index
    %0 = vector.load %arg1[%c0, %c0_0] : memref<8x2048xbf16, #tpu.memory_space<vmem>>, vector<8x2048xbf16>
    %c0_1 = arith.constant 0 : index
    %c0_2 = arith.constant 0 : index
    %1 = vector.load %arg2[%c0_1, %c0_2] : memref<2048x128xbf16, #tpu.memory_space<vmem>>, vector<2048x128xbf16>
    %cst = arith.constant dense<0.000000e+00> : vector<8x128xf32>
    %2 = tpu.matmul %0, %1, %cst {dimension_numbers = #tpu.dot_dimension_numbers<[1], [0], [0], [1], [0, 0, 1, 1], [], []>} : vector<8x2048xbf16>, vector<2048x128xbf16>, vector<8x128xf32> -> vector<8x128xf32>
    %c0_3 = arith.constant 0 : index
    %c0_4 = arith.constant 0 : index
    %3 = vector.load %arg3[%c0_3, %c0_4] : memref<8x128xf32, #tpu.memory_space<vmem>>, vector<8x128xf32>
    tpu.vector_store %arg3[%c0_3, %c0_4], %2 {strides = array<i32>} : memref<8x128xf32, #tpu.memory_space<vmem>>, vector<8x128xf32>,
    return
  }
  func.func @transform_0(%arg0: i32) -> (i32, i32) {
    %c0_i32 = arith.constant 0 : i32
    %c0_i32_0 = arith.constant 0 : i32
    return %arg0, %c0_i32 : i32, i32
  }
  func.func @transform_1(%arg0: i32) -> (i32, i32) {
    %c0_i32 = arith.constant 0 : i32
    %c0_i32_0 = arith.constant 0 : i32
    %c0_i32_1 = arith.constant 0 : i32
    return %c0_i32, %c0_i32_0 : i32, i32
  }
  func.func @transform_2(%arg0: i32) -> (i32, i32) {
    %c0_i32 = arith.constant 0 : i32
    %c0_i32_0 = arith.constant 0 : i32
    return %arg0, %c0_i32 : i32, i32
  }
}

</mosaic_0001>

<llo_original>
// kernel: patch_image_discriminator.6
$region0: #{patch_image_discriminator.6}
  #allocation0 [shape = 'u32[]', space=smem, size = 0x4, offset = 0x4, fixed_abs, tag = 'smem constant byte address 0x4 - core index']
  #allocation1 [shape = 'u32[72,128]{1,0:T(1,128)}', space=vmem, size = 0x9000, scoped, tag = 'internal scratch']
  %s0 = inlined_call_operand.vmem [shape: bf16[512,128], index: 0, kind: input, shape index: {}]
  %s1 = inlined_call_operand.vmem [shape: bf16[128,128], index: 1, kind: input, shape index: {}]
  %s2 = inlined_call_operand.vmem [shape: bf16[512,128], index: 2, kind: output, shape index: {}]
  %s3 = sld [smem:[#allocation0]]
  $region18: #{patch_image_discriminator.6} parent=0
    _
  %s5 = ssub.s32 1, %s3
  %s6 = scalar_select 0, %s5, %s3
  // Predicated region
  $region2: #{patch_image_discriminator.6} parent=0 // pred_check
    _
  $region3: #{patch_image_discriminator.6} parent=0 // pred_check_branch
    %8 = sbr.rel (0) target = $region5
  $region4: #{patch_image_discriminator.6} parent=0 // pred_region
    _
  $region5: #{patch_image_discriminator.6} parent=0 // pred_fallthru
    _
  // Predicated region
  $region6: #{patch_image_discriminator.6} parent=0 // pred_check
    _
  $region7: #{patch_image_discriminator.6} parent=0 // pred_check_branch
    %10 = sbr.rel (0) target = $region9
  $region8: #{patch_image_discriminator.6} parent=0 // pred_region
    _
  $region9: #{patch_image_discriminator.6} parent=0 // pred_fallthru
    _
  %v11 = vld [vmem:[%s0] sm:$0xf]
  %v12 = vld [vmem:[%s0 + $0x4] sm:$0xf]
  %v13 = vld [vmem:[%s0 + $0x8] sm:$0xf]
  %v14 = vld [vmem:[%s0 + $0xc] sm:$0xf]
  %v15 = vld [vmem:[%s0 + $0x10] sm:$0xf]
  %v16 = vld [vmem:[%s0 + $0x14] sm:$0xf]
  %v17 = vld [vmem:[%s0 + $0x18] sm:$0xf]
  %v18 = vld [vmem:[%s0 + $0x1c] sm:$0xf]
  %v19 = vld [vmem:[%s0 + $0x20] sm:$0xf]
  %v20 = vld [vmem:[%s0 + $0x24] sm:$0xf]
  %v21 = vld [vmem:[%s0 + $0x28] sm:$0xf]
  %v22 = vld [vmem:[%s0 + $0x2c] sm:$0xf]
  %v23 = vld [vmem:[%s0 + $0x30] sm:$0xf]
  %v24 = vld [vmem:[%s0 + $0x34] sm:$0xf]
  %v25 = vld [vmem:[%s0 + $0x38] sm:$0xf]
  %v26 = vld [vmem:[%s0 + $0x3c] sm:$0xf]
  %v27 = vld [vmem:[%s0 + $0x40] sm:$0xf]
  %v28 = vld [vmem:[%s0 + $0x44] sm:$0xf]
  %v29 = vld [vmem:[%s0 + $0x48] sm:$0xf]
  %v30 = vld [vmem:[%s0 + $0x4c] sm:$0xf]
  %v31 = vld [vmem:[%s0 + $0x50] sm:$0xf]
  %v32 = vld [vmem:[%s0 + $0x54] sm:$0xf]
  %v33 = vld [vmem:[%s0 + $0x58] sm:$0xf]
  %v34 = vld [vmem:[%s0 + $0x5c] sm:$0xf]
  %v35 = vld [vmem:[%s0 + $0x60] sm:$0xf]
  %v36 = vld [vmem:[%s0 + $0x64] sm:$0xf]
  %v37 = vld [vmem:[%s0 + $0x68] sm:$0xf]
  %v38 = vld [vmem:[%s0 + $0x6c] sm:$0xf]
  %v39 = vld [vmem:[%s0 + $0x70] sm:$0xf]
  %v40 = vld [vmem:[%s0 + $0x74] sm:$0xf]
  %v41 = vld [vmem:[%s0 + $0x78] sm:$0xf]
  %v42 = vld [vmem:[%s0 + $0x7c] sm:$0xf]
  %v43 = vld [vmem:[%s0 + $0x80] sm:$0xf]
  %v44 = vld [vmem:[%s0 + $0x84] sm:$0xf]
  %v45 = vld [vmem:[%s0 + $0x88] sm:$0xf]
  %v46 = vld [vmem:[%s0 + $0x8c] sm:$0xf]
  %v47 = vld [vmem:[%s0 + $0x90] sm:$0xf]
  %v48 = vld [vmem:[%s0 + $0x94] sm:$0xf]
  %v49 = vld [vmem:[%s0 + $0x98] sm:$0xf]
  %v50 = vld [vmem:[%s0 + $0x9c] sm:$0xf]
  %v51 = vld [vmem:[%s0 + $0xa0] sm:$0xf]
  %v52 = vld [vmem:[%s0 + $0xa4] sm:$0xf]
  %v53 = vld [vmem:[%s0 + $0xa8] sm:$0xf]
  %v54 = vld [vmem:[%s0 + $0xac] sm:$0xf]
  %v55 = vld [vmem:[%s0 + $0xb0] sm:$0xf]
  %v56 = vld [vmem:[%s0 + $0xb4] sm:$0xf]
  %v57 = vld [vmem:[%s0 + $0xb8] sm:$0xf]
  %v58 = vld [vmem:[%s0 + $0xbc] sm:$0xf]
  %v59 = vld [vmem:[%s0 + $0xc0] sm:$0xf]
  %v60 = vld [vmem:[%s0 + $0xc4] sm:$0xf]
  %v61 = vld [vmem:[%s0 + $0xc8] sm:$0xf]
  %v62 = vld [vmem:[%s0 + $0xcc] sm:$0xf]
  %v63 = vld [vmem:[%s0 + $0xd0] sm:$0xf]
  %v64 = vld [vmem:[%s0 + $0xd4] sm:$0xf]
  %v65 = vld [vmem:[%s0 + $0xd8] sm:$0xf]
  %v66 = vld [vmem:[%s0 + $0xdc] sm:$0xf]
  %v67 = vld [vmem:[%s0 + $0xe0] sm:$0xf]
  %v68 = vld [vmem:[%s0 + $0xe4] sm:$0xf]
  %v69 = vld [vmem:[%s0 + $0xe8] sm:$0xf]
  %v70 = vld [vmem:[%s0 + $0xec] sm:$0xf]
  %v71 = vld [vmem:[%s0 + $0xf0] sm:$0xf]
  %v72 = vld [vmem:[%s0 + $0xf4] sm:$0xf]
  %v73 = vld [vmem:[%s0 + $0xf8] sm:$0xf]
  %v74 = vld [vmem:[%s0 + $0xfc] sm:$0xf]
  %v75 = vld [vmem:[%s1] sm:$0xf]
  %v76 = vld [vmem:[%s1 + $0x4] sm:$0xf]
  %v77 = vld [vmem:[%s1 + $0x8] sm:$0xf]
  %v78 = vld [vmem:[%s1 + $0xc] sm:$0xf]
  %v79 = vld [vmem:[%s1 + $0x10] sm:$0xf]
  %v80 = vld [vmem:[%s1 + $0x14] sm:$0xf]
  %v81 = vld [vmem:[%s1 + $0x18] sm:$0xf]
  %v82 = vld [vmem:[%s1 + $0x1c] sm:$0xf]
  %v83 = vld [vmem:[%s1 + $0x20] sm:$0xf]
  %v84 = vld [vmem:[%s1 + $0x24] sm:$0xf]
  %v85 = vld [vmem:[%s1 + $0x28] sm:$0xf]
  %v86 = vld [vmem:[%s1 + $0x2c] sm:$0xf]
  %v87 = vld [vmem:[%s1 + $0x30] sm:$0xf]
  %v88 = vld [vmem:[%s1 + $0x34] sm:$0xf]
  %v89 = vld [vmem:[%s1 + $0x38] sm:$0xf]
  %v90 = vld [vmem:[%s1 + $0x3c] sm:$0xf]
  %v155 = vunpack.c.l.b16 %v11
  %v156 = vunpack.c.l.b16 %v12
  %v157 = vunpack.c.l.b16 %v13
  %v158 = vunpack.c.l.b16 %v14
  %v159 = vunpack.c.l.b16 %v15
  %v160 = vunpack.c.l.b16 %v16
  %v161 = vunpack.c.l.b16 %v17
  %v162 = vunpack.c.l.b16 %v18
  %v163 = vunpack.c.l.b16 %v19
  %v164 = vunpack.c.l.b16 %v20
  %v165 = vunpack.c.l.b16 %v21
  %v166 = vunpack.c.l.b16 %v22
  %v167 = vunpack.c.l.b16 %v23
  %v168 = vunpack.c.l.b16 %v24
  %v169 = vunpack.c.l.b16 %v25
  %v170 = vunpack.c.l.b16 %v26
  %v171 = vunpack.c.l.b16 %v27
  %v172 = vunpack.c.l.b16 %v28
  %v173 = vunpack.c.l.b16 %v29
  %v174 = vunpack.c.l.b16 %v30
  %v175 = vunpack.c.l.b16 %v31
  %v176 = vunpack.c.l.b16 %v32
  %v177 = vunpack.c.l.b16 %v33
  %v178 = vunpack.c.l.b16 %v34
  %v179 = vunpack.c.l.b16 %v35
  %v180 = vunpack.c.l.b16 %v36
  %v181 = vunpack.c.l.b16 %v37
  %v182 = vunpack.c.l.b16 %v38
  %v183 = vunpack.c.l.b16 %v39
  %v184 = vunpack.c.l.b16 %v40
  %v185 = vunpack.c.l.b16 %v41
  %v186 = vunpack.c.l.b16 %v42
  %v187 = vunpack.c.l.b16 %v43
  %v188 = vunpack.c.l.b16 %v44
  %v189 = vunpack.c.l.b16 %v45
  %v190 = vunpack.c.l.b16 %v46
  %v191 = vunpack.c.l.b16 %v47
  %v192 = vunpack.c.l.b16 %v48
  %v193 = vunpack.c.l.b16 %v49
  %v194 = vunpack.c.l.b16 %v50
  %v195 = vunpack.c.l.b16 %v51
  %v196 = vunpack.c.l.b16 %v52
  %v197 = vunpack.c.l.b16 %v53
  %v198 = vunpack.c.l.b16 %v54
  %v199 = vunpack.c.l.b16 %v55
  %v200 = vunpack.c.l.b16 %v56
  %v201 = vunpack.c.l.b16 %v57
  %v202 = vunpack.c.l.b16 %v58
  %v203 = vunpack.c.l.b16 %v59
  %v204 = vunpack.c.l.b16 %v60
  %v205 = vunpack.c.l.b16 %v61
  %v206 = vunpack.c.l.b16 %v62
  %v207 = vunpack.c.l.b16 %v63
  %v208 = vunpack.c.l.b16 %v64
  %v209 = vunpack.c.l.b16 %v65
  %v210 = vunpack.c.l.b16 %v66
  %v211 = vunpack.c.l.b16 %v67
  %v212 = vunpack.c.l.b16 %v68
  %v213 = vunpack.c.l.b16 %v69
  %v214 = vunpack.c.l.b16 %v70
  %v215 = vunpack.c.l.b16 %v71
  %v216 = vunpack.c.l.b16 %v72
  %v217 = vunpack.c.l.b16 %v73
  %v218 = vunpack.c.l.b16 %v74
  %v219 = vpack.c.b16 %v156, %v155
  %v220 = vpack.c.b16 %v158, %v157
  %v221 = vpack.c.b16 %v160, %v159
  %v222 = vpack.c.b16 %v162, %v161
  %v223 = vpack.c.b16 %v164, %v163
  %v224 = vpack.c.b16 %v166, %v165
  %v225 = vpack.c.b16 %v168, %v167
  %v226 = vpack.c.b16 %v170, %v169
  %v227 = vpack.c.b16 %v172, %v171
  %v228 = vpack.c.b16 %v174, %v173
  %v229 = vpack.c.b16 %v176, %v175
  %v230 = vpack.c.b16 %v178, %v177
  %v231 = vpack.c.b16 %v180, %v179
  %v232 = vpack.c.b16 %v182, %v181
  %v233 = vpack.c.b16 %v184, %v183
  %v234 = vpack.c.b16 %v186, %v185
  %v235 = vpack.c.b16 %v188, %v187
  %v236 = vpack.c.b16 %v190, %v189
  %v237 = vpack.c.b16 %v192, %v191
  %v238 = vpack.c.b16 %v194, %v193
  %v239 = vpack.c.b16 %v196, %v195
  %v240 = vpack.c.b16 %v198, %v197
  %v241 = vpack.c.b16 %v200, %v199
  %v242 = vpack.c.b16 %v202, %v201
  %v243 = vpack.c.b16 %v204, %v203
  %v244 = vpack.c.b16 %v206, %v205
  %v245 = vpack.c.b16 %v208, %v207
  %v246 = vpack.c.b16 %v210, %v209
  %v247 = vpack.c.b16 %v212, %v211
  %v248 = vpack.c.b16 %v214, %v213
  %v249 = vpack.c.b16 %v216, %v215
  %v250 = vpack.c.b16 %v218, %v217
  %v299 = vunpack.c.l.b16 %v75
  %v300 = vunpack.c.l.b16 %v76
  %v301 = vunpack.c.l.b16 %v77
  %v302 = vunpack.c.l.b16 %v78
  %v303 = vunpack.c.l.b16 %v79
  %v304 = vunpack.c.l.b16 %v80
  %v305 = vunpack.c.l.b16 %v81
  %v306 = vunpack.c.l.b16 %v82
  %v307 = vunpack.c.l.b16 %v83
  %v308 = vunpack.c.l.b16 %v84
  %v309 = vunpack.c.l.b16 %v85
  %v310 = vunpack.c.l.b16 %v86
  %v311 = vunpack.c.l.b16 %v87
  %v312 = vunpack.c.l.b16 %v88
  %v313 = vunpack.c.l.b16 %v89
  %v314 = vunpack.c.l.b16 %v90
  %v315 = vpack.c.b16 %v300, %v299
  %v316 = vpack.c.b16 %v302, %v301
  %v317 = vpack.c.b16 %v304, %v303
  %v318 = vpack.c.b16 %v306, %v305
  %v319 = vpack.c.b16 %v308, %v307
  %v320 = vpack.c.b16 %v310, %v309
  %v321 = vpack.c.b16 %v312, %v311
  %v322 = vpack.c.b16 %v314, %v313
  %331 = vmatpush.bf16.msra.mxu0 %v322
  %332 = vmatpush.bf16.msra.mxu0 %v321
  %333 = vmatpush.bf16.msra.mxu0 %v320
  %334 = vmatpush.bf16.msra.mxu0 %v319
  %335 = vmatpush.bf16.msra.mxu0 %v318
  %336 = vmatpush.bf16.msra.mxu0 %v317
  %337 = vmatpush.bf16.msra.mxu0 %v316
  %338 = vmatpush.bf16.msra.mxu0 %v315
  %339 = vmatmul.bf16.gmra.mxu0 %v219
  %v340 = vpop.f32.mrf.mxu0
  %v341 = vadd.f32 0.0, %v340
  %v342 = vpop.f32.mrf.mxu0
  %v343 = vadd.f32 0.0, %v342
  %344 = vmatmul.bf16.gmra.mxu0 %v220
  %v345 = vpop.f32.mrf.mxu0
  %v346 = vadd.f32 0.0, %v345
  %v347 = vpop.f32.mrf.mxu0
  %v348 = vadd.f32 0.0, %v347
  %349 = vmatmul.bf16.gmra.mxu0 %v221
  %v350 = vpop.f32.mrf.mxu0
  %v351 = vadd.f32 0.0, %v350
  %v352 = vpop.f32.mrf.mxu0
  %v353 = vadd.f32 0.0, %v352
  %354 = vmatmul.bf16.gmra.mxu0 %v222
  %v355 = vpop.f32.mrf.mxu0
  %v356 = vadd.f32 0.0, %v355
  %v357 = vpop.f32.mrf.mxu0
  %v358 = vadd.f32 0.0, %v357
  %359 = vmatmul.bf16.gmra.mxu0 %v223
  %v360 = vpop.f32.mrf.mxu0
  %v361 = vadd.f32 0.0, %v360
  %v362 = vpop.f32.mrf.mxu0
  %v363 = vadd.f32 0.0, %v362
  %364 = vmatmul.bf16.gmra.mxu0 %v224
  %v365 = vpop.f32.mrf.mxu0
  %v366 = vadd.f32 0.0, %v365
  %v367 = vpop.f32.mrf.mxu0
  %v368 = vadd.f32 0.0, %v367
  %369 = vmatmul.bf16.gmra.mxu0 %v225
  %v370 = vpop.f32.mrf.mxu0
  %v371 = vadd.f32 0.0, %v370
  %v372 = vpop.f32.mrf.mxu0
  %v373 = vadd.f32 0.0, %v372
  %374 = vmatmul.bf16.gmra.mxu0 %v226
  %v375 = vpop.f32.mrf.mxu0
  %v376 = vadd.f32 0.0, %v375
  %v377 = vpop.f32.mrf.mxu0
  %v378 = vadd.f32 0.0, %v377
  %379 = vmatmul.bf16.gmra.mxu0 %v227
  %v380 = vpop.f32.mrf.mxu0
  %v381 = vadd.f32 0.0, %v380
  %v382 = vpop.f32.mrf.mxu0
  %v383 = vadd.f32 0.0, %v382
  %384 = vmatmul.bf16.gmra.mxu0 %v228
  %v385 = vpop.f32.mrf.mxu0
  %v386 = vadd.f32 0.0, %v385
  %v387 = vpop.f32.mrf.mxu0
  %v388 = vadd.f32 0.0, %v387
  %389 = vmatmul.bf16.gmra.mxu0 %v229
  %v390 = vpop.f32.mrf.mxu0
  %v391 = vadd.f32 0.0, %v390
  %v392 = vpop.f32.mrf.mxu0
  %v393 = vadd.f32 0.0, %v392
  %394 = vmatmul.bf16.gmra.mxu0 %v230
  %v395 = vpop.f32.mrf.mxu0
  %v396 = vadd.f32 0.0, %v395
  %v397 = vpop.f32.mrf.mxu0
  %v398 = vadd.f32 0.0, %v397
  %399 = vmatmul.bf16.gmra.mxu0 %v231
  %v400 = vpop.f32.mrf.mxu0
  %v401 = vadd.f32 0.0, %v400
  %v402 = vpop.f32.mrf.mxu0
  %v403 = vadd.f32 0.0, %v402
  %404 = vmatmul.bf16.gmra.mxu0 %v232
  %v405 = vpop.f32.mrf.mxu0
  %v406 = vadd.f32 0.0, %v405
  %v407 = vpop.f32.mrf.mxu0
  %v408 = vadd.f32 0.0, %v407
  %409 = vmatmul.bf16.gmra.mxu0 %v233
  %v410 = vpop.f32.mrf.mxu0
  %v411 = vadd.f32 0.0, %v410
  %v412 = vpop.f32.mrf.mxu0
  %v413 = vadd.f32 0.0, %v412
  %414 = vmatmul.bf16.gmra.mxu0 %v234
  %v415 = vpop.f32.mrf.mxu0
  %v416 = vadd.f32 0.0, %v415
  %v417 = vpop.f32.mrf.mxu0
  %v418 = vadd.f32 0.0, %v417
  %419 = vmatmul.bf16.gmra.mxu0 %v235
  %v420 = vpop.f32.mrf.mxu0
  %v421 = vadd.f32 0.0, %v420
  %v422 = vpop.f32.mrf.mxu0
  %v423 = vadd.f32 0.0, %v422
  %424 = vmatmul.bf16.gmra.mxu0 %v236
  %v425 = vpop.f32.mrf.mxu0
  %v426 = vadd.f32 0.0, %v425
  %v427 = vpop.f32.mrf.mxu0
  %v428 = vadd.f32 0.0, %v427
  %429 = vmatmul.bf16.gmra.mxu0 %v237
  %v430 = vpop.f32.mrf.mxu0
  %v431 = vadd.f32 0.0, %v430
  %v432 = vpop.f32.mrf.mxu0
  %v433 = vadd.f32 0.0, %v432
  %434 = vmatmul.bf16.gmra.mxu0 %v238
  %v435 = vpop.f32.mrf.mxu0
  %v436 = vadd.f32 0.0, %v435
  %v437 = vpop.f32.mrf.mxu0
  %v438 = vadd.f32 0.0, %v437
  %439 = vmatmul.bf16.gmra.mxu0 %v239
  %v440 = vpop.f32.mrf.mxu0
  %v441 = vadd.f32 0.0, %v440
  %v442 = vpop.f32.mrf.mxu0
  %v443 = vadd.f32 0.0, %v442
  %444 = vmatmul.bf16.gmra.mxu0 %v240
  %v445 = vpop.f32.mrf.mxu0
  %v446 = vadd.f32 0.0, %v445
  %v447 = vpop.f32.mrf.mxu0
  %v448 = vadd.f32 0.0, %v447
  %449 = vmatmul.bf16.gmra.mxu0 %v241
  %v450 = vpop.f32.mrf.mxu0
  %v451 = vadd.f32 0.0, %v450
  %v452 = vpop.f32.mrf.mxu0
  %v453 = vadd.f32 0.0, %v452
  %454 = vmatmul.bf16.gmra.mxu0 %v242
  %v455 = vpop.f32.mrf.mxu0
  %v456 = vadd.f32 0.0, %v455
  %v457 = vpop.f32.mrf.mxu0
  %v458 = vadd.f32 0.0, %v457
  %459 = vmatmul.bf16.gmra.mxu0 %v243
  %v460 = vpop.f32.mrf.mxu0
  %v461 = vadd.f32 0.0, %v460
  %v462 = vpop.f32.mrf.mxu0
  %v463 = vadd.f32 0.0, %v462
  %464 = vmatmul.bf16.gmra.mxu0 %v244
  %v465 = vpop.f32.mrf.mxu0
  %v466 = vadd.f32 0.0, %v465
  %v467 = vpop.f32.mrf.mxu0
  %v468 = vadd.f32 0.0, %v467
  %469 = vmatmul.bf16.gmra.mxu0 %v245
  %v470 = vpop.f32.mrf.mxu0
  %v471 = vadd.f32 0.0, %v470
  %v472 = vpop.f32.mrf.mxu0
  %v473 = vadd.f32 0.0, %v472
  %474 = vmatmul.bf16.gmra.mxu0 %v246
  %v475 = vpop.f32.mrf.mxu0
  %v476 = vadd.f32 0.0, %v475
  %v477 = vpop.f32.mrf.mxu0
  %v478 = vadd.f32 0.0, %v477
  %479 = vmatmul.bf16.gmra.mxu0 %v247
  %v480 = vpop.f32.mrf.mxu0
  %v481 = vadd.f32 0.0, %v480
  %v482 = vpop.f32.mrf.mxu0
  %v483 = vadd.f32 0.0, %v482
  %484 = vmatmul.bf16.gmra.mxu0 %v248
  %v485 = vpop.f32.mrf.mxu0
  %v486 = vadd.f32 0.0, %v485
  %v487 = vpop.f32.mrf.mxu0
  %v488 = vadd.f32 0.0, %v487
  %489 = vmatmul.bf16.gmra.mxu0 %v249
  %v490 = vpop.f32.mrf.mxu0
  %v491 = vadd.f32 0.0, %v490
  %v492 = vpop.f32.mrf.mxu0
  %v493 = vadd.f32 0.0, %v492
  %494 = vmatmul.bf16.gmra.mxu0 %v250
  %v495 = vpop.f32.mrf.mxu0
  %v496 = vadd.f32 0.0, %v495
  %v497 = vpop.f32.mrf.mxu0
  %v498 = vadd.f32 0.0, %v497
  %499 = vdwg.mxu0
  %v500 = vmul.f32 %v341, 0.2
  %v501 = vmul.f32 %v343, 0.2
  %v502 = vmul.f32 %v346, 0.2
  %v503 = vmul.f32 %v348, 0.2
  %v504 = vmul.f32 %v351, 0.2
  %v505 = vmul.f32 %v353, 0.2
  %v506 = vmul.f32 %v356, 0.2
  %v507 = vmul.f32 %v358, 0.2
  %v508 = vmul.f32 %v361, 0.2
  %v509 = vmul.f32 %v363, 0.2
  %v510 = vmul.f32 %v366, 0.2
  %v511 = vmul.f32 %v368, 0.2
  %v512 = vmul.f32 %v371, 0.2
  %v513 = vmul.f32 %v373, 0.2
  %v514 = vmul.f32 %v376, 0.2
  %v515 = vmul.f32 %v378, 0.2
  %v516 = vmul.f32 %v381, 0.2
  %v517 = vmul.f32 %v383, 0.2
  %v518 = vmul.f32 %v386, 0.2
  %v519 = vmul.f32 %v388, 0.2
  %v520 = vmul.f32 %v391, 0.2
  %v521 = vmul.f32 %v393, 0.2
  %v522 = vmul.f32 %v396, 0.2
  %v523 = vmul.f32 %v398, 0.2
  %v524 = vmul.f32 %v401, 0.2
  %v525 = vmul.f32 %v403, 0.2
  %v526 = vmul.f32 %v406, 0.2
  %v527 = vmul.f32 %v408, 0.2
  %v528 = vmul.f32 %v411, 0.2
  %v529 = vmul.f32 %v413, 0.2
  %v530 = vmul.f32 %v416, 0.2
  %v531 = vmul.f32 %v418, 0.2
  %v532 = vmul.f32 %v421, 0.2
  %v533 = vmul.f32 %v423, 0.2
  %v534 = vmul.f32 %v426, 0.2
  %v535 = vmul.f32 %v428, 0.2
  %v536 = vmul.f32 %v431, 0.2
  %v537 = vmul.f32 %v433, 0.2
  %v538 = vmul.f32 %v436, 0.2
  %v539 = vmul.f32 %v438, 0.2
  %v540 = vmul.f32 %v441, 0.2
  %v541 = vmul.f32 %v443, 0.2
  %v542 = vmul.f32 %v446, 0.2
  %v543 = vmul.f32 %v448, 0.2
  %v544 = vmul.f32 %v451, 0.2
  %v545 = vmul.f32 %v453, 0.2
  %v546 = vmul.f32 %v456, 0.2
  %v547 = vmul.f32 %v458, 0.2
  %v548 = vmul.f32 %v461, 0.2
  %v549 = vmul.f32 %v463, 0.2
  %v550 = vmul.f32 %v466, 0.2
  %v551 = vmul.f32 %v468, 0.2
  %v552 = vmul.f32 %v471, 0.2
  %v553 = vmul.f32 %v473, 0.2
  %v554 = vmul.f32 %v476, 0.2
  %v555 = vmul.f32 %v478, 0.2
  %v556 = vmul.f32 %v481, 0.2
  %v557 = vmul.f32 %v483, 0.2
  %v558 = vmul.f32 %v486, 0.2
  %v559 = vmul.f32 %v488, 0.2
  %v560 = vmul.f32 %v491, 0.2
  %v561 = vmul.f32 %v493, 0.2
  %v562 = vmul.f32 %v496, 0.2
  %v563 = vmul.f32 %v498, 0.2
  %v564 = vmax.f32 %v341, %v500
  %v565 = vmax.f32 %v343, %v501
  %v566 = vmax.f32 %v346, %v502
  %v567 = vmax.f32 %v348, %v503
  %v568 = vmax.f32 %v351, %v504
  %v569 = vmax.f32 %v353, %v505
  %v570 = vmax.f32 %v356, %v506
  %v571 = vmax.f32 %v358, %v507
  %v572 = vmax.f32 %v361, %v508
  %v573 = vmax.f32 %v363, %v509
  %v574 = vmax.f32 %v366, %v510
  %v575 = vmax.f32 %v368, %v511
  %v576 = vmax.f32 %v371, %v512
  %v577 = vmax.f32 %v373, %v513
  %v578 = vmax.f32 %v376, %v514
  %v579 = vmax.f32 %v378, %v515
  %v580 = vmax.f32 %v381, %v516
  %v581 = vmax.f32 %v383, %v517
  %v582 = vmax.f32 %v386, %v518
  %v583 = vmax.f32 %v388, %v519
  %v584 = vmax.f32 %v391, %v520
  %v585 = vmax.f32 %v393, %v521
  %v586 = vmax.f32 %v396, %v522
  %v587 = vmax.f32 %v398, %v523
  %v588 = vmax.f32 %v401, %v524
  %v589 = vmax.f32 %v403, %v525
  %v590 = vmax.f32 %v406, %v526
  %v591 = vmax.f32 %v408, %v527
  %v592 = vmax.f32 %v411, %v528
  %v593 = vmax.f32 %v413, %v529
  %v594 = vmax.f32 %v416, %v530
  %v595 = vmax.f32 %v418, %v531
  %v596 = vmax.f32 %v421, %v532
  %v597 = vmax.f32 %v423, %v533
  %v598 = vmax.f32 %v426, %v534
  %v599 = vmax.f32 %v428, %v535
  %v600 = vmax.f32 %v431, %v536
  %v601 = vmax.f32 %v433, %v537
  %v602 = vmax.f32 %v436, %v538
  %v603 = vmax.f32 %v438, %v539
  %v604 = vmax.f32 %v441, %v540
  %v605 = vmax.f32 %v443, %v541
  %v606 = vmax.f32 %v446, %v542
  %v607 = vmax.f32 %v448, %v543
  %v608 = vmax.f32 %v451, %v544
  %v609 = vmax.f32 %v453, %v545
  %v610 = vmax.f32 %v456, %v546
  %v611 = vmax.f32 %v458, %v547
  %v612 = vmax.f32 %v461, %v548
  %v613 = vmax.f32 %v463, %v549
  %v614 = vmax.f32 %v466, %v550
  %v615 = vmax.f32 %v468, %v551
  %v616 = vmax.f32 %v471, %v552
  %v617 = vmax.f32 %v473, %v553
  %v618 = vmax.f32 %v476, %v554
  %v619 = vmax.f32 %v478, %v555
  %v620 = vmax.f32 %v481, %v556
  %v621 = vmax.f32 %v483, %v557
  %v622 = vmax.f32 %v486, %v558
  %v623 = vmax.f32 %v488, %v559
  %v624 = vmax.f32 %v491, %v560
  %v625 = vmax.f32 %v493, %v561
  %v626 = vmax.f32 %v496, %v562
  %v627 = vmax.f32 %v498, %v563
  %v628 = vpack.c.bf16 %v564, %v564
  %v629 = vpack.c.bf16 %v565, %v565
  %v630 = vpack.c.bf16 %v566, %v566
  %v631 = vpack.c.bf16 %v567, %v567
  %v632 = vpack.c.bf16 %v568, %v568
  %v633 = vpack.c.bf16 %v569, %v569
  %v634 = vpack.c.bf16 %v570, %v570
  %v635 = vpack.c.bf16 %v571, %v571
  %v636 = vpack.c.bf16 %v572, %v572
  %v637 = vpack.c.bf16 %v573, %v573
  %v638 = vpack.c.bf16 %v574, %v574
  %v639 = vpack.c.bf16 %v575, %v575
  %v640 = vpack.c.bf16 %v576, %v576
  %v641 = vpack.c.bf16 %v577, %v577
  %v642 = vpack.c.bf16 %v578, %v578
  %v643 = vpack.c.bf16 %v579, %v579
  %v644 = vpack.c.bf16 %v580, %v580
  %v645 = vpack.c.bf16 %v581, %v581
  %v646 = vpack.c.bf16 %v582, %v582
  %v647 = vpack.c.bf16 %v583, %v583
  %v648 = vpack.c.bf16 %v584, %v584
  %v649 = vpack.c.bf16 %v585, %v585
  %v650 = vpack.c.bf16 %v586, %v586
  %v651 = vpack.c.bf16 %v587, %v587
  %v652 = vpack.c.bf16 %v588, %v588
  %v653 = vpack.c.bf16 %v589, %v589
  %v654 = vpack.c.bf16 %v590, %v590
  %v655 = vpack.c.bf16 %v591, %v591
  %v656 = vpack.c.bf16 %v592, %v592
  %v657 = vpack.c.bf16 %v593, %v593
  %v658 = vpack.c.bf16 %v594, %v594
  %v659 = vpack.c.bf16 %v595, %v595
  %v660 = vpack.c.bf16 %v596, %v596
  %v661 = vpack.c.bf16 %v597, %v597
  %v662 = vpack.c.bf16 %v598, %v598
  %v663 = vpack.c.bf16 %v599, %v599
  %v664 = vpack.c.bf16 %v600, %v600
  %v665 = vpack.c.bf16 %v601, %v601
  %v666 = vpack.c.bf16 %v602, %v602
  %v667 = vpack.c.bf16 %v603, %v603
  %v668 = vpack.c.bf16 %v604, %v604
  %v669 = vpack.c.bf16 %v605, %v605
  %v670 = vpack.c.bf16 %v606, %v606
  %v671 = vpack.c.bf16 %v607, %v607
  %v672 = vpack.c.bf16 %v608, %v608
  %v673 = vpack.c.bf16 %v609, %v609
  %v674 = vpack.c.bf16 %v610, %v610
  %v675 = vpack.c.bf16 %v611, %v611
  %v676 = vpack.c.bf16 %v612, %v612
  %v677 = vpack.c.bf16 %v613, %v613
  %v678 = vpack.c.bf16 %v614, %v614
  %v679 = vpack.c.bf16 %v615, %v615
  %v680 = vpack.c.bf16 %v616, %v616
  %v681 = vpack.c.bf16 %v617, %v617
  %v682 = vpack.c.bf16 %v618, %v618
  %v683 = vpack.c.bf16 %v619, %v619
  %v684 = vpack.c.bf16 %v620, %v620
  %v685 = vpack.c.bf16 %v621, %v621
  %v686 = vpack.c.bf16 %v622, %v622
  %v687 = vpack.c.bf16 %v623, %v623
  %v688 = vpack.c.bf16 %v624, %v624
  %v689 = vpack.c.bf16 %v625, %v625
  %v690 = vpack.c.bf16 %v626, %v626
  %v691 = vpack.c.bf16 %v627, %v627
  %692 = vst [vmem:[%s2] sm:$0xf] %v628
  %693 = vst [vmem:[%s2 + $0x4] sm:$0xf] %v629
  %694 = vst [vmem:[%s2 + $0x8] sm:$0xf] %v630
  %695 = vst [vmem:[%s2 + $0xc] sm:$0xf] %v631
  %696 = vst [vmem:[%s2 + $0x10] sm:$0xf] %v632
  %697 = vst [vmem:[%s2 + $0x14] sm:$0xf] %v633
  %698 = vst [vmem:[%s2 + $0x18] sm:$0xf] %v634
  %699 = vst [vmem:[%s2 + $0x1c] sm:$0xf] %v635
  %700 = vst [vmem:[%s2 + $0x20] sm:$0xf] %v636
  %701 = vst [vmem:[%s2 + $0x24] sm:$0xf] %v637
  %702 = vst [vmem:[%s2 + $0x28] sm:$0xf] %v638
  %703 = vst [vmem:[%s2 + $0x2c] sm:$0xf] %v639
  %704 = vst [vmem:[%s2 + $0x30] sm:$0xf] %v640
  %705 = vst [vmem:[%s2 + $0x34] sm:$0xf] %v641
  %706 = vst [vmem:[%s2 + $0x38] sm:$0xf] %v642
  %707 = vst [vmem:[%s2 + $0x3c] sm:$0xf] %v643
  %708 = vst [vmem:[%s2 + $0x40] sm:$0xf] %v644
  %709 = vst [vmem:[%s2 + $0x44] sm:$0xf] %v645
  %710 = vst [vmem:[%s2 + $0x48] sm:$0xf] %v646
  %711 = vst [vmem:[%s2 + $0x4c] sm:$0xf] %v647
  %712 = vst [vmem:[%s2 + $0x50] sm:$0xf] %v648
  %713 = vst [vmem:[%s2 + $0x54] sm:$0xf] %v649
  %714 = vst [vmem:[%s2 + $0x58] sm:$0xf] %v650
  %715 = vst [vmem:[%s2 + $0x5c] sm:$0xf] %v651
  %716 = vst [vmem:[%s2 + $0x60] sm:$0xf] %v652
  %717 = vst [vmem:[%s2 + $0x64] sm:$0xf] %v653
  %718 = vst [vmem:[%s2 + $0x68] sm:$0xf] %v654
  %719 = vst [vmem:[%s2 + $0x6c] sm:$0xf] %v655
  %720 = vst [vmem:[%s2 + $0x70] sm:$0xf] %v656
  %721 = vst [vmem:[%s2 + $0x74] sm:$0xf] %v657
  %722 = vst [vmem:[%s2 + $0x78] sm:$0xf] %v658
  %723 = vst [vmem:[%s2 + $0x7c] sm:$0xf] %v659
  %724 = vst [vmem:[%s2 + $0x80] sm:$0xf] %v660
  %725 = vst [vmem:[%s2 + $0x84] sm:$0xf] %v661
  %726 = vst [vmem:[%s2 + $0x88] sm:$0xf] %v662
  %727 = vst [vmem:[%s2 + $0x8c] sm:$0xf] %v663
  %728 = vst [vmem:[%s2 + $0x90] sm:$0xf] %v664
  %729 = vst [vmem:[%s2 + $0x94] sm:$0xf] %v665
  %730 = vst [vmem:[%s2 + $0x98] sm:$0xf] %v666
  %731 = vst [vmem:[%s2 + $0x9c] sm:$0xf] %v667
  %732 = vst [vmem:[%s2 + $0xa0] sm:$0xf] %v668
  %733 = vst [vmem:[%s2 + $0xa4] sm:$0xf] %v669
  %734 = vst [vmem:[%s2 + $0xa8] sm:$0xf] %v670
  %735 = vst [vmem:[%s2 + $0xac] sm:$0xf] %v671
  %736 = vst [vmem:[%s2 + $0xb0] sm:$0xf] %v672
  %737 = vst [vmem:[%s2 + $0xb4] sm:$0xf] %v673
  %738 = vst [vmem:[%s2 + $0xb8] sm:$0xf] %v674
  %739 = vst [vmem:[%s2 + $0xbc] sm:$0xf] %v675
  %740 = vst [vmem:[%s2 + $0xc0] sm:$0xf] %v676
  %741 = vst [vmem:[%s2 + $0xc4] sm:$0xf] %v677
  %742 = vst [vmem:[%s2 + $0xc8] sm:$0xf] %v678
  %743 = vst [vmem:[%s2 + $0xcc] sm:$0xf] %v679
  %744 = vst [vmem:[%s2 + $0xd0] sm:$0xf] %v680
  %745 = vst [vmem:[%s2 + $0xd4] sm:$0xf] %v681
  %746 = vst [vmem:[%s2 + $0xd8] sm:$0xf] %v682
  %747 = vst [vmem:[%s2 + $0xdc] sm:$0xf] %v683
  %748 = vst [vmem:[%s2 + $0xe0] sm:$0xf] %v684
  %749 = vst [vmem:[%s2 + $0xe4] sm:$0xf] %v685
  %750 = vst [vmem:[%s2 + $0xe8] sm:$0xf] %v686
  %751 = vst [vmem:[%s2 + $0xec] sm:$0xf] %v687
  %752 = vst [vmem:[%s2 + $0xf0] sm:$0xf] %v688
  %753 = vst [vmem:[%s2 + $0xf4] sm:$0xf] %v689
  %754 = vst [vmem:[%s2 + $0xf8] sm:$0xf] %v690
  %755 = vst [vmem:[%s2 + $0xfc] sm:$0xf] %v691
  // Predicated region
  $region10: #{patch_image_discriminator.6} parent=0 // pred_check
    _
  $region11: #{patch_image_discriminator.6} parent=0 // pred_check_branch
    %757 = sbr.rel (0) target = $region13
  $region12: #{patch_image_discriminator.6} parent=0 // pred_region
    _
  $region13: #{patch_image_discriminator.6} parent=0 // pred_fallthru
    _
  // Predicated region
  $region14: #{patch_image_discriminator.6} parent=0 // pred_check
    _
  $region15: #{patch_image_discriminator.6} parent=0 // pred_check_branch
    %759 = sbr.rel (0) target = $region17
  $region16: #{patch_image_discriminator.6} parent=0 // pred_region
    _
  $region17: #{patch_image_discriminator.6} parent=0 // pred_fallthru
    _

// kernel: patch_image_discriminator.8
$region0: #{patch_image_discriminator.8}
  #allocation0 [shape = 'u32[]', space=smem, size = 0x4, offset = 0x4, fixed_abs, tag = 'smem constant byte address 0x4 - core index']
  #allocation1 [shape = 'u32[72,128]{1,0:T(1,128)}', space=vmem, size = 0x9000, scoped, tag = 'internal scratch']
  %s0 = inlined_call_operand.vmem [shape: f32[128,128], index: 0, kind: input, shape index: {}]
  %s1 = inlined_call_operand.vmem [shape: f32[1,128], index: 1, kind: input, shape index: {}]
  %s2 = inlined_call_operand.vmem [shape: f32[1,128], index: 2, kind: input, shape index: {}]
  %s3 = inlined_call_operand.vmem [shape: bf16[128,128], index: 3, kind: output, shape index: {}]
  %s4 = sld [smem:[#allocation0]]
  $region22: #{patch_image_discriminator.8} parent=0
    _
  %s6 = ssub.s32 1, %s4
  %s7 = scalar_select 0, %s6, %s4
  // Predicated region
  $region2: #{patch_image_discriminator.8} parent=0 // pred_check
    _
  $region3: #{patch_image_discriminator.8} parent=0 // pred_check_branch
    %9 = sbr.rel (0) target = $region5
  $region4: #{patch_image_discriminator.8} parent=0 // pred_region
    _
  $region5: #{patch_image_discriminator.8} parent=0 // pred_fallthru
    _
  // Predicated region
  $region6: #{patch_image_discriminator.8} parent=0 // pred_check
    _
  $region7: #{patch_image_discriminator.8} parent=0 // pred_check_branch
    %11 = sbr.rel (0) target = $region9
  $region8: #{patch_image_discriminator.8} parent=0 // pred_region
    _
  $region9: #{patch_image_discriminator.8} parent=0 // pred_fallthru
    _
  // Predicated region
  $region10: #{patch_image_discriminator.8} parent=0 // pred_check
    _
  $region11: #{patch_image_discriminator.8} parent=0 // pred_check_branch
    %13 = sbr.rel (0) target = $region13
  $region12: #{patch_image_discriminator.8} parent=0 // pred_region
    _
  $region13: #{patch_image_discriminator.8} parent=0 // pred_fallthru
    _
  %v14 = vld [vmem:[%s0] sm:$0xff]
  %v15 = vld [vmem:[%s0 + $0x8] sm:$0xff]
  %v16 = vld [vmem:[%s0 + $0x10] sm:$0xff]
  %v17 = vld [vmem:[%s0 + $0x18] sm:$0xff]
  %v18 = vld [vmem:[%s0 + $0x20] sm:$0xff]
  %v19 = vld [vmem:[%s0 + $0x28] sm:$0xff]
  %v20 = vld [vmem:[%s0 + $0x30] sm:$0xff]
  %v21 = vld [vmem:[%s0 + $0x38] sm:$0xff]
  %v22 = vld [vmem:[%s0 + $0x40] sm:$0xff]
  %v23 = vld [vmem:[%s0 + $0x48] sm:$0xff]
  %v24 = vld [vmem:[%s0 + $0x50] sm:$0xff]
  %v25 = vld [vmem:[%s0 + $0x58] sm:$0xff]
  %v26 = vld [vmem:[%s0 + $0x60] sm:$0xff]
  %v27 = vld [vmem:[%s0 + $0x68] sm:$0xff]
  %v28 = vld [vmem:[%s0 + $0x70] sm:$0xff]
  %v29 = vld [vmem:[%s0 + $0x78] sm:$0xff]
  %v30 = vld [vmem:[%s1] sm:$0x1]
  %v32 = vperm.slane %v30, 0
  %v34 = vmul.f32 %v14, %v32
  %v35 = vmul.f32 %v15, %v32
  %v36 = vmul.f32 %v16, %v32
  %v37 = vmul.f32 %v17, %v32
  %v38 = vmul.f32 %v18, %v32
  %v39 = vmul.f32 %v19, %v32
  %v40 = vmul.f32 %v20, %v32
  %v41 = vmul.f32 %v21, %v32
  %v42 = vmul.f32 %v22, %v32
  %v43 = vmul.f32 %v23, %v32
  %v44 = vmul.f32 %v24, %v32
  %v45 = vmul.f32 %v25, %v32
  %v46 = vmul.f32 %v26, %v32
  %v47 = vmul.f32 %v27, %v32
  %v48 = vmul.f32 %v28, %v32
  %v49 = vmul.f32 %v29, %v32
  %v50 = vld [vmem:[%s2] sm:$0x1]
  %v52 = vperm.slane %v50, 0
  %v54 = vadd.f32 %v34, %v52
  %v55 = vadd.f32 %v35, %v52
  %v56 = vadd.f32 %v36, %v52
  %v57 = vadd.f32 %v37, %v52
  %v58 = vadd.f32 %v38, %v52
  %v59 = vadd.f32 %v39, %v52
  %v60 = vadd.f32 %v40, %v52
  %v61 = vadd.f32 %v41, %v52
  %v62 = vadd.f32 %v42, %v52
  %v63 = vadd.f32 %v43, %v52
  %v64 = vadd.f32 %v44, %v52
  %v65 = vadd.f32 %v45, %v52
  %v66 = vadd.f32 %v46, %v52
  %v67 = vadd.f32 %v47, %v52
  %v68 = vadd.f32 %v48, %v52
  %v69 = vadd.f32 %v49, %v52
  %v70 = vmul.f32 %v54, 0.2
  %v71 = vmul.f32 %v55, 0.2
  %v72 = vmul.f32 %v56, 0.2
  %v73 = vmul.f32 %v57, 0.2
  %v74 = vmul.f32 %v58, 0.2
  %v75 = vmul.f32 %v59, 0.2
  %v76 = vmul.f32 %v60, 0.2
  %v77 = vmul.f32 %v61, 0.2
  %v78 = vmul.f32 %v62, 0.2
  %v79 = vmul.f32 %v63, 0.2
  %v80 = vmul.f32 %v64, 0.2
  %v81 = vmul.f32 %v65, 0.2
  %v82 = vmul.f32 %v66, 0.2
  %v83 = vmul.f32 %v67, 0.2
  %v84 = vmul.f32 %v68, 0.2
  %v85 = vmul.f32 %v69, 0.2
  %v86 = vmax.f32 %v54, %v70
  %v87 = vmax.f32 %v55, %v71
  %v88 = vmax.f32 %v56, %v72
  %v89 = vmax.f32 %v57, %v73
  %v90 = vmax.f32 %v58, %v74
  %v91 = vmax.f32 %v59, %v75
  %v92 = vmax.f32 %v60, %v76
  %v93 = vmax.f32 %v61, %v77
  %v94 = vmax.f32 %v62, %v78
  %v95 = vmax.f32 %v63, %v79
  %v96 = vmax.f32 %v64, %v80
  %v97 = vmax.f32 %v65, %v81
  %v98 = vmax.f32 %v66, %v82
  %v99 = vmax.f32 %v67, %v83
  %v100 = vmax.f32 %v68, %v84
  %v101 = vmax.f32 %v69, %v85
  %v102 = vpack.c.bf16 %v86, %v86
  %v103 = vpack.c.bf16 %v87, %v87
  %v104 = vpack.c.bf16 %v88, %v88
  %v105 = vpack.c.bf16 %v89, %v89
  %v106 = vpack.c.bf16 %v90, %v90
  %v107 = vpack.c.bf16 %v91, %v91
  %v108 = vpack.c.bf16 %v92, %v92
  %v109 = vpack.c.bf16 %v93, %v93
  %v110 = vpack.c.bf16 %v94, %v94
  %v111 = vpack.c.bf16 %v95, %v95
  %v112 = vpack.c.bf16 %v96, %v96
  %v113 = vpack.c.bf16 %v97, %v97
  %v114 = vpack.c.bf16 %v98, %v98
  %v115 = vpack.c.bf16 %v99, %v99
  %v116 = vpack.c.bf16 %v100, %v100
  %v117 = vpack.c.bf16 %v101, %v101
  %118 = vst [vmem:[%s3] sm:$0xf] %v102
  %119 = vst [vmem:[%s3 + $0x4] sm:$0xf] %v103
  %120 = vst [vmem:[%s3 + $0x8] sm:$0xf] %v104
  %121 = vst [vmem:[%s3 + $0xc] sm:$0xf] %v105
  %122 = vst [vmem:[%s3 + $0x10] sm:$0xf] %v106
  %123 = vst [vmem:[%s3 + $0x14] sm:$0xf] %v107
  %124 = vst [vmem:[%s3 + $0x18] sm:$0xf] %v108
  %125 = vst [vmem:[%s3 + $0x1c] sm:$0xf] %v109
  %126 = vst [vmem:[%s3 + $0x20] sm:$0xf] %v110
  %127 = vst [vmem:[%s3 + $0x24] sm:$0xf] %v111
  %128 = vst [vmem:[%s3 + $0x28] sm:$0xf] %v112
  %129 = vst [vmem:[%s3 + $0x2c] sm:$0xf] %v113
  %130 = vst [vmem:[%s3 + $0x30] sm:$0xf] %v114
  %131 = vst [vmem:[%s3 + $0x34] sm:$0xf] %v115
  %132 = vst [vmem:[%s3 + $0x38] sm:$0xf] %v116
  %133 = vst [vmem:[%s3 + $0x3c] sm:$0xf] %v117
  // Predicated region
  $region14: #{patch_image_discriminator.8} parent=0 // pred_check
    _
  $region15: #{patch_image_discriminator.8} parent=0 // pred_check_branch
    %135 = sbr.rel (0) target = $region17
  $region16: #{patch_image_discriminator.8} parent=0 // pred_region
    _
  $region17: #{patch_image_discriminator.8} parent=0 // pred_fallthru
    _
  // Predicated region
  $region18: #{patch_image_discriminator.8} parent=0 // pred_check
    _
  $region19: #{patch_image_discriminator.8} parent=0 // pred_check_branch
    %137 = sbr.rel (0) target = $region21
  $region20: #{patch_image_discriminator.8} parent=0 // pred_region
    _
  $region21: #{patch_image_discriminator.8} parent=0 // pred_fallthru
    _

// kernel: patch_image_discriminator.7
$region0: #{patch_image_discriminator.7}
  #allocation0 [shape = 'u32[]', space=smem, size = 0x4, offset = 0x4, fixed_abs, tag = 'smem constant byte address 0x4 - core index']
  #allocation1 [shape = 'u32[72,128]{1,0:T(1,128)}', space=vmem, size = 0x9000, scoped, tag = 'internal scratch']
  %s0 = inlined_call_operand.vmem [shape: bf16[128,2048], index: 0, kind: input, shape index: {}]
  %s1 = inlined_call_operand.vmem [shape: bf16[2048,128], index: 1, kind: input, shape index: {}]
  %s2 = inlined_call_operand.vmem [shape: f32[128,128], index: 2, kind: output, shape index: {0}]
  %s3 = inlined_call_operand.vmem [shape: f32[1,128], index: 3, kind: output, shape index: {1}]
  %s4 = inlined_call_operand.vmem [shape: f32[1,128], index: 4, kind: output, shape index: {2}]
  %5 = xla_tuple %s2, %s3, %s4
  %s6 = sld [smem:[#allocation0]]
  $region38: #{patch_image_discriminator.7} parent=0
    _
  %s8 = ssub.s32 1, %s6
  %s9 = scalar_select 0, %s8, %s6
  // Predicated region
  $region2: #{patch_image_discriminator.7} parent=0 // pred_check
    _
  $region3: #{patch_image_discriminator.7} parent=0 // pred_check_branch
    %11 = sbr.rel (0) target = $region5
  $region4: #{patch_image_discriminator.7} parent=0 // pred_region
    _
  $region5: #{patch_image_discriminator.7} parent=0 // pred_fallthru
    _
  // Predicated region
  $region6: #{patch_image_discriminator.7} parent=0 // pred_check
    _
  $region7: #{patch_image_discriminator.7} parent=0 // pred_check_branch
    %13 = sbr.rel (0) target = $region9
  $region8: #{patch_image_discriminator.7} parent=0 // pred_region
    _
  $region9: #{patch_image_discriminator.7} parent=0 // pred_fallthru
    _
  %p14 = scmp.eq.s32.totalorder 0, 0
  // Predicated region
  $region10: #{patch_image_discriminator.7} parent=0 // pred_check
    %p15 = pneg %p14
  $region11: #{patch_image_discriminator.7} parent=0 // pred_check_branch
    %17 = sbr.rel (%p15) target = $region13
  $region12: #{patch_image_discriminator.7} parent=0 // pred_region
    %18 = vst [vmem:[%s3] sm:$0x1] 0.0
    %19 = vst [vmem:[%s4] sm:$0x1] 0.0
  $region13: #{patch_image_discriminator.7} parent=0 // pred_fallthru
    _
  %v20 = vld [vmem:[%s0] sm:$0xff]
  %v21 = vld [vmem:[%s0 + $0x8] sm:$0xff]
  %v22 = vld [vmem:[%s0 + $0x10] sm:$0xff]
  %v23 = vld [vmem:[%s0 + $0x18] sm:$0xff]
  %v24 = vld [vmem:[%s0 + $0x20] sm:$0xff]
  %v25 = vld [vmem:[%s0 + $0x28] sm:$0xff]
  %v26 = vld [vmem:[%s0 + $0x30] sm:$0xff]
  %v27 = vld [vmem:[%s0 + $0x38] sm:$0xff]
  %v28 = vld [vmem:[%s0 + $0x40] sm:$0xff]
  %v29 = vld [vmem:[%s0 + $0x48] sm:$0xff]
  %v30 = vld [vmem:[%s0 + $0x50] sm:$0xff]
  %v31 = vld [vmem:[%s0 + $0x58] sm:$0xff]
  %v32 = vld [vmem:[%s0 + $0x60] sm:$0xff]
  %v33 = vld [vmem:[%s0 + $0x68] sm:$0xff]
  %v34 = vld [vmem:[%s0 + $0x70] sm:$0xff]
  %v35 = vld [vmem:[%s0 + $0x78] sm:$0xff]
  %v36 = vld [vmem:[%s0 + $0x80] sm:$0xff]
  %v37 = vld [vmem:[%s0 + $0x88] sm:$0xff]
  %v38 = vld [vmem:[%s0 + $0x90] sm:$0xff]
  %v39 = vld [vmem:[%s0 + $0x98] sm:$0xff]
  %v40 = vld [vmem:[%s0 + $0xa0] sm:$0xff]
  %v41 = vld [vmem:[%s0 + $0xa8] sm:$0xff]
  %v42 = vld [vmem:[%s0 + $0xb0] sm:$0xff]
  %v43 = vld [vmem:[%s0 + $0xb8] sm:$0xff]
  %v44 = vld [vmem:[%s0 + $0xc0] sm:$0xff]
  %v45 = vld [vmem:[%s0 + $0xc8] sm:$0xff]
  %v46 = vld [vmem:[%s0 + $0xd0] sm:$0xff]
  %v47 = vld [vmem:[%s0 + $0xd8] sm:$0xff]
  %v48 = vld [vmem:[%s0 + $0xe0] sm:$0xff]
  %v49 = vld [vmem:[%s0 + $0xe8] sm:$0xff]
  %v50 = vld [vmem:[%s0 + $0xf0] sm:$0xff]
  %v51 = vld [vmem:[%s0 + $0xf8] sm:$0xff]
  %v52 = vld [vmem:[%s0 + $0x100] sm:$0xff]
  %v53 = vld [vmem:[%s0 + $0x108] sm:$0xff]
  %v54 = vld [vmem:[%s0 + $0x110] sm:$0xff]
  %v55 = vld [vmem:[%s0 + $0x118] sm:$0xff]
  %v56 = vld [vmem:[%s0 + $0x120] sm:$0xff]
  %v57 = vld [vmem:[%s0 + $0x128] sm:$0xff]
  %v58 = vld [vmem:[%s0 + $0x130] sm:$0xff]
  %v59 = vld [vmem:[%s0 + $0x138] sm:$0xff]
  %v60 = vld [vmem:[%s0 + $0x140] sm:$0xff]
  %v61 = vld [vmem:[%s0 + $0x148] sm:$0xff]
  %v62 = vld [vmem:[%s0 + $0x150] sm:$0xff]
  %v63 = vld [vmem:[%s0 + $0x158] sm:$0xff]
  %v64 = vld [vmem:[%s0 + $0x160] sm:$0xff]
  %v65 = vld [vmem:[%s0 + $0x168] sm:$0xff]
  %v66 = vld [vmem:[%s0 + $0x170] sm:$0xff]
  %v67 = vld [vmem:[%s0 + $0x178] sm:$0xff]
  %v68 = vld [vmem:[%s0 + $0x180] sm:$0xff]
  %v69 = vld [vmem:[%s0 + $0x188] sm:$0xff]
  %v70 = vld [vmem:[%s0 + $0x190] sm:$0xff]
  %v71 = vld [vmem:[%s0 + $0x198] sm:$0xff]
  %v72 = vld [vmem:[%s0 + $0x1a0] sm:$0xff]
  %v73 = vld [vmem:[%s0 + $0x1a8] sm:$0xff]
  %v74 = vld [vmem:[%s0 + $0x1b0] sm:$0xff]
  %v75 = vld [vmem:[%s0 + $0x1b8] sm:$0xff]
  %v76 = vld [vmem:[%s0 + $0x1c0] sm:$0xff]
  %v77 = vld [vmem:[%s0 + $0x1c8] sm:$0xff]
  %v78 = vld [vmem:[%s0 + $0x1d0] sm:$0xff]
  %v79 = vld [vmem:[%s0 + $0x1d8] sm:$0xff]
  %v80 = vld [vmem:[%s0 + $0x1e0] sm:$0xff]
  %v81 = vld [vmem:[%s0 + $0x1e8] sm:$0xff]
  %v82 = vld [vmem:[%s0 + $0x1f0] sm:$0xff]
  %v83 = vld [vmem:[%s0 + $0x1f8] sm:$0xff]
  %v84 = vld [vmem:[%s0 + $0x200] sm:$0xff]
  %v85 = vld [vmem:[%s0 + $0x208] sm:$0xff]
  %v86 = vld [vmem:[%s0 + $0x210] sm:$0xff]
  %v87 = vld [vmem:[%s0 + $0x218] sm:$0xff]
  %v88 = vld [vmem:[%s0 + $0x220] sm:$0xff]
  %v89 = vld [vmem:[%s0 + $0x228] sm:$0xff]
  %v90 = vld [vmem:[%s0 + $0x230] sm:$0xff]
  %v91 = vld [vmem:[%s0 + $0x238] sm:$0xff]
  %v92 = vld [vmem:[%s0 + $0x240] sm:$0xff]
  %v93 = vld [vmem:[%s0 + $0x248] sm:$0xff]
  %v94 = vld [vmem:[%s0 + $0x250] sm:$0xff]
  %v95 = vld [vmem:[%s0 + $0x258] sm:$0xff]
  %v96 = vld [vmem:[%s0 + $0x260] sm:$0xff]
  %v97 = vld [vmem:[%s0 + $0x268] sm:$0xff]
  %v98 = vld [vmem:[%s0 + $0x270] sm:$0xff]
  %v99 = vld [vmem:[%s0 + $0x278] sm:$0xff]
  %v100 = vld [vmem:[%s0 + $0x280] sm:$0xff]
  %v101 = vld [vmem:[%s0 + $0x288] sm:$0xff]
  %v102 = vld [vmem:[%s0 + $0x290] sm:$0xff]
  %v103 = vld [vmem:[%s0 + $0x298] sm:$0xff]
  %v104 = vld [vmem:[%s0 + $0x2a0] sm:$0xff]
  %v105 = vld [vmem:[%s0 + $0x2a8] sm:$0xff]
  %v106 = vld [vmem:[%s0 + $0x2b0] sm:$0xff]
  %v107 = vld [vmem:[%s0 + $0x2b8] sm:$0xff]
  %v108 = vld [vmem:[%s0 + $0x2c0] sm:$0xff]
  %v109 = vld [vmem:[%s0 + $0x2c8] sm:$0xff]
  %v110 = vld [vmem:[%s0 + $0x2d0] sm:$0xff]
  %v111 = vld [vmem:[%s0 + $0x2d8] sm:$0xff]
  %v112 = vld [vmem:[%s0 + $0x2e0] sm:$0xff]
  %v113 = vld [vmem:[%s0 + $0x2e8] sm:$0xff]
  %v114 = vld [vmem:[%s0 + $0x2f0] sm:$0xff]
  %v115 = vld [vmem:[%s0 + $0x2f8] sm:$0xff]
  %v116 = vld [vmem:[%s0 + $0x300] sm:$0xff]
  %v117 = vld [vmem:[%s0 + $0x308] sm:$0xff]
  %v118 = vld [vmem:[%s0 + $0x310] sm:$0xff]
  %v119 = vld [vmem:[%s0 + $0x318] sm:$0xff]
  %v120 = vld [vmem:[%s0 + $0x320] sm:$0xff]
  %v121 = vld [vmem:[%s0 + $0x328] sm:$0xff]
  %v122 = vld [vmem:[%s0 + $0x330] sm:$0xff]
  %v123 = vld [vmem:[%s0 + $0x338] sm:$0xff]
  %v124 = vld [vmem:[%s0 + $0x340] sm:$0xff]
  %v125 = vld [vmem:[%s0 + $0x348] sm:$0xff]
  %v126 = vld [vmem:[%s0 + $0x350] sm:$0xff]
  %v127 = vld [vmem:[%s0 + $0x358] sm:$0xff]
  %v128 = vld [vmem:[%s0 + $0x360] sm:$0xff]
  %v129 = vld [vmem:[%s0 + $0x368] sm:$0xff]
  %v130 = vld [vmem:[%s0 + $0x370] sm:$0xff]
  %v131 = vld [vmem:[%s0 + $0x378] sm:$0xff]
  %v132 = vld [vmem:[%s0 + $0x380] sm:$0xff]
  %v133 = vld [vmem:[%s0 + $0x388] sm:$0xff]
  %v134 = vld [vmem:[%s0 + $0x390] sm:$0xff]
  %v135 = vld [vmem:[%s0 + $0x398] sm:$0xff]
  %v136 = vld [vmem:[%s0 + $0x3a0] sm:$0xff]
  %v137 = vld [vmem:[%s0 + $0x3a8] sm:$0xff]
  %v138 = vld [vmem:[%s0 + $0x3b0] sm:$0xff]
  %v139 = vld [vmem:[%s0 + $0x3b8] sm:$0xff]
  %v140 = vld [vmem:[%s0 + $0x3c0] sm:$0xff]
  %v141 = vld [vmem:[%s0 + $0x3c8] sm:$0xff]
  %v142 = vld [vmem:[%s0 + $0x3d0] sm:$0xff]
  %v143 = vld [vmem:[%s0 + $0x3d8] sm:$0xff]
  %v144 = vld [vmem:[%s0 + $0x3e0] sm:$0xff]
  %v145 = vld [vmem:[%s0 + $0x3e8] sm:$0xff]
  %v146 = vld [vmem:[%s0 + $0x3f0] sm:$0xff]
  %v147 = vld [vmem:[%s0 + $0x3f8] sm:$0xff]
  %v148 = vld [vmem:[%s1] sm:$0xf]
  %v149 = vld [vmem:[%s1 + $0x4] sm:$0xf]
  %v150 = vld [vmem:[%s1 + $0x8] sm:$0xf]
  %v151 = vld [vmem:[%s1 + $0xc] sm:$0xf]
  %v152 = vld [vmem:[%s1 + $0x10] sm:$0xf]
  %v153 = vld [vmem:[%s1 + $0x14] sm:$0xf]
  %v154 = vld [vmem:[%s1 + $0x18] sm:$0xf]
  %v155 = vld [vmem:[%s1 + $0x1c] sm:$0xf]
  %v156 = vld [vmem:[%s1 + $0x20] sm:$0xf]
  %v157 = vld [vmem:[%s1 + $0x24] sm:$0xf]
  %v158 = vld [vmem:[%s1 + $0x28] sm:$0xf]
  %v159 = vld [vmem:[%s1 + $0x2c] sm:$0xf]
  %v160 = vld [vmem:[%s1 + $0x30] sm:$0xf]
  %v161 = vld [vmem:[%s1 + $0x34] sm:$0xf]
  %v162 = vld [vmem:[%s1 + $0x38] sm:$0xf]
  %v163 = vld [vmem:[%s1 + $0x3c] sm:$0xf]
  %v164 = vld [vmem:[%s1 + $0x40] sm:$0xf]
  %v165 = vld [vmem:[%s1 + $0x44] sm:$0xf]
  %v166 = vld [vmem:[%s1 + $0x48] sm:$0xf]
  %v167 = vld [vmem:[%s1 + $0x4c] sm:$0xf]
  %v168 = vld [vmem:[%s1 + $0x50] sm:$0xf]
  %v169 = vld [vmem:[%s1 + $0x54] sm:$0xf]
  %v170 = vld [vmem:[%s1 + $0x58] sm:$0xf]
  %v171 = vld [vmem:[%s1 + $0x5c] sm:$0xf]
  %v172 = vld [vmem:[%s1 + $0x60] sm:$0xf]
  %v173 = vld [vmem:[%s1 + $0x64] sm:$0xf]
  %v174 = vld [vmem:[%s1 + $0x68] sm:$0xf]
  %v175 = vld [vmem:[%s1 + $0x6c] sm:$0xf]
  %v176 = vld [vmem:[%s1 + $0x70] sm:$0xf]
  %v177 = vld [vmem:[%s1 + $0x74] sm:$0xf]
  %v178 = vld [vmem:[%s1 + $0x78] sm:$0xf]
  %v179 = vld [vmem:[%s1 + $0x7c] sm:$0xf]
  %v180 = vld [vmem:[%s1 + $0x80] sm:$0xf]
  %v181 = vld [vmem:[%s1 + $0x84] sm:$0xf]
  %v182 = vld [vmem:[%s1 + $0x88] sm:$0xf]
  %v183 = vld [vmem:[%s1 + $0x8c] sm:$0xf]
  %v184 = vld [vmem:[%s1 + $0x90] sm:$0xf]
  %v185 = vld [vmem:[%s1 + $0x94] sm:$0xf]
  %v186 = vld [vmem:[%s1 + $0x98] sm:$0xf]
  %v187 = vld [vmem:[%s1 + $0x9c] sm:$0xf]
  %v188 = vld [vmem:[%s1 + $0xa0] sm:$0xf]
  %v189 = vld [vmem:[%s1 + $0xa4] sm:$0xf]
  %v190 = vld [vmem:[%s1 + $0xa8] sm:$0xf]
  %v191 = vld [vmem:[%s1 + $0xac] sm:$0xf]
  %v192 = vld [vmem:[%s1 + $0xb0] sm:$0xf]
  %v193 = vld [vmem:[%s1 + $0xb4] sm:$0xf]
  %v194 = vld [vmem:[%s1 + $0xb8] sm:$0xf]
  %v195 = vld [vmem:[%s1 + $0xbc] sm:$0xf]
  %v196 = vld [vmem:[%s1 + $0xc0] sm:$0xf]
  %v197 = vld [vmem:[%s1 + $0xc4] sm:$0xf]
  %v198 = vld [vmem:[%s1 + $0xc8] sm:$0xf]
  %v199 = vld [vmem:[%s1 + $0xcc] sm:$0xf]
  %v200 = vld [vmem:[%s1 + $0xd0] sm:$0xf]
  %v201 = vld [vmem:[%s1 + $0xd4] sm:$0xf]
  %v202 = vld [vmem:[%s1 + $0xd8] sm:$0xf]
  %v203 = vld [vmem:[%s1 + $0xdc] sm:$0xf]
  %v204 = vld [vmem:[%s1 + $0xe0] sm:$0xf]
  %v205 = vld [vmem:[%s1 + $0xe4] sm:$0xf]
  %v206 = vld [vmem:[%s1 + $0xe8] sm:$0xf]
  %v207 = vld [vmem:[%s1 + $0xec] sm:$0xf]
  %v208 = vld [vmem:[%s1 + $0xf0] sm:$0xf]
  %v209 = vld [vmem:[%s1 + $0xf4] sm:$0xf]
  %v210 = vld [vmem:[%s1 + $0xf8] sm:$0xf]
  %v211 = vld [vmem:[%s1 + $0xfc] sm:$0xf]
  %v212 = vld [vmem:[%s1 + $0x100] sm:$0xf]
  %v213 = vld [vmem:[%s1 + $0x104] sm:$0xf]
  %v214 = vld [vmem:[%s1 + $0x108] sm:$0xf]
  %v215 = vld [vmem:[%s1 + $0x10c] sm:$0xf]
  %v216 = vld [vmem:[%s1 + $0x110] sm:$0xf]
  %v217 = vld [vmem:[%s1 + $0x114] sm:$0xf]
  %v218 = vld [vmem:[%s1 + $0x118] sm:$0xf]
  %v219 = vld [vmem:[%s1 + $0x11c] sm:$0xf]
  %v220 = vld [vmem:[%s1 + $0x120] sm:$0xf]
  %v221 = vld [vmem:[%s1 + $0x124] sm:$0xf]
  %v222 = vld [vmem:[%s1 + $0x128] sm:$0xf]
  %v223 = vld [vmem:[%s1 + $0x12c] sm:$0xf]
  %v224 = vld [vmem:[%s1 + $0x130] sm:$0xf]
  %v225 = vld [vmem:[%s1 + $0x134] sm:$0xf]
  %v226 = vld [vmem:[%s1 + $0x138] sm:$0xf]
  %v227 = vld [vmem:[%s1 + $0x13c] sm:$0xf]
  %v228 = vld [vmem:[%s1 + $0x140] sm:$0xf]
  %v229 = vld [vmem:[%s1 + $0x144] sm:$0xf]
  %v230 = vld [vmem:[%s1 + $0x148] sm:$0xf]
  %v231 = vld [vmem:[%s1 + $0x14c] sm:$0xf]
  %v232 = vld [vmem:[%s1 + $0x150] sm:$0xf]
  %v233 = vld [vmem:[%s1 + $0x154] sm:$0xf]
  %v234 = vld [vmem:[%s1 + $0x158] sm:$0xf]
  %v235 = vld [vmem:[%s1 + $0x15c] sm:$0xf]
  %v236 = vld [vmem:[%s1 + $0x160] sm:$0xf]
  %v237 = vld [vmem:[%s1 + $0x164] sm:$0xf]
  %v238 = vld [vmem:[%s1 + $0x168] sm:$0xf]
  %v239 = vld [vmem:[%s1 + $0x16c] sm:$0xf]
  %v240 = vld [vmem:[%s1 + $0x170] sm:$0xf]
  %v241 = vld [vmem:[%s1 + $0x174] sm:$0xf]
  %v242 = vld [vmem:[%s1 + $0x178] sm:$0xf]
  %v243 = vld [vmem:[%s1 + $0x17c] sm:$0xf]
  %v244 = vld [vmem:[%s1 + $0x180] sm:$0xf]
  %v245 = vld [vmem:[%s1 + $0x184] sm:$0xf]
  %v246 = vld [vmem:[%s1 + $0x188] sm:$0xf]
  %v247 = vld [vmem:[%s1 + $0x18c] sm:$0xf]
  %v248 = vld [vmem:[%s1 + $0x190] sm:$0xf]
  %v249 = vld [vmem:[%s1 + $0x194] sm:$0xf]
  %v250 = vld [vmem:[%s1 + $0x198] sm:$0xf]
  %v251 = vld [vmem:[%s1 + $0x19c] sm:$0xf]
  %v252 = vld [vmem:[%s1 + $0x1a0] sm:$0xf]
  %v253 = vld [vmem:[%s1 + $0x1a4] sm:$0xf]
  %v254 = vld [vmem:[%s1 + $0x1a8] sm:$0xf]
  %v255 = vld [vmem:[%s1 + $0x1ac] sm:$0xf]
  %v256 = vld [vmem:[%s1 + $0x1b0] sm:$0xf]
  %v257 = vld [vmem:[%s1 + $0x1b4] sm:$0xf]
  %v258 = vld [vmem:[%s1 + $0x1b8] sm:$0xf]
  %v259 = vld [vmem:[%s1 + $0x1bc] sm:$0xf]
  %v260 = vld [vmem:[%s1 + $0x1c0] sm:$0xf]
  %v261 = vld [vmem:[%s1 + $0x1c4] sm:$0xf]
  %v262 = vld [vmem:[%s1 + $0x1c8] sm:$0xf]
  %v263 = vld [vmem:[%s1 + $0x1cc] sm:$0xf]
  %v264 = vld [vmem:[%s1 + $0x1d0] sm:$0xf]
  %v265 = vld [vmem:[%s1 + $0x1d4] sm:$0xf]
  %v266 = vld [vmem:[%s1 + $0x1d8] sm:$0xf]
  %v267 = vld [vmem:[%s1 + $0x1dc] sm:$0xf]
  %v268 = vld [vmem:[%s1 + $0x1e0] sm:$0xf]
  %v269 = vld [vmem:[%s1 + $0x1e4] sm:$0xf]
  %v270 = vld [vmem:[%s1 + $0x1e8] sm:$0xf]
  %v271 = vld [vmem:[%s1 + $0x1ec] sm:$0xf]
  %v272 = vld [vmem:[%s1 + $0x1f0] sm:$0xf]
  %v273 = vld [vmem:[%s1 + $0x1f4] sm:$0xf]
  %v274 = vld [vmem:[%s1 + $0x1f8] sm:$0xf]
  %v275 = vld [vmem:[%s1 + $0x1fc] sm:$0xf]
  %v276 = vld [vmem:[%s1 + $0x200] sm:$0xf]
  %v277 = vld [vmem:[%s1 + $0x204] sm:$0xf]
  %v278 = vld [vmem:[%s1 + $0x208] sm:$0xf]
  %v279 = vld [vmem:[%s1 + $0x20c] sm:$0xf]
  %v280 = vld [vmem:[%s1 + $0x210] sm:$0xf]
  %v281 = vld [vmem:[%s1 + $0x214] sm:$0xf]
  %v282 = vld [vmem:[%s1 + $0x218] sm:$0xf]
  %v283 = vld [vmem:[%s1 + $0x21c] sm:$0xf]
  %v284 = vld [vmem:[%s1 + $0x220] sm:$0xf]
  %v285 = vld [vmem:[%s1 + $0x224] sm:$0xf]
  %v286 = vld [vmem:[%s1 + $0x228] sm:$0xf]
  %v287 = vld [vmem:[%s1 + $0x22c] sm:$0xf]
  %v288 = vld [vmem:[%s1 + $0x230] sm:$0xf]
  %v289 = vld [vmem:[%s1 + $0x234] sm:$0xf]
  %v290 = vld [vmem:[%s1 + $0x238] sm:$0xf]
  %v291 = vld [vmem:[%s1 + $0x23c] sm:$0xf]
  %v292 = vld [vmem:[%s1 + $0x240] sm:$0xf]
  %v293 = vld [vmem:[%s1 + $0x244] sm:$0xf]
  %v294 = vld [vmem:[%s1 + $0x248] sm:$0xf]
  %v295 = vld [vmem:[%s1 + $0x24c] sm:$0xf]
  %v296 = vld [vmem:[%s1 + $0x250] sm:$0xf]
  %v297 = vld [vmem:[%s1 + $0x254] sm:$0xf]
  %v298 = vld [vmem:[%s1 + $0x258] sm:$0xf]
  %v299 = vld [vmem:[%s1 + $0x25c] sm:$0xf]
  %v300 = vld [vmem:[%s1 + $0x260] sm:$0xf]
  %v301 = vld [vmem:[%s1 + $0x264] sm:$0xf]
  %v302 = vld [vmem:[%s1 + $0x268] sm:$0xf]
  %v303 = vld [vmem:[%s1 + $0x26c] sm:$0xf]
  %v304 = vld [vmem:[%s1 + $0x270] sm:$0xf]
  %v305 = vld [vmem:[%s1 + $0x274] sm:$0xf]
  %v306 = vld [vmem:[%s1 + $0x278] sm:$0xf]
  %v307 = vld [vmem:[%s1 + $0x27c] sm:$0xf]
  %v308 = vld [vmem:[%s1 + $0x280] sm:$0xf]
  %v309 = vld [vmem:[%s1 + $0x284] sm:$0xf]
  %v310 = vld [vmem:[%s1 + $0x288] sm:$0xf]
  %v311 = vld [vmem:[%s1 + $0x28c] sm:$0xf]
  %v312 = vld [vmem:[%s1 + $0x290] sm:$0xf]
  %v313 = vld [vmem:[%s1 + $0x294] sm:$0xf]
  %v314 = vld [vmem:[%s1 + $0x298] sm:$0xf]
  %v315 = vld [vmem:[%s1 + $0x29c] sm:$0xf]
  %v316 = vld [vmem:[%s1 + $0x2a0] sm:$0xf]
  %v317 = vld [vmem:[%s1 + $0x2a4] sm:$0xf]
  %v318 = vld [vmem:[%s1 + $0x2a8] sm:$0xf]
  %v319 = vld [vmem:[%s1 + $0x2ac] sm:$0xf]
  %v320 = vld [vmem:[%s1 + $0x2b0] sm:$0xf]
  %v321 = vld [vmem:[%s1 + $0x2b4] sm:$0xf]
  %v322 = vld [vmem:[%s1 + $0x2b8] sm:$0xf]
  %v323 = vld [vmem:[%s1 + $0x2bc] sm:$0xf]
  %v324 = vld [vmem:[%s1 + $0x2c0] sm:$0xf]
  %v325 = vld [vmem:[%s1 + $0x2c4] sm:$0xf]
  %v326 = vld [vmem:[%s1 + $0x2c8] sm:$0xf]
  %v327 = vld [vmem:[%s1 + $0x2cc] sm:$0xf]
  %v328 = vld [vmem:[%s1 + $0x2d0] sm:$0xf]
  %v329 = vld [vmem:[%s1 + $0x2d4] sm:$0xf]
  %v330 = vld [vmem:[%s1 + $0x2d8] sm:$0xf]
  %v331 = vld [vmem:[%s1 + $0x2dc] sm:$0xf]
  %v332 = vld [vmem:[%s1 + $0x2e0] sm:$0xf]
  %v333 = vld [vmem:[%s1 + $0x2e4] sm:$0xf]
  %v334 = vld [vmem:[%s1 + $0x2e8] sm:$0xf]
  %v335 = vld [vmem:[%s1 + $0x2ec] sm:$0xf]
  %v336 = vld [vmem:[%s1 + $0x2f0] sm:$0xf]
  %v337 = vld [vmem:[%s1 + $0x2f4] sm:$0xf]
  %v338 = vld [vmem:[%s1 + $0x2f8] sm:$0xf]
  %v339 = vld [vmem:[%s1 + $0x2fc] sm:$0xf]
  %v340 = vld [vmem:[%s1 + $0x300] sm:$0xf]
  %v341 = vld [vmem:[%s1 + $0x304] sm:$0xf]
  %v342 = vld [vmem:[%s1 + $0x308] sm:$0xf]
  %v343 = vld [vmem:[%s1 + $0x30c] sm:$0xf]
  %v344 = vld [vmem:[%s1 + $0x310] sm:$0xf]
  %v345 = vld [vmem:[%s1 + $0x314] sm:$0xf]
  %v346 = vld [vmem:[%s1 + $0x318] sm:$0xf]
  %v347 = vld [vmem:[%s1 + $0x31c] sm:$0xf]
  %v348 = vld [vmem:[%s1 + $0x320] sm:$0xf]
  %v349 = vld [vmem:[%s1 + $0x324] sm:$0xf]
  %v350 = vld [vmem:[%s1 + $0x328] sm:$0xf]
  %v351 = vld [vmem:[%s1 + $0x32c] sm:$0xf]
  %v352 = vld [vmem:[%s1 + $0x330] sm:$0xf]
  %v353 = vld [vmem:[%s1 + $0x334] sm:$0xf]
  %v354 = vld [vmem:[%s1 + $0x338] sm:$0xf]
  %v355 = vld [vmem:[%s1 + $0x33c] sm:$0xf]
  %v356 = vld [vmem:[%s1 + $0x340] sm:$0xf]
  %v357 = vld [vmem:[%s1 + $0x344] sm:$0xf]
  %v358 = vld [vmem:[%s1 + $0x348] sm:$0xf]
  %v359 = vld [vmem:[%s1 + $0x34c] sm:$0xf]
  %v360 = vld [vmem:[%s1 + $0x350] sm:$0xf]
  %v361 = vld [vmem:[%s1 + $0x354] sm:$0xf]
  %v362 = vld [vmem:[%s1 + $0x358] sm:$0xf]
  %v363 = vld [vmem:[%s1 + $0x35c] sm:$0xf]
  %v364 = vld [vmem:[%s1 + $0x360] sm:$0xf]
  %v365 = vld [vmem:[%s1 + $0x364] sm:$0xf]
  %v366 = vld [vmem:[%s1 + $0x368] sm:$0xf]
  %v367 = vld [vmem:[%s1 + $0x36c] sm:$0xf]
  %v368 = vld [vmem:[%s1 + $0x370] sm:$0xf]
  %v369 = vld [vmem:[%s1 + $0x374] sm:$0xf]
  %v370 = vld [vmem:[%s1 + $0x378] sm:$0xf]
  %v371 = vld [vmem:[%s1 + $0x37c] sm:$0xf]
  %v372 = vld [vmem:[%s1 + $0x380] sm:$0xf]
  %v373 = vld [vmem:[%s1 + $0x384] sm:$0xf]
  %v374 = vld [vmem:[%s1 + $0x388] sm:$0xf]
  %v375 = vld [vmem:[%s1 + $0x38c] sm:$0xf]
  %v376 = vld [vmem:[%s1 + $0x390] sm:$0xf]
  %v377 = vld [vmem:[%s1 + $0x394] sm:$0xf]
  %v378 = vld [vmem:[%s1 + $0x398] sm:$0xf]
  %v379 = vld [vmem:[%s1 + $0x39c] sm:$0xf]
  %v380 = vld [vmem:[%s1 + $0x3a0] sm:$0xf]
  %v381 = vld [vmem:[%s1 + $0x3a4] sm:$0xf]
  %v382 = vld [vmem:[%s1 + $0x3a8] sm:$0xf]
  %v383 = vld [vmem:[%s1 + $0x3ac] sm:$0xf]
  %v384 = vld [vmem:[%s1 + $0x3b0] sm:$0xf]
  %v385 = vld [vmem:[%s1 + $0x3b4] sm:$0xf]
  %v386 = vld [vmem:[%s1 + $0x3b8] sm:$0xf]
  %v387 = vld [vmem:[%s1 + $0x3bc] sm:$0xf]
  %v388 = vld [vmem:[%s1 + $0x3c0] sm:$0xf]
  %v389 = vld [vmem:[%s1 + $0x3c4] sm:$0xf]
  %v390 = vld [vmem:[%s1 + $0x3c8] sm:$0xf]
  %v391 = vld [vmem:[%s1 + $0x3cc] sm:$0xf]
  %v392 = vld [vmem:[%s1 + $0x3d0] sm:$0xf]
  %v393 = vld [vmem:[%s1 + $0x3d4] sm:$0xf]
  %v394 = vld [vmem:[%s1 + $0x3d8] sm:$0xf]
  %v395 = vld [vmem:[%s1 + $0x3dc] sm:$0xf]
  %v396 = vld [vmem:[%s1 + $0x3e0] sm:$0xf]
  %v397 = vld [vmem:[%s1 + $0x3e4] sm:$0xf]
  %v398 = vld [vmem:[%s1 + $0x3e8] sm:$0xf]
  %v399 = vld [vmem:[%s1 + $0x3ec] sm:$0xf]
  %v400 = vld [vmem:[%s1 + $0x3f0] sm:$0xf]
  %v401 = vld [vmem:[%s1 + $0x3f4] sm:$0xf]
  %v402 = vld [vmem:[%s1 + $0x3f8] sm:$0xf]
  %v403 = vld [vmem:[%s1 + $0x3fc] sm:$0xf]
  %v532 = vunpack.c.l.b16 %v20
  %v533 = vunpack.c.h.b16 %v20
  %v534 = vunpack.c.l.b16 %v21
  %v535 = vunpack.c.h.b16 %v21
  %v536 = vunpack.c.l.b16 %v22
  %v537 = vunpack.c.h.b16 %v22
  %v538 = vunpack.c.l.b16 %v23
  %v539 = vunpack.c.h.b16 %v23
  %v540 = vunpack.c.l.b16 %v24
  %v541 = vunpack.c.h.b16 %v24
  %v542 = vunpack.c.l.b16 %v25
  %v543 = vunpack.c.h.b16 %v25
  %v544 = vunpack.c.l.b16 %v26
  %v545 = vunpack.c.h.b16 %v26
  %v546 = vunpack.c.l.b16 %v27
  %v547 = vunpack.c.h.b16 %v27
  %v548 = vunpack.c.l.b16 %v28
  %v549 = vunpack.c.h.b16 %v28
  %v550 = vunpack.c.l.b16 %v29
  %v551 = vunpack.c.h.b16 %v29
  %v552 = vunpack.c.l.b16 %v30
  %v553 = vunpack.c.h.b16 %v30
  %v554 = vunpack.c.l.b16 %v31
  %v555 = vunpack.c.h.b16 %v31
  %v556 = vunpack.c.l.b16 %v32
  %v557 = vunpack.c.h.b16 %v32
  %v558 = vunpack.c.l.b16 %v33
  %v559 = vunpack.c.h.b16 %v33
  %v560 = vunpack.c.l.b16 %v34
  %v561 = vunpack.c.h.b16 %v34
  %v562 = vunpack.c.l.b16 %v35
  %v563 = vunpack.c.h.b16 %v35
  %v564 = vunpack.c.l.b16 %v36
  %v565 = vunpack.c.h.b16 %v36
  %v566 = vunpack.c.l.b16 %v37
  %v567 = vunpack.c.h.b16 %v37
  %v568 = vunpack.c.l.b16 %v38
  %v569 = vunpack.c.h.b16 %v38
  %v570 = vunpack.c.l.b16 %v39
  %v571 = vunpack.c.h.b16 %v39
  %v572 = vunpack.c.l.b16 %v40
  %v573 = vunpack.c.h.b16 %v40
  %v574 = vunpack.c.l.b16 %v41
  %v575 = vunpack.c.h.b16 %v41
  %v576 = vunpack.c.l.b16 %v42
  %v577 = vunpack.c.h.b16 %v42
  %v578 = vunpack.c.l.b16 %v43
  %v579 = vunpack.c.h.b16 %v43
  %v580 = vunpack.c.l.b16 %v44
  %v581 = vunpack.c.h.b16 %v44
  %v582 = vunpack.c.l.b16 %v45
  %v583 = vunpack.c.h.b16 %v45
  %v584 = vunpack.c.l.b16 %v46
  %v585 = vunpack.c.h.b16 %v46
  %v586 = vunpack.c.l.b16 %v47
  %v587 = vunpack.c.h.b16 %v47
  %v588 = vunpack.c.l.b16 %v48
  %v589 = vunpack.c.h.b16 %v48
  %v590 = vunpack.c.l.b16 %v49
  %v591 = vunpack.c.h.b16 %v49
  %v592 = vunpack.c.l.b16 %v50
  %v593 = vunpack.c.h.b16 %v50
  %v594 = vunpack.c.l.b16 %v51
  %v595 = vunpack.c.h.b16 %v51
  %v596 = vunpack.c.l.b16 %v52
  %v597 = vunpack.c.h.b16 %v52
  %v598 = vunpack.c.l.b16 %v53
  %v599 = vunpack.c.h.b16 %v53
  %v600 = vunpack.c.l.b16 %v54
  %v601 = vunpack.c.h.b16 %v54
  %v602 = vunpack.c.l.b16 %v55
  %v603 = vunpack.c.h.b16 %v55
  %v604 = vunpack.c.l.b16 %v56
  %v605 = vunpack.c.h.b16 %v56
  %v606 = vunpack.c.l.b16 %v57
  %v607 = vunpack.c.h.b16 %v57
  %v608 = vunpack.c.l.b16 %v58
  %v609 = vunpack.c.h.b16 %v58
  %v610 = vunpack.c.l.b16 %v59
  %v611 = vunpack.c.h.b16 %v59
  %v612 = vunpack.c.l.b16 %v60
  %v613 = vunpack.c.h.b16 %v60
  %v614 = vunpack.c.l.b16 %v61
  %v615 = vunpack.c.h.b16 %v61
  %v616 = vunpack.c.l.b16 %v62
  %v617 = vunpack.c.h.b16 %v62
  %v618 = vunpack.c.l.b16 %v63
  %v619 = vunpack.c.h.b16 %v63
  %v620 = vunpack.c.l.b16 %v64
  %v621 = vunpack.c.h.b16 %v64
  %v622 = vunpack.c.l.b16 %v65
  %v623 = vunpack.c.h.b16 %v65
  %v624 = vunpack.c.l.b16 %v66
  %v625 = vunpack.c.h.b16 %v66
  %v626 = vunpack.c.l.b16 %v67
  %v627 = vunpack.c.h.b16 %v67
  %v628 = vunpack.c.l.b16 %v68
  %v629 = vunpack.c.h.b16 %v68
  %v630 = vunpack.c.l.b16 %v69
  %v631 = vunpack.c.h.b16 %v69
  %v632 = vunpack.c.l.b16 %v70
  %v633 = vunpack.c.h.b16 %v70
  %v634 = vunpack.c.l.b16 %v71
  %v635 = vunpack.c.h.b16 %v71
  %v636 = vunpack.c.l.b16 %v72
  %v637 = vunpack.c.h.b16 %v72
  %v638 = vunpack.c.l.b16 %v73
  %v639 = vunpack.c.h.b16 %v73
  %v640 = vunpack.c.l.b16 %v74
  %v641 = vunpack.c.h.b16 %v74
  %v642 = vunpack.c.l.b16 %v75
  %v643 = vunpack.c.h.b16 %v75
  %v644 = vunpack.c.l.b16 %v76
  %v645 = vunpack.c.h.b16 %v76
  %v646 = vunpack.c.l.b16 %v77
  %v647 = vunpack.c.h.b16 %v77
  %v648 = vunpack.c.l.b16 %v78
  %v649 = vunpack.c.h.b16 %v78
  %v650 = vunpack.c.l.b16 %v79
  %v651 = vunpack.c.h.b16 %v79
  %v652 = vunpack.c.l.b16 %v80
  %v653 = vunpack.c.h.b16 %v80
  %v654 = vunpack.c.l.b16 %v81
  %v655 = vunpack.c.h.b16 %v81
  %v656 = vunpack.c.l.b16 %v82
  %v657 = vunpack.c.h.b16 %v82
  %v658 = vunpack.c.l.b16 %v83
  %v659 = vunpack.c.h.b16 %v83
  %v660 = vunpack.c.l.b16 %v84
  %v661 = vunpack.c.h.b16 %v84
  %v662 = vunpack.c.l.b16 %v85
  %v663 = vunpack.c.h.b16 %v85
  %v664 = vunpack.c.l.b16 %v86
  %v665 = vunpack.c.h.b16 %v86
  %v666 = vunpack.c.l.b16 %v87
  %v667 = vunpack.c.h.b16 %v87
  %v668 = vunpack.c.l.b16 %v88
  %v669 = vunpack.c.h.b16 %v88
  %v670 = vunpack.c.l.b16 %v89
  %v671 = vunpack.c.h.b16 %v89
  %v672 = vunpack.c.l.b16 %v90
  %v673 = vunpack.c.h.b16 %v90
  %v674 = vunpack.c.l.b16 %v91
  %v675 = vunpack.c.h.b16 %v91
  %v676 = vunpack.c.l.b16 %v92
  %v677 = vunpack.c.h.b16 %v92
  %v678 = vunpack.c.l.b16 %v93
  %v679 = vunpack.c.h.b16 %v93
  %v680 = vunpack.c.l.b16 %v94
  %v681 = vunpack.c.h.b16 %v94
  %v682 = vunpack.c.l.b16 %v95
  %v683 = vunpack.c.h.b16 %v95
  %v684 = vunpack.c.l.b16 %v96
  %v685 = vunpack.c.h.b16 %v96
  %v686 = vunpack.c.l.b16 %v97
  %v687 = vunpack.c.h.b16 %v97
  %v688 = vunpack.c.l.b16 %v98
  %v689 = vunpack.c.h.b16 %v98
  %v690 = vunpack.c.l.b16 %v99
  %v691 = vunpack.c.h.b16 %v99
  %v692 = vunpack.c.l.b16 %v100
  %v693 = vunpack.c.h.b16 %v100
  %v694 = vunpack.c.l.b16 %v101
  %v695 = vunpack.c.h.b16 %v101
  %v696 = vunpack.c.l.b16 %v102
  %v697 = vunpack.c.h.b16 %v102
  %v698 = vunpack.c.l.b16 %v103
  %v699 = vunpack.c.h.b16 %v103
  %v700 = vunpack.c.l.b16 %v104
  %v701 = vunpack.c.h.b16 %v104
  %v702 = vunpack.c.l.b16 %v105
  %v703 = vunpack.c.h.b16 %v105
  %v704 = vunpack.c.l.b16 %v106
  %v705 = vunpack.c.h.b16 %v106
  %v706 = vunpack.c.l.b16 %v107
  %v707 = vunpack.c.h.b16 %v107
  %v708 = vunpack.c.l.b16 %v108
  %v709 = vunpack.c.h.b16 %v108
  %v710 = vunpack.c.l.b16 %v109
  %v711 = vunpack.c.h.b16 %v109
  %v712 = vunpack.c.l.b16 %v110
  %v713 = vunpack.c.h.b16 %v110
  %v714 = vunpack.c.l.b16 %v111
  %v715 = vunpack.c.h.b16 %v111
  %v716 = vunpack.c.l.b16 %v112
  %v717 = vunpack.c.h.b16 %v112
  %v718 = vunpack.c.l.b16 %v113
  %v719 = vunpack.c.h.b16 %v113
  %v720 = vunpack.c.l.b16 %v114
  %v721 = vunpack.c.h.b16 %v114
  %v722 = vunpack.c.l.b16 %v115
  %v723 = vunpack.c.h.b16 %v115
  %v724 = vunpack.c.l.b16 %v116
  %v725 = vunpack.c.h.b16 %v116
  %v726 = vunpack.c.l.b16 %v117
  %v727 = vunpack.c.h.b16 %v117
  %v728 = vunpack.c.l.b16 %v118
  %v729 = vunpack.c.h.b16 %v118
  %v730 = vunpack.c.l.b16 %v119
  %v731 = vunpack.c.h.b16 %v119
  %v732 = vunpack.c.l.b16 %v120
  %v733 = vunpack.c.h.b16 %v120
  %v734 = vunpack.c.l.b16 %v121
  %v735 = vunpack.c.h.b16 %v121
  %v736 = vunpack.c.l.b16 %v122
  %v737 = vunpack.c.h.b16 %v122
  %v738 = vunpack.c.l.b16 %v123
  %v739 = vunpack.c.h.b16 %v123
  %v740 = vunpack.c.l.b16 %v124
  %v741 = vunpack.c.h.b16 %v124
  %v742 = vunpack.c.l.b16 %v125
  %v743 = vunpack.c.h.b16 %v125
  %v744 = vunpack.c.l.b16 %v126
  %v745 = vunpack.c.h.b16 %v126
  %v746 = vunpack.c.l.b16 %v127
  %v747 = vunpack.c.h.b16 %v127
  %v748 = vunpack.c.l.b16 %v128
  %v749 = vunpack.c.h.b16 %v128
  %v750 = vunpack.c.l.b16 %v129
  %v751 = vunpack.c.h.b16 %v129
  %v752 = vunpack.c.l.b16 %v130
  %v753 = vunpack.c.h.b16 %v130
  %v754 = vunpack.c.l.b16 %v131
  %v755 = vunpack.c.h.b16 %v131
  %v756 = vunpack.c.l.b16 %v132
  %v757 = vunpack.c.h.b16 %v132
  %v758 = vunpack.c.l.b16 %v133
  %v759 = vunpack.c.h.b16 %v133
  %v760 = vunpack.c.l.b16 %v134
  %v761 = vunpack.c.h.b16 %v134
  %v762 = vunpack.c.l.b16 %v135
  %v763 = vunpack.c.h.b16 %v135
  %v764 = vunpack.c.l.b16 %v136
  %v765 = vunpack.c.h.b16 %v136
  %v766 = vunpack.c.l.b16 %v137
  %v767 = vunpack.c.h.b16 %v137
  %v768 = vunpack.c.l.b16 %v138
  %v769 = vunpack.c.h.b16 %v138
  %v770 = vunpack.c.l.b16 %v139
  %v771 = vunpack.c.h.b16 %v139
  %v772 = vunpack.c.l.b16 %v140
  %v773 = vunpack.c.h.b16 %v140
  %v774 = vunpack.c.l.b16 %v141
  %v775 = vunpack.c.h.b16 %v141
  %v776 = vunpack.c.l.b16 %v142
  %v777 = vunpack.c.h.b16 %v142
  %v778 = vunpack.c.l.b16 %v143
  %v779 = vunpack.c.h.b16 %v143
  %v780 = vunpack.c.l.b16 %v144
  %v781 = vunpack.c.h.b16 %v144
  %v782 = vunpack.c.l.b16 %v145
  %v783 = vunpack.c.h.b16 %v145
  %v784 = vunpack.c.l.b16 %v146
  %v785 = vunpack.c.h.b16 %v146
  %v786 = vunpack.c.l.b16 %v147
  %v787 = vunpack.c.h.b16 %v147
  %v788 = vpack.c.b16 %v548, %v532
  %v789 = vpack.c.b16 %v549, %v533
  %v790 = vpack.c.b16 %v550, %v534
  %v791 = vpack.c.b16 %v551, %v535
  %v792 = vpack.c.b16 %v552, %v536
  %v793 = vpack.c.b16 %v553, %v537
  %v794 = vpack.c.b16 %v554, %v538
  %v795 = vpack.c.b16 %v555, %v539
  %v796 = vpack.c.b16 %v556, %v540
  %v797 = vpack.c.b16 %v557, %v541
  %v798 = vpack.c.b16 %v558, %v542
  %v799 = vpack.c.b16 %v559, %v543
  %v800 = vpack.c.b16 %v560, %v544
  %v801 = vpack.c.b16 %v561, %v545
  %v802 = vpack.c.b16 %v562, %v546
  %v803 = vpack.c.b16 %v563, %v547
  %v804 = vpack.c.b16 %v580, %v564
  %v805 = vpack.c.b16 %v581, %v565
  %v806 = vpack.c.b16 %v582, %v566
  %v807 = vpack.c.b16 %v583, %v567
  %v808 = vpack.c.b16 %v584, %v568
  %v809 = vpack.c.b16 %v585, %v569
  %v810 = vpack.c.b16 %v586, %v570
  %v811 = vpack.c.b16 %v587, %v571
  %v812 = vpack.c.b16 %v588, %v572
  %v813 = vpack.c.b16 %v589, %v573
  %v814 = vpack.c.b16 %v590, %v574
  %v815 = vpack.c.b16 %v591, %v575
  %v816 = vpack.c.b16 %v592, %v576
  %v817 = vpack.c.b16 %v593, %v577
  %v818 = vpack.c.b16 %v594, %v578
  %v819 = vpack.c.b16 %v595, %v579
  %v820 = vpack.c.b16 %v612, %v596
  %v821 = vpack.c.b16 %v613, %v597
  %v822 = vpack.c.b16 %v614, %v598
  %v823 = vpack.c.b16 %v615, %v599
  %v824 = vpack.c.b16 %v616, %v600
  %v825 = vpack.c.b16 %v617, %v601
  %v826 = vpack.c.b16 %v618, %v602
  %v827 = vpack.c.b16 %v619, %v603
  %v828 = vpack.c.b16 %v620, %v604
  %v829 = vpack.c.b16 %v621, %v605
  %v830 = vpack.c.b16 %v622, %v606
  %v831 = vpack.c.b16 %v623, %v607
  %v832 = vpack.c.b16 %v624, %v608
  %v833 = vpack.c.b16 %v625, %v609
  %v834 = vpack.c.b16 %v626, %v610
  %v835 = vpack.c.b16 %v627, %v611
  %v836 = vpack.c.b16 %v644, %v628
  %v837 = vpack.c.b16 %v645, %v629
  %v838 = vpack.c.b16 %v646, %v630
  %v839 = vpack.c.b16 %v647, %v631
  %v840 = vpack.c.b16 %v648, %v632
  %v841 = vpack.c.b16 %v649, %v633
  %v842 = vpack.c.b16 %v650, %v634
  %v843 = vpack.c.b16 %v651, %v635
  %v844 = vpack.c.b16 %v652, %v636
  %v845 = vpack.c.b16 %v653, %v637
  %v846 = vpack.c.b16 %v654, %v638
  %v847 = vpack.c.b16 %v655, %v639
  %v848 = vpack.c.b16 %v656, %v640
  %v849 = vpack.c.b16 %v657, %v641
  %v850 = vpack.c.b16 %v658, %v642
  %v851 = vpack.c.b16 %v659, %v643
  %v852 = vpack.c.b16 %v676, %v660
  %v853 = vpack.c.b16 %v677, %v661
  %v854 = vpack.c.b16 %v678, %v662
  %v855 = vpack.c.b16 %v679, %v663
  %v856 = vpack.c.b16 %v680, %v664
  %v857 = vpack.c.b16 %v681, %v665
  %v858 = vpack.c.b16 %v682, %v666
  %v859 = vpack.c.b16 %v683, %v667
  %v860 = vpack.c.b16 %v684, %v668
  %v861 = vpack.c.b16 %v685, %v669
  %v862 = vpack.c.b16 %v686, %v670
  %v863 = vpack.c.b16 %v687, %v671
  %v864 = vpack.c.b16 %v688, %v672
  %v865 = vpack.c.b16 %v689, %v673
  %v866 = vpack.c.b16 %v690, %v674
  %v867 = vpack.c.b16 %v691, %v675
  %v868 = vpack.c.b16 %v708, %v692
  %v869 = vpack.c.b16 %v709, %v693
  %v870 = vpack.c.b16 %v710, %v694
  %v871 = vpack.c.b16 %v711, %v695
  %v872 = vpack.c.b16 %v712, %v696
  %v873 = vpack.c.b16 %v713, %v697
  %v874 = vpack.c.b16 %v714, %v698
  %v875 = vpack.c.b16 %v715, %v699
  %v876 = vpack.c.b16 %v716, %v700
  %v877 = vpack.c.b16 %v717, %v701
  %v878 = vpack.c.b16 %v718, %v702
  %v879 = vpack.c.b16 %v719, %v703
  %v880 = vpack.c.b16 %v720, %v704
  %v881 = vpack.c.b16 %v721, %v705
  %v882 = vpack.c.b16 %v722, %v706
  %v883 = vpack.c.b16 %v723, %v707
  %v884 = vpack.c.b16 %v740, %v724
  %v885 = vpack.c.b16 %v741, %v725
  %v886 = vpack.c.b16 %v742, %v726
  %v887 = vpack.c.b16 %v743, %v727
  %v888 = vpack.c.b16 %v744, %v728
  %v889 = vpack.c.b16 %v745, %v729
  %v890 = vpack.c.b16 %v746, %v730
  %v891 = vpack.c.b16 %v747, %v731
  %v892 = vpack.c.b16 %v748, %v732
  %v893 = vpack.c.b16 %v749, %v733
  %v894 = vpack.c.b16 %v750, %v734
  %v895 = vpack.c.b16 %v751, %v735
  %v896 = vpack.c.b16 %v752, %v736
  %v897 = vpack.c.b16 %v753, %v737
  %v898 = vpack.c.b16 %v754, %v738
  %v899 = vpack.c.b16 %v755, %v739
  %v900 = vpack.c.b16 %v772, %v756
  %v901 = vpack.c.b16 %v773, %v757
  %v902 = vpack.c.b16 %v774, %v758
  %v903 = vpack.c.b16 %v775, %v759
  %v904 = vpack.c.b16 %v776, %v760
  %v905 = vpack.c.b16 %v777, %v761
  %v906 = vpack.c.b16 %v778, %v762
  %v907 = vpack.c.b16 %v779, %v763
  %v908 = vpack.c.b16 %v780, %v764
  %v909 = vpack.c.b16 %v781, %v765
  %v910 = vpack.c.b16 %v782, %v766
  %v911 = vpack.c.b16 %v783, %v767
  %v912 = vpack.c.b16 %v784, %v768
  %v913 = vpack.c.b16 %v785, %v769
  %v914 = vpack.c.b16 %v786, %v770
  %v915 = vpack.c.b16 %v787, %v771
  %v1300 = vunpack.c.l.b16 %v148
  %v1301 = vunpack.c.l.b16 %v149
  %v1302 = vunpack.c.l.b16 %v150
  %v1303 = vunpack.c.l.b16 %v151
  %v1304 = vunpack.c.l.b16 %v152
  %v1305 = vunpack.c.l.b16 %v153
  %v1306 = vunpack.c.l.b16 %v154
  %v1307 = vunpack.c.l.b16 %v155
  %v1308 = vunpack.c.l.b16 %v156
  %v1309 = vunpack.c.l.b16 %v157
  %v1310 = vunpack.c.l.b16 %v158
  %v1311 = vunpack.c.l.b16 %v159
  %v1312 = vunpack.c.l.b16 %v160
  %v1313 = vunpack.c.l.b16 %v161
  %v1314 = vunpack.c.l.b16 %v162
  %v1315 = vunpack.c.l.b16 %v163
  %v1316 = vunpack.c.l.b16 %v164
  %v1317 = vunpack.c.l.b16 %v165
  %v1318 = vunpack.c.l.b16 %v166
  %v1319 = vunpack.c.l.b16 %v167
  %v1320 = vunpack.c.l.b16 %v168
  %v1321 = vunpack.c.l.b16 %v169
  %v1322 = vunpack.c.l.b16 %v170
  %v1323 = vunpack.c.l.b16 %v171
  %v1324 = vunpack.c.l.b16 %v172
  %v1325 = vunpack.c.l.b16 %v173
  %v1326 = vunpack.c.l.b16 %v174
  %v1327 = vunpack.c.l.b16 %v175
  %v1328 = vunpack.c.l.b16 %v176
  %v1329 = vunpack.c.l.b16 %v177
  %v1330 = vunpack.c.l.b16 %v178
  %v1331 = vunpack.c.l.b16 %v179
  %v1332 = vunpack.c.l.b16 %v180
  %v1333 = vunpack.c.l.b16 %v181
  %v1334 = vunpack.c.l.b16 %v182
  %v1335 = vunpack.c.l.b16 %v183
  %v1336 = vunpack.c.l.b16 %v184
  %v1337 = vunpack.c.l.b16 %v185
  %v1338 = vunpack.c.l.b16 %v186
  %v1339 = vunpack.c.l.b16 %v187
  %v1340 = vunpack.c.l.b16 %v188
  %v1341 = vunpack.c.l.b16 %v189
  %v1342 = vunpack.c.l.b16 %v190
  %v1343 = vunpack.c.l.b16 %v191
  %v1344 = vunpack.c.l.b16 %v192
  %v1345 = vunpack.c.l.b16 %v193
  %v1346 = vunpack.c.l.b16 %v194
  %v1347 = vunpack.c.l.b16 %v195
  %v1348 = vunpack.c.l.b16 %v196
  %v1349 = vunpack.c.l.b16 %v197
  %v1350 = vunpack.c.l.b16 %v198
  %v1351 = vunpack.c.l.b16 %v199
  %v1352 = vunpack.c.l.b16 %v200
  %v1353 = vunpack.c.l.b16 %v201
  %v1354 = vunpack.c.l.b16 %v202
  %v1355 = vunpack.c.l.b16 %v203
  %v1356 = vunpack.c.l.b16 %v204
  %v1357 = vunpack.c.l.b16 %v205
  %v1358 = vunpack.c.l.b16 %v206
  %v1359 = vunpack.c.l.b16 %v207
  %v1360 = vunpack.c.l.b16 %v208
  %v1361 = vunpack.c.l.b16 %v209
  %v1362 = vunpack.c.l.b16 %v210
  %v1363 = vunpack.c.l.b16 %v211
  %v1364 = vunpack.c.l.b16 %v212
  %v1365 = vunpack.c.l.b16 %v213
  %v1366 = vunpack.c.l.b16 %v214
  %v1367 = vunpack.c.l.b16 %v215
  %v1368 = vunpack.c.l.b16 %v216
  %v1369 = vunpack.c.l.b16 %v217
  %v1370 = vunpack.c.l.b16 %v218
  %v1371 = vunpack.c.l.b16 %v219
  %v1372 = vunpack.c.l.b16 %v220
  %v1373 = vunpack.c.l.b16 %v221
  %v1374 = vunpack.c.l.b16 %v222
  %v1375 = vunpack.c.l.b16 %v223
  %v1376 = vunpack.c.l.b16 %v224
  %v1377 = vunpack.c.l.b16 %v225
  %v1378 = vunpack.c.l.b16 %v226
  %v1379 = vunpack.c.l.b16 %v227
  %v1380 = vunpack.c.l.b16 %v228
  %v1381 = vunpack.c.l.b16 %v229
  %v1382 = vunpack.c.l.b16 %v230
  %v1383 = vunpack.c.l.b16 %v231
  %v1384 = vunpack.c.l.b16 %v232
  %v1385 = vunpack.c.l.b16 %v233
  %v1386 = vunpack.c.l.b16 %v234
  %v1387 = vunpack.c.l.b16 %v235
  %v1388 = vunpack.c.l.b16 %v236
  %v1389 = vunpack.c.l.b16 %v237
  %v1390 = vunpack.c.l.b16 %v238
  %v1391 = vunpack.c.l.b16 %v239
  %v1392 = vunpack.c.l.b16 %v240
  %v1393 = vunpack.c.l.b16 %v241
  %v1394 = vunpack.c.l.b16 %v242
  %v1395 = vunpack.c.l.b16 %v243
  %v1396 = vunpack.c.l.b16 %v244
  %v1397 = vunpack.c.l.b16 %v245
  %v1398 = vunpack.c.l.b16 %v246
  %v1399 = vunpack.c.l.b16 %v247
  %v1400 = vunpack.c.l.b16 %v248
  %v1401 = vunpack.c.l.b16 %v249
  %v1402 = vunpack.c.l.b16 %v250
  %v1403 = vunpack.c.l.b16 %v251
  %v1404 = vunpack.c.l.b16 %v252
  %v1405 = vunpack.c.l.b16 %v253
  %v1406 = vunpack.c.l.b16 %v254
  %v1407 = vunpack.c.l.b16 %v255
  %v1408 = vunpack.c.l.b16 %v256
  %v1409 = vunpack.c.l.b16 %v257
  %v1410 = vunpack.c.l.b16 %v258
  %v1411 = vunpack.c.l.b16 %v259
  %v1412 = vunpack.c.l.b16 %v260
  %v1413 = vunpack.c.l.b16 %v261
  %v1414 = vunpack.c.l.b16 %v262
  %v1415 = vunpack.c.l.b16 %v263
  %v1416 = vunpack.c.l.b16 %v264
  %v1417 = vunpack.c.l.b16 %v265
  %v1418 = vunpack.c.l.b16 %v266
  %v1419 = vunpack.c.l.b16 %v267
  %v1420 = vunpack.c.l.b16 %v268
  %v1421 = vunpack.c.l.b16 %v269
  %v1422 = vunpack.c.l.b16 %v270
  %v1423 = vunpack.c.l.b16 %v271
  %v1424 = vunpack.c.l.b16 %v272
  %v1425 = vunpack.c.l.b16 %v273
  %v1426 = vunpack.c.l.b16 %v274
  %v1427 = vunpack.c.l.b16 %v275
  %v1428 = vunpack.c.l.b16 %v276
  %v1429 = vunpack.c.l.b16 %v277
  %v1430 = vunpack.c.l.b16 %v278
  %v1431 = vunpack.c.l.b16 %v279
  %v1432 = vunpack.c.l.b16 %v280
  %v1433 = vunpack.c.l.b16 %v281
  %v1434 = vunpack.c.l.b16 %v282
  %v1435 = vunpack.c.l.b16 %v283
  %v1436 = vunpack.c.l.b16 %v284
  %v1437 = vunpack.c.l.b16 %v285
  %v1438 = vunpack.c.l.b16 %v286
  %v1439 = vunpack.c.l.b16 %v287
  %v1440 = vunpack.c.l.b16 %v288
  %v1441 = vunpack.c.l.b16 %v289
  %v1442 = vunpack.c.l.b16 %v290
  %v1443 = vunpack.c.l.b16 %v291
  %v1444 = vunpack.c.l.b16 %v292
  %v1445 = vunpack.c.l.b16 %v293
  %v1446 = vunpack.c.l.b16 %v294
  %v1447 = vunpack.c.l.b16 %v295
  %v1448 = vunpack.c.l.b16 %v296
  %v1449 = vunpack.c.l.b16 %v297
  %v1450 = vunpack.c.l.b16 %v298
  %v1451 = vunpack.c.l.b16 %v299
  %v1452 = vunpack.c.l.b16 %v300
  %v1453 = vunpack.c.l.b16 %v301
  %v1454 = vunpack.c.l.b16 %v302
  %v1455 = vunpack.c.l.b16 %v303
  %v1456 = vunpack.c.l.b16 %v304
  %v1457 = vunpack.c.l.b16 %v305
  %v1458 = vunpack.c.l.b16 %v306
  %v1459 = vunpack.c.l.b16 %v307
  %v1460 = vunpack.c.l.b16 %v308
  %v1461 = vunpack.c.l.b16 %v309
  %v1462 = vunpack.c.l.b16 %v310
  %v1463 = vunpack.c.l.b16 %v311
  %v1464 = vunpack.c.l.b16 %v312
  %v1465 = vunpack.c.l.b16 %v313
  %v1466 = vunpack.c.l.b16 %v314
  %v1467 = vunpack.c.l.b16 %v315
  %v1468 = vunpack.c.l.b16 %v316
  %v1469 = vunpack.c.l.b16 %v317
  %v1470 = vunpack.c.l.b16 %v318
  %v1471 = vunpack.c.l.b16 %v319
  %v1472 = vunpack.c.l.b16 %v320
  %v1473 = vunpack.c.l.b16 %v321
  %v1474 = vunpack.c.l.b16 %v322
  %v1475 = vunpack.c.l.b16 %v323
  %v1476 = vunpack.c.l.b16 %v324
  %v1477 = vunpack.c.l.b16 %v325
  %v1478 = vunpack.c.l.b16 %v326
  %v1479 = vunpack.c.l.b16 %v327
  %v1480 = vunpack.c.l.b16 %v328
  %v1481 = vunpack.c.l.b16 %v329
  %v1482 = vunpack.c.l.b16 %v330
  %v1483 = vunpack.c.l.b16 %v331
  %v1484 = vunpack.c.l.b16 %v332
  %v1485 = vunpack.c.l.b16 %v333
  %v1486 = vunpack.c.l.b16 %v334
  %v1487 = vunpack.c.l.b16 %v335
  %v1488 = vunpack.c.l.b16 %v336
  %v1489 = vunpack.c.l.b16 %v337
  %v1490 = vunpack.c.l.b16 %v338
  %v1491 = vunpack.c.l.b16 %v339
  %v1492 = vunpack.c.l.b16 %v340
  %v1493 = vunpack.c.l.b16 %v341
  %v1494 = vunpack.c.l.b16 %v342
  %v1495 = vunpack.c.l.b16 %v343
  %v1496 = vunpack.c.l.b16 %v344
  %v1497 = vunpack.c.l.b16 %v345
  %v1498 = vunpack.c.l.b16 %v346
  %v1499 = vunpack.c.l.b16 %v347
  %v1500 = vunpack.c.l.b16 %v348
  %v1501 = vunpack.c.l.b16 %v349
  %v1502 = vunpack.c.l.b16 %v350
  %v1503 = vunpack.c.l.b16 %v351
  %v1504 = vunpack.c.l.b16 %v352
  %v1505 = vunpack.c.l.b16 %v353
  %v1506 = vunpack.c.l.b16 %v354
  %v1507 = vunpack.c.l.b16 %v355
  %v1508 = vunpack.c.l.b16 %v356
  %v1509 = vunpack.c.l.b16 %v357
  %v1510 = vunpack.c.l.b16 %v358
  %v1511 = vunpack.c.l.b16 %v359
  %v1512 = vunpack.c.l.b16 %v360
  %v1513 = vunpack.c.l.b16 %v361
  %v1514 = vunpack.c.l.b16 %v362
  %v1515 = vunpack.c.l.b16 %v363
  %v1516 = vunpack.c.l.b16 %v364
  %v1517 = vunpack.c.l.b16 %v365
  %v1518 = vunpack.c.l.b16 %v366
  %v1519 = vunpack.c.l.b16 %v367
  %v1520 = vunpack.c.l.b16 %v368
  %v1521 = vunpack.c.l.b16 %v369
  %v1522 = vunpack.c.l.b16 %v370
  %v1523 = vunpack.c.l.b16 %v371
  %v1524 = vunpack.c.l.b16 %v372
  %v1525 = vunpack.c.l.b16 %v373
  %v1526 = vunpack.c.l.b16 %v374
  %v1527 = vunpack.c.l.b16 %v375
  %v1528 = vunpack.c.l.b16 %v376
  %v1529 = vunpack.c.l.b16 %v377
  %v1530 = vunpack.c.l.b16 %v378
  %v1531 = vunpack.c.l.b16 %v379
  %v1532 = vunpack.c.l.b16 %v380
  %v1533 = vunpack.c.l.b16 %v381
  %v1534 = vunpack.c.l.b16 %v382
  %v1535 = vunpack.c.l.b16 %v383
  %v1536 = vunpack.c.l.b16 %v384
  %v1537 = vunpack.c.l.b16 %v385
  %v1538 = vunpack.c.l.b16 %v386
  %v1539 = vunpack.c.l.b16 %v387
  %v1540 = vunpack.c.l.b16 %v388
  %v1541 = vunpack.c.l.b16 %v389
  %v1542 = vunpack.c.l.b16 %v390
  %v1543 = vunpack.c.l.b16 %v391
  %v1544 = vunpack.c.l.b16 %v392
  %v1545 = vunpack.c.l.b16 %v393
  %v1546 = vunpack.c.l.b16 %v394
  %v1547 = vunpack.c.l.b16 %v395
  %v1548 = vunpack.c.l.b16 %v396
  %v1549 = vunpack.c.l.b16 %v397
  %v1550 = vunpack.c.l.b16 %v398
  %v1551 = vunpack.c.l.b16 %v399
  %v1552 = vunpack.c.l.b16 %v400
  %v1553 = vunpack.c.l.b16 %v401
  %v1554 = vunpack.c.l.b16 %v402
  %v1555 = vunpack.c.l.b16 %v403
  %v1556 = vpack.c.b16 %v1301, %v1300
  %v1557 = vpack.c.b16 %v1303, %v1302
  %v1558 = vpack.c.b16 %v1305, %v1304
  %v1559 = vpack.c.b16 %v1307, %v1306
  %v1560 = vpack.c.b16 %v1309, %v1308
  %v1561 = vpack.c.b16 %v1311, %v1310
  %v1562 = vpack.c.b16 %v1313, %v1312
  %v1563 = vpack.c.b16 %v1315, %v1314
  %v1564 = vpack.c.b16 %v1317, %v1316
  %v1565 = vpack.c.b16 %v1319, %v1318
  %v1566 = vpack.c.b16 %v1321, %v1320
  %v1567 = vpack.c.b16 %v1323, %v1322
  %v1568 = vpack.c.b16 %v1325, %v1324
  %v1569 = vpack.c.b16 %v1327, %v1326
  %v1570 = vpack.c.b16 %v1329, %v1328
  %v1571 = vpack.c.b16 %v1331, %v1330
  %v1572 = vpack.c.b16 %v1333, %v1332
  %v1573 = vpack.c.b16 %v1335, %v1334
  %v1574 = vpack.c.b16 %v1337, %v1336
  %v1575 = vpack.c.b16 %v1339, %v1338
  %v1576 = vpack.c.b16 %v1341, %v1340
  %v1577 = vpack.c.b16 %v1343, %v1342
  %v1578 = vpack.c.b16 %v1345, %v1344
  %v1579 = vpack.c.b16 %v1347, %v1346
  %v1580 = vpack.c.b16 %v1349, %v1348
  %v1581 = vpack.c.b16 %v1351, %v1350
  %v1582 = vpack.c.b16 %v1353, %v1352
  %v1583 = vpack.c.b16 %v1355, %v1354
  %v1584 = vpack.c.b16 %v1357, %v1356
  %v1585 = vpack.c.b16 %v1359, %v1358
  %v1586 = vpack.c.b16 %v1361, %v1360
  %v1587 = vpack.c.b16 %v1363, %v1362
  %v1588 = vpack.c.b16 %v1365, %v1364
  %v1589 = vpack.c.b16 %v1367, %v1366
  %v1590 = vpack.c.b16 %v1369, %v1368
  %v1591 = vpack.c.b16 %v1371, %v1370
  %v1592 = vpack.c.b16 %v1373, %v1372
  %v1593 = vpack.c.b16 %v1375, %v1374
  %v1594 = vpack.c.b16 %v1377, %v1376
  %v1595 = vpack.c.b16 %v1379, %v1378
  %v1596 = vpack.c.b16 %v1381, %v1380
  %v1597 = vpack.c.b16 %v1383, %v1382
  %v1598 = vpack.c.b16 %v1385, %v1384
  %v1599 = vpack.c.b16 %v1387, %v1386
  %v1600 = vpack.c.b16 %v1389, %v1388
  %v1601 = vpack.c.b16 %v1391, %v1390
  %v1602 = vpack.c.b16 %v1393, %v1392
  %v1603 = vpack.c.b16 %v1395, %v1394
  %v1604 = vpack.c.b16 %v1397, %v1396
  %v1605 = vpack.c.b16 %v1399, %v1398
  %v1606 = vpack.c.b16 %v1401, %v1400
  %v1607 = vpack.c.b16 %v1403, %v1402
  %v1608 = vpack.c.b16 %v1405, %v1404
  %v1609 = vpack.c.b16 %v1407, %v1406
  %v1610 = vpack.c.b16 %v1409, %v1408
  %v1611 = vpack.c.b16 %v1411, %v1410
  %v1612 = vpack.c.b16 %v1413, %v1412
  %v1613 = vpack.c.b16 %v1415, %v1414
  %v1614 = vpack.c.b16 %v1417, %v1416
  %v1615 = vpack.c.b16 %v1419, %v1418
  %v1616 = vpack.c.b16 %v1421, %v1420
  %v1617 = vpack.c.b16 %v1423, %v1422
  %v1618 = vpack.c.b16 %v1425, %v1424
  %v1619 = vpack.c.b16 %v1427, %v1426
  %v1620 = vpack.c.b16 %v1429, %v1428
  %v1621 = vpack.c.b16 %v1431, %v1430
  %v1622 = vpack.c.b16 %v1433, %v1432
  %v1623 = vpack.c.b16 %v1435, %v1434
  %v1624 = vpack.c.b16 %v1437, %v1436
  %v1625 = vpack.c.b16 %v1439, %v1438
  %v1626 = vpack.c.b16 %v1441, %v1440
  %v1627 = vpack.c.b16 %v1443, %v1442
  %v1628 = vpack.c.b16 %v1445, %v1444
  %v1629 = vpack.c.b16 %v1447, %v1446
  %v1630 = vpack.c.b16 %v1449, %v1448
  %v1631 = vpack.c.b16 %v1451, %v1450
  %v1632 = vpack.c.b16 %v1453, %v1452
  %v1633 = vpack.c.b16 %v1455, %v1454
  %v1634 = vpack.c.b16 %v1457, %v1456
  %v1635 = vpack.c.b16 %v1459, %v1458
  %v1636 = vpack.c.b16 %v1461, %v1460
  %v1637 = vpack.c.b16 %v1463, %v1462
  %v1638 = vpack.c.b16 %v1465, %v1464
  %v1639 = vpack.c.b16 %v1467, %v1466
  %v1640 = vpack.c.b16 %v1469, %v1468
  %v1641 = vpack.c.b16 %v1471, %v1470
  %v1642 = vpack.c.b16 %v1473, %v1472
  %v1643 = vpack.c.b16 %v1475, %v1474
  %v1644 = vpack.c.b16 %v1477, %v1476
  %v1645 = vpack.c.b16 %v1479, %v1478
  %v1646 = vpack.c.b16 %v1481, %v1480
  %v1647 = vpack.c.b16 %v1483, %v1482
  %v1648 = vpack.c.b16 %v1485, %v1484
  %v1649 = vpack.c.b16 %v1487, %v1486
  %v1650 = vpack.c.b16 %v1489, %v1488
  %v1651 = vpack.c.b16 %v1491, %v1490
  %v1652 = vpack.c.b16 %v1493, %v1492
  %v1653 = vpack.c.b16 %v1495, %v1494
  %v1654 = vpack.c.b16 %v1497, %v1496
  %v1655 = vpack.c.b16 %v1499, %v1498
  %v1656 = vpack.c.b16 %v1501, %v1500
  %v1657 = vpack.c.b16 %v1503, %v1502
  %v1658 = vpack.c.b16 %v1505, %v1504
  %v1659 = vpack.c.b16 %v1507, %v1506
  %v1660 = vpack.c.b16 %v1509, %v1508
  %v1661 = vpack.c.b16 %v1511, %v1510
  %v1662 = vpack.c.b16 %v1513, %v1512
  %v1663 = vpack.c.b16 %v1515, %v1514
  %v1664 = vpack.c.b16 %v1517, %v1516
  %v1665 = vpack.c.b16 %v1519, %v1518
  %v1666 = vpack.c.b16 %v1521, %v1520
  %v1667 = vpack.c.b16 %v1523, %v1522
  %v1668 = vpack.c.b16 %v1525, %v1524
  %v1669 = vpack.c.b16 %v1527, %v1526
  %v1670 = vpack.c.b16 %v1529, %v1528
  %v1671 = vpack.c.b16 %v1531, %v1530
  %v1672 = vpack.c.b16 %v1533, %v1532
  %v1673 = vpack.c.b16 %v1535, %v1534
  %v1674 = vpack.c.b16 %v1537, %v1536
  %v1675 = vpack.c.b16 %v1539, %v1538
  %v1676 = vpack.c.b16 %v1541, %v1540
  %v1677 = vpack.c.b16 %v1543, %v1542
  %v1678 = vpack.c.b16 %v1545, %v1544
  %v1679 = vpack.c.b16 %v1547, %v1546
  %v1680 = vpack.c.b16 %v1549, %v1548
  %v1681 = vpack.c.b16 %v1551, %v1550
  %v1682 = vpack.c.b16 %v1553, %v1552
  %v1683 = vpack.c.b16 %v1555, %v1554
  %1812 = vmatpush.bf16.msra.mxu0 %v1563
  %1813 = vmatpush.bf16.msra.mxu0 %v1562
  %1814 = vmatpush.bf16.msra.mxu0 %v1561
  %1815 = vmatpush.bf16.msra.mxu0 %v1560
  %1816 = vmatpush.bf16.msra.mxu0 %v1559
  %1817 = vmatpush.bf16.msra.mxu0 %v1558
  %1818 = vmatpush.bf16.msra.mxu0 %v1557
  %1819 = vmatpush.bf16.msra.mxu0 %v1556
  %1820 = vmatmul.bf16.gmra.mxu0 %v788
  %v1821 = vpop.f32.mrf.mxu0
  %v1822 = vadd.f32 0.0, %v1821
  %v1823 = vpop.f32.mrf.mxu0
  %v1824 = vadd.f32 0.0, %v1823
  %1825 = vmatmul.bf16.gmra.mxu0 %v804
  %v1826 = vpop.f32.mrf.mxu0
  %v1827 = vadd.f32 0.0, %v1826
  %v1828 = vpop.f32.mrf.mxu0
  %v1829 = vadd.f32 0.0, %v1828
  %1830 = vmatmul.bf16.gmra.mxu0 %v820
  %v1831 = vpop.f32.mrf.mxu0
  %v1832 = vadd.f32 0.0, %v1831
  %v1833 = vpop.f32.mrf.mxu0
  %v1834 = vadd.f32 0.0, %v1833
  %1835 = vmatmul.bf16.gmra.mxu0 %v836
  %v1836 = vpop.f32.mrf.mxu0
  %v1837 = vadd.f32 0.0, %v1836
  %v1838 = vpop.f32.mrf.mxu0
  %v1839 = vadd.f32 0.0, %v1838
  %1840 = vmatmul.bf16.gmra.mxu0 %v852
  %v1841 = vpop.f32.mrf.mxu0
  %v1842 = vadd.f32 0.0, %v1841
  %v1843 = vpop.f32.mrf.mxu0
  %v1844 = vadd.f32 0.0, %v1843
  %1845 = vmatmul.bf16.gmra.mxu0 %v868
  %v1846 = vpop.f32.mrf.mxu0
  %v1847 = vadd.f32 0.0, %v1846
  %v1848 = vpop.f32.mrf.mxu0
  %v1849 = vadd.f32 0.0, %v1848
  %1850 = vmatmul.bf16.gmra.mxu0 %v884
  %v1851 = vpop.f32.mrf.mxu0
  %v1852 = vadd.f32 0.0, %v1851
  %v1853 = vpop.f32.mrf.mxu0
  %v1854 = vadd.f32 0.0, %v1853
  %1855 = vmatmul.bf16.gmra.mxu0 %v900
  %v1856 = vpop.f32.mrf.mxu0
  %v1857 = vadd.f32 0.0, %v1856
  %v1858 = vpop.f32.mrf.mxu0
  %v1859 = vadd.f32 0.0, %v1858
  %1860 = vdwg.mxu0
  %1861 = vmatpush.bf16.msra.mxu0 %v1571
  %1862 = vmatpush.bf16.msra.mxu0 %v1570
  %1863 = vmatpush.bf16.msra.mxu0 %v1569
  %1864 = vmatpush.bf16.msra.mxu0 %v1568
  %1865 = vmatpush.bf16.msra.mxu0 %v1567
  %1866 = vmatpush.bf16.msra.mxu0 %v1566
  %1867 = vmatpush.bf16.msra.mxu0 %v1565
  %1868 = vmatpush.bf16.msra.mxu0 %v1564
  %1869 = vmatmul.bf16.gmra.mxu0 %v789
  %v1870 = vpop.f32.mrf.mxu0
  %v1871 = vadd.f32 %v1822, %v1870
  %v1872 = vpop.f32.mrf.mxu0
  %v1873 = vadd.f32 %v1824, %v1872
  %1874 = vmatmul.bf16.gmra.mxu0 %v805
  %v1875 = vpop.f32.mrf.mxu0
  %v1876 = vadd.f32 %v1827, %v1875
  %v1877 = vpop.f32.mrf.mxu0
  %v1878 = vadd.f32 %v1829, %v1877
  %1879 = vmatmul.bf16.gmra.mxu0 %v821
  %v1880 = vpop.f32.mrf.mxu0
  %v1881 = vadd.f32 %v1832, %v1880
  %v1882 = vpop.f32.mrf.mxu0
  %v1883 = vadd.f32 %v1834, %v1882
  %1884 = vmatmul.bf16.gmra.mxu0 %v837
  %v1885 = vpop.f32.mrf.mxu0
  %v1886 = vadd.f32 %v1837, %v1885
  %v1887 = vpop.f32.mrf.mxu0
  %v1888 = vadd.f32 %v1839, %v1887
  %1889 = vmatmul.bf16.gmra.mxu0 %v853
  %v1890 = vpop.f32.mrf.mxu0
  %v1891 = vadd.f32 %v1842, %v1890
  %v1892 = vpop.f32.mrf.mxu0
  %v1893 = vadd.f32 %v1844, %v1892
  %1894 = vmatmul.bf16.gmra.mxu0 %v869
  %v1895 = vpop.f32.mrf.mxu0
  %v1896 = vadd.f32 %v1847, %v1895
  %v1897 = vpop.f32.mrf.mxu0
  %v1898 = vadd.f32 %v1849, %v1897
  %1899 = vmatmul.bf16.gmra.mxu0 %v885
  %v1900 = vpop.f32.mrf.mxu0
  %v1901 = vadd.f32 %v1852, %v1900
  %v1902 = vpop.f32.mrf.mxu0
  %v1903 = vadd.f32 %v1854, %v1902
  %1904 = vmatmul.bf16.gmra.mxu0 %v901
  %v1905 = vpop.f32.mrf.mxu0
  %v1906 = vadd.f32 %v1857, %v1905
  %v1907 = vpop.f32.mrf.mxu0
  %v1908 = vadd.f32 %v1859, %v1907
  %1909 = vdwg.mxu0
  %1910 = vmatpush.bf16.msra.mxu0 %v1579
  %1911 = vmatpush.bf16.msra.mxu0 %v1578
  %1912 = vmatpush.bf16.msra.mxu0 %v1577
  %1913 = vmatpush.bf16.msra.mxu0 %v1576
  %1914 = vmatpush.bf16.msra.mxu0 %v1575
  %1915 = vmatpush.bf16.msra.mxu0 %v1574
  %1916 = vmatpush.bf16.msra.mxu0 %v1573
  %1917 = vmatpush.bf16.msra.mxu0 %v1572
  %1918 = vmatmul.bf16.gmra.mxu0 %v790
  %v1919 = vpop.f32.mrf.mxu0
  %v1920 = vadd.f32 %v1871, %v1919
  %v1921 = vpop.f32.mrf.mxu0
  %v1922 = vadd.f32 %v1873, %v1921
  %1923 = vmatmul.bf16.gmra.mxu0 %v806
  %v1924 = vpop.f32.mrf.mxu0
  %v1925 = vadd.f32 %v1876, %v1924
  %v1926 = vpop.f32.mrf.mxu0
  %v1927 = vadd.f32 %v1878, %v1926
  %1928 = vmatmul.bf16.gmra.mxu0 %v822
  %v1929 = vpop.f32.mrf.mxu0
  %v1930 = vadd.f32 %v1881, %v1929
  %v1931 = vpop.f32.mrf.mxu0
  %v1932 = vadd.f32 %v1883, %v1931
  %1933 = vmatmul.bf16.gmra.mxu0 %v838
  %v1934 = vpop.f32.mrf.mxu0
  %v1935 = vadd.f32 %v1886, %v1934
  %v1936 = vpop.f32.mrf.mxu0
  %v1937 = vadd.f32 %v1888, %v1936
  %1938 = vmatmul.bf16.gmra.mxu0 %v854
  %v1939 = vpop.f32.mrf.mxu0
  %v1940 = vadd.f32 %v1891, %v1939
  %v1941 = vpop.f32.mrf.mxu0
  %v1942 = vadd.f32 %v1893, %v1941
  %1943 = vmatmul.bf16.gmra.mxu0 %v870
  %v1944 = vpop.f32.mrf.mxu0
  %v1945 = vadd.f32 %v1896, %v1944
  %v1946 = vpop.f32.mrf.mxu0
  %v1947 = vadd.f32 %v1898, %v1946
  %1948 = vmatmul.bf16.gmra.mxu0 %v886
  %v1949 = vpop.f32.mrf.mxu0
  %v1950 = vadd.f32 %v1901, %v1949
  %v1951 = vpop.f32.mrf.mxu0
  %v1952 = vadd.f32 %v1903, %v1951
  %1953 = vmatmul.bf16.gmra.mxu0 %v902
  %v1954 = vpop.f32.mrf.mxu0
  %v1955 = vadd.f32 %v1906, %v1954
  %v1956 = vpop.f32.mrf.mxu0
  %v1957 = vadd.f32 %v1908, %v1956
  %1958 = vdwg.mxu0
  %1959 = vmatpush.bf16.msra.mxu0 %v1587
  %1960 = vmatpush.bf16.msra.mxu0 %v1586
  %1961 = vmatpush.bf16.msra.mxu0 %v1585
  %1962 = vmatpush.bf16.msra.mxu0 %v1584
  %1963 = vmatpush.bf16.msra.mxu0 %v1583
  %1964 = vmatpush.bf16.msra.mxu0 %v1582
  %1965 = vmatpush.bf16.msra.mxu0 %v1581
  %1966 = vmatpush.bf16.msra.mxu0 %v1580
  %1967 = vmatmul.bf16.gmra.mxu0 %v791
  %v1968 = vpop.f32.mrf.mxu0
  %v1969 = vadd.f32 %v1920, %v1968
  %v1970 = vpop.f32.mrf.mxu0
  %v1971 = vadd.f32 %v1922, %v1970
  %1972 = vmatmul.bf16.gmra.mxu0 %v807
  %v1973 = vpop.f32.mrf.mxu0
  %v1974 = vadd.f32 %v1925, %v1973
  %v1975 = vpop.f32.mrf.mxu0
  %v1976 = vadd.f32 %v1927, %v1975
  %1977 = vmatmul.bf16.gmra.mxu0 %v823
  %v1978 = vpop.f32.mrf.mxu0
  %v1979 = vadd.f32 %v1930, %v1978
  %v1980 = vpop.f32.mrf.mxu0
  %v1981 = vadd.f32 %v1932, %v1980
  %1982 = vmatmul.bf16.gmra.mxu0 %v839
  %v1983 = vpop.f32.mrf.mxu0
  %v1984 = vadd.f32 %v1935, %v1983
  %v1985 = vpop.f32.mrf.mxu0
  %v1986 = vadd.f32 %v1937, %v1985
  %1987 = vmatmul.bf16.gmra.mxu0 %v855
  %v1988 = vpop.f32.mrf.mxu0
  %v1989 = vadd.f32 %v1940, %v1988
  %v1990 = vpop.f32.mrf.mxu0
  %v1991 = vadd.f32 %v1942, %v1990
  %1992 = vmatmul.bf16.gmra.mxu0 %v871
  %v1993 = vpop.f32.mrf.mxu0
  %v1994 = vadd.f32 %v1945, %v1993
  %v1995 = vpop.f32.mrf.mxu0
  %v1996 = vadd.f32 %v1947, %v1995
  %1997 = vmatmul.bf16.gmra.mxu0 %v887
  %v1998 = vpop.f32.mrf.mxu0
  %v1999 = vadd.f32 %v1950, %v1998
  %v2000 = vpop.f32.mrf.mxu0
  %v2001 = vadd.f32 %v1952, %v2000
  %2002 = vmatmul.bf16.gmra.mxu0 %v903
  %v2003 = vpop.f32.mrf.mxu0
  %v2004 = vadd.f32 %v1955, %v2003
  %v2005 = vpop.f32.mrf.mxu0
  %v2006 = vadd.f32 %v1957, %v2005
  %2007 = vdwg.mxu0
  %2008 = vmatpush.bf16.msra.mxu0 %v1595
  %2009 = vmatpush.bf16.msra.mxu0 %v1594
  %2010 = vmatpush.bf16.msra.mxu0 %v1593
  %2011 = vmatpush.bf16.msra.mxu0 %v1592
  %2012 = vmatpush.bf16.msra.mxu0 %v1591
  %2013 = vmatpush.bf16.msra.mxu0 %v1590
  %2014 = vmatpush.bf16.msra.mxu0 %v1589
  %2015 = vmatpush.bf16.msra.mxu0 %v1588
  %2016 = vmatmul.bf16.gmra.mxu0 %v792
  %v2017 = vpop.f32.mrf.mxu0
  %v2018 = vadd.f32 %v1969, %v2017
  %v2019 = vpop.f32.mrf.mxu0
  %v2020 = vadd.f32 %v1971, %v2019
  %2021 = vmatmul.bf16.gmra.mxu0 %v808
  %v2022 = vpop.f32.mrf.mxu0
  %v2023 = vadd.f32 %v1974, %v2022
  %v2024 = vpop.f32.mrf.mxu0
  %v2025 = vadd.f32 %v1976, %v2024
  %2026 = vmatmul.bf16.gmra.mxu0 %v824
  %v2027 = vpop.f32.mrf.mxu0
  %v2028 = vadd.f32 %v1979, %v2027
  %v2029 = vpop.f32.mrf.mxu0
  %v2030 = vadd.f32 %v1981, %v2029
  %2031 = vmatmul.bf16.gmra.mxu0 %v840
  %v2032 = vpop.f32.mrf.mxu0
  %v2033 = vadd.f32 %v1984, %v2032
  %v2034 = vpop.f32.mrf.mxu0
  %v2035 = vadd.f32 %v1986, %v2034
  %2036 = vmatmul.bf16.gmra.mxu0 %v856
  %v2037 = vpop.f32.mrf.mxu0
  %v2038 = vadd.f32 %v1989, %v2037
  %v2039 = vpop.f32.mrf.mxu0
  %v2040 = vadd.f32 %v1991, %v2039
  %2041 = vmatmul.bf16.gmra.mxu0 %v872
  %v2042 = vpop.f32.mrf.mxu0
  %v2043 = vadd.f32 %v1994, %v2042
  %v2044 = vpop.f32.mrf.mxu0
  %v2045 = vadd.f32 %v1996, %v2044
  %2046 = vmatmul.bf16.gmra.mxu0 %v888
  %v2047 = vpop.f32.mrf.mxu0
  %v2048 = vadd.f32 %v1999, %v2047
  %v2049 = vpop.f32.mrf.mxu0
  %v2050 = vadd.f32 %v2001, %v2049
  %2051 = vmatmul.bf16.gmra.mxu0 %v904
  %v2052 = vpop.f32.mrf.mxu0
  %v2053 = vadd.f32 %v2004, %v2052
  %v2054 = vpop.f32.mrf.mxu0
  %v2055 = vadd.f32 %v2006, %v2054
  %2056 = vdwg.mxu0
  %2057 = vmatpush.bf16.msra.mxu0 %v1603
  %2058 = vmatpush.bf16.msra.mxu0 %v1602
  %2059 = vmatpush.bf16.msra.mxu0 %v1601
  %2060 = vmatpush.bf16.msra.mxu0 %v1600
  %2061 = vmatpush.bf16.msra.mxu0 %v1599
  %2062 = vmatpush.bf16.msra.mxu0 %v1598
  %2063 = vmatpush.bf16.msra.mxu0 %v1597
  %2064 = vmatpush.bf16.msra.mxu0 %v1596
  %2065 = vmatmul.bf16.gmra.mxu0 %v793
  %v2066 = vpop.f32.mrf.mxu0
  %v2067 = vadd.f32 %v2018, %v2066
  %v2068 = vpop.f32.mrf.mxu0
  %v2069 = vadd.f32 %v2020, %v2068
  %2070 = vmatmul.bf16.gmra.mxu0 %v809
  %v2071 = vpop.f32.mrf.mxu0
  %v2072 = vadd.f32 %v2023, %v2071
  %v2073 = vpop.f32.mrf.mxu0
  %v2074 = vadd.f32 %v2025, %v2073
  %2075 = vmatmul.bf16.gmra.mxu0 %v825
  %v2076 = vpop.f32.mrf.mxu0
  %v2077 = vadd.f32 %v2028, %v2076
  %v2078 = vpop.f32.mrf.mxu0
  %v2079 = vadd.f32 %v2030, %v2078
  %2080 = vmatmul.bf16.gmra.mxu0 %v841
  %v2081 = vpop.f32.mrf.mxu0
  %v2082 = vadd.f32 %v2033, %v2081
  %v2083 = vpop.f32.mrf.mxu0
  %v2084 = vadd.f32 %v2035, %v2083
  %2085 = vmatmul.bf16.gmra.mxu0 %v857
  %v2086 = vpop.f32.mrf.mxu0
  %v2087 = vadd.f32 %v2038, %v2086
  %v2088 = vpop.f32.mrf.mxu0
  %v2089 = vadd.f32 %v2040, %v2088
  %2090 = vmatmul.bf16.gmra.mxu0 %v873
  %v2091 = vpop.f32.mrf.mxu0
  %v2092 = vadd.f32 %v2043, %v2091
  %v2093 = vpop.f32.mrf.mxu0
  %v2094 = vadd.f32 %v2045, %v2093
  %2095 = vmatmul.bf16.gmra.mxu0 %v889
  %v2096 = vpop.f32.mrf.mxu0
  %v2097 = vadd.f32 %v2048, %v2096
  %v2098 = vpop.f32.mrf.mxu0
  %v2099 = vadd.f32 %v2050, %v2098
  %2100 = vmatmul.bf16.gmra.mxu0 %v905
  %v2101 = vpop.f32.mrf.mxu0
  %v2102 = vadd.f32 %v2053, %v2101
  %v2103 = vpop.f32.mrf.mxu0
  %v2104 = vadd.f32 %v2055, %v2103
  %2105 = vdwg.mxu0
  %2106 = vmatpush.bf16.msra.mxu0 %v1611
  %2107 = vmatpush.bf16.msra.mxu0 %v1610
  %2108 = vmatpush.bf16.msra.mxu0 %v1609
  %2109 = vmatpush.bf16.msra.mxu0 %v1608
  %2110 = vmatpush.bf16.msra.mxu0 %v1607
  %2111 = vmatpush.bf16.msra.mxu0 %v1606
  %2112 = vmatpush.bf16.msra.mxu0 %v1605
  %2113 = vmatpush.bf16.msra.mxu0 %v1604
  %2114 = vmatmul.bf16.gmra.mxu0 %v794
  %v2115 = vpop.f32.mrf.mxu0
  %v2116 = vadd.f32 %v2067, %v2115
  %v2117 = vpop.f32.mrf.mxu0
  %v2118 = vadd.f32 %v2069, %v2117
  %2119 = vmatmul.bf16.gmra.mxu0 %v810
  %v2120 = vpop.f32.mrf.mxu0
  %v2121 = vadd.f32 %v2072, %v2120
  %v2122 = vpop.f32.mrf.mxu0
  %v2123 = vadd.f32 %v2074, %v2122
  %2124 = vmatmul.bf16.gmra.mxu0 %v826
  %v2125 = vpop.f32.mrf.mxu0
  %v2126 = vadd.f32 %v2077, %v2125
  %v2127 = vpop.f32.mrf.mxu0
  %v2128 = vadd.f32 %v2079, %v2127
  %2129 = vmatmul.bf16.gmra.mxu0 %v842
  %v2130 = vpop.f32.mrf.mxu0
  %v2131 = vadd.f32 %v2082, %v2130
  %v2132 = vpop.f32.mrf.mxu0
  %v2133 = vadd.f32 %v2084, %v2132
  %2134 = vmatmul.bf16.gmra.mxu0 %v858
  %v2135 = vpop.f32.mrf.mxu0
  %v2136 = vadd.f32 %v2087, %v2135
  %v2137 = vpop.f32.mrf.mxu0
  %v2138 = vadd.f32 %v2089, %v2137
  %2139 = vmatmul.bf16.gmra.mxu0 %v874
  %v2140 = vpop.f32.mrf.mxu0
  %v2141 = vadd.f32 %v2092, %v2140
  %v2142 = vpop.f32.mrf.mxu0
  %v2143 = vadd.f32 %v2094, %v2142
  %2144 = vmatmul.bf16.gmra.mxu0 %v890
  %v2145 = vpop.f32.mrf.mxu0
  %v2146 = vadd.f32 %v2097, %v2145
  %v2147 = vpop.f32.mrf.mxu0
  %v2148 = vadd.f32 %v2099, %v2147
  %2149 = vmatmul.bf16.gmra.mxu0 %v906
  %v2150 = vpop.f32.mrf.mxu0
  %v2151 = vadd.f32 %v2102, %v2150
  %v2152 = vpop.f32.mrf.mxu0
  %v2153 = vadd.f32 %v2104, %v2152
  %2154 = vdwg.mxu0
  %2155 = vmatpush.bf16.msra.mxu0 %v1619
  %2156 = vmatpush.bf16.msra.mxu0 %v1618
  %2157 = vmatpush.bf16.msra.mxu0 %v1617
  %2158 = vmatpush.bf16.msra.mxu0 %v1616
  %2159 = vmatpush.bf16.msra.mxu0 %v1615
  %2160 = vmatpush.bf16.msra.mxu0 %v1614
  %2161 = vmatpush.bf16.msra.mxu0 %v1613
  %2162 = vmatpush.bf16.msra.mxu0 %v1612
  %2163 = vmatmul.bf16.gmra.mxu0 %v795
  %v2164 = vpop.f32.mrf.mxu0
  %v2165 = vadd.f32 %v2116, %v2164
  %v2166 = vpop.f32.mrf.mxu0
  %v2167 = vadd.f32 %v2118, %v2166
  %2168 = vmatmul.bf16.gmra.mxu0 %v811
  %v2169 = vpop.f32.mrf.mxu0
  %v2170 = vadd.f32 %v2121, %v2169
  %v2171 = vpop.f32.mrf.mxu0
  %v2172 = vadd.f32 %v2123, %v2171
  %2173 = vmatmul.bf16.gmra.mxu0 %v827
  %v2174 = vpop.f32.mrf.mxu0
  %v2175 = vadd.f32 %v2126, %v2174
  %v2176 = vpop.f32.mrf.mxu0
  %v2177 = vadd.f32 %v2128, %v2176
  %2178 = vmatmul.bf16.gmra.mxu0 %v843
  %v2179 = vpop.f32.mrf.mxu0
  %v2180 = vadd.f32 %v2131, %v2179
  %v2181 = vpop.f32.mrf.mxu0
  %v2182 = vadd.f32 %v2133, %v2181
  %2183 = vmatmul.bf16.gmra.mxu0 %v859
  %v2184 = vpop.f32.mrf.mxu0
  %v2185 = vadd.f32 %v2136, %v2184
  %v2186 = vpop.f32.mrf.mxu0
  %v2187 = vadd.f32 %v2138, %v2186
  %2188 = vmatmul.bf16.gmra.mxu0 %v875
  %v2189 = vpop.f32.mrf.mxu0
  %v2190 = vadd.f32 %v2141, %v2189
  %v2191 = vpop.f32.mrf.mxu0
  %v2192 = vadd.f32 %v2143, %v2191
  %2193 = vmatmul.bf16.gmra.mxu0 %v891
  %v2194 = vpop.f32.mrf.mxu0
  %v2195 = vadd.f32 %v2146, %v2194
  %v2196 = vpop.f32.mrf.mxu0
  %v2197 = vadd.f32 %v2148, %v2196
  %2198 = vmatmul.bf16.gmra.mxu0 %v907
  %v2199 = vpop.f32.mrf.mxu0
  %v2200 = vadd.f32 %v2151, %v2199
  %v2201 = vpop.f32.mrf.mxu0
  %v2202 = vadd.f32 %v2153, %v2201
  %2203 = vdwg.mxu0
  %2204 = vmatpush.bf16.msra.mxu0 %v1627
  %2205 = vmatpush.bf16.msra.mxu0 %v1626
  %2206 = vmatpush.bf16.msra.mxu0 %v1625
  %2207 = vmatpush.bf16.msra.mxu0 %v1624
  %2208 = vmatpush.bf16.msra.mxu0 %v1623
  %2209 = vmatpush.bf16.msra.mxu0 %v1622
  %2210 = vmatpush.bf16.msra.mxu0 %v1621
  %2211 = vmatpush.bf16.msra.mxu0 %v1620
  %2212 = vmatmul.bf16.gmra.mxu0 %v796
  %v2213 = vpop.f32.mrf.mxu0
  %v2214 = vadd.f32 %v2165, %v2213
  %v2215 = vpop.f32.mrf.mxu0
  %v2216 = vadd.f32 %v2167, %v2215
  %2217 = vmatmul.bf16.gmra.mxu0 %v812
  %v2218 = vpop.f32.mrf.mxu0
  %v2219 = vadd.f32 %v2170, %v2218
  %v2220 = vpop.f32.mrf.mxu0
  %v2221 = vadd.f32 %v2172, %v2220
  %2222 = vmatmul.bf16.gmra.mxu0 %v828
  %v2223 = vpop.f32.mrf.mxu0
  %v2224 = vadd.f32 %v2175, %v2223
  %v2225 = vpop.f32.mrf.mxu0
  %v2226 = vadd.f32 %v2177, %v2225
  %2227 = vmatmul.bf16.gmra.mxu0 %v844
  %v2228 = vpop.f32.mrf.mxu0
  %v2229 = vadd.f32 %v2180, %v2228
  %v2230 = vpop.f32.mrf.mxu0
  %v2231 = vadd.f32 %v2182, %v2230
  %2232 = vmatmul.bf16.gmra.mxu0 %v860
  %v2233 = vpop.f32.mrf.mxu0
  %v2234 = vadd.f32 %v2185, %v2233
  %v2235 = vpop.f32.mrf.mxu0
  %v2236 = vadd.f32 %v2187, %v2235
  %2237 = vmatmul.bf16.gmra.mxu0 %v876
  %v2238 = vpop.f32.mrf.mxu0
  %v2239 = vadd.f32 %v2190, %v2238
  %v2240 = vpop.f32.mrf.mxu0
  %v2241 = vadd.f32 %v2192, %v2240
  %2242 = vmatmul.bf16.gmra.mxu0 %v892
  %v2243 = vpop.f32.mrf.mxu0
  %v2244 = vadd.f32 %v2195, %v2243
  %v2245 = vpop.f32.mrf.mxu0
  %v2246 = vadd.f32 %v2197, %v2245
  %2247 = vmatmul.bf16.gmra.mxu0 %v908
  %v2248 = vpop.f32.mrf.mxu0
  %v2249 = vadd.f32 %v2200, %v2248
  %v2250 = vpop.f32.mrf.mxu0
  %v2251 = vadd.f32 %v2202, %v2250
  %2252 = vdwg.mxu0
  %2253 = vmatpush.bf16.msra.mxu0 %v1635
  %2254 = vmatpush.bf16.msra.mxu0 %v1634
  %2255 = vmatpush.bf16.msra.mxu0 %v1633
  %2256 = vmatpush.bf16.msra.mxu0 %v1632
  %2257 = vmatpush.bf16.msra.mxu0 %v1631
  %2258 = vmatpush.bf16.msra.mxu0 %v1630
  %2259 = vmatpush.bf16.msra.mxu0 %v1629
  %2260 = vmatpush.bf16.msra.mxu0 %v1628
  %2261 = vmatmul.bf16.gmra.mxu0 %v797
  %v2262 = vpop.f32.mrf.mxu0
  %v2263 = vadd.f32 %v2214, %v2262
  %v2264 = vpop.f32.mrf.mxu0
  %v2265 = vadd.f32 %v2216, %v2264
  %2266 = vmatmul.bf16.gmra.mxu0 %v813
  %v2267 = vpop.f32.mrf.mxu0
  %v2268 = vadd.f32 %v2219, %v2267
  %v2269 = vpop.f32.mrf.mxu0
  %v2270 = vadd.f32 %v2221, %v2269
  %2271 = vmatmul.bf16.gmra.mxu0 %v829
  %v2272 = vpop.f32.mrf.mxu0
  %v2273 = vadd.f32 %v2224, %v2272
  %v2274 = vpop.f32.mrf.mxu0
  %v2275 = vadd.f32 %v2226, %v2274
  %2276 = vmatmul.bf16.gmra.mxu0 %v845
  %v2277 = vpop.f32.mrf.mxu0
  %v2278 = vadd.f32 %v2229, %v2277
  %v2279 = vpop.f32.mrf.mxu0
  %v2280 = vadd.f32 %v2231, %v2279
  %2281 = vmatmul.bf16.gmra.mxu0 %v861
  %v2282 = vpop.f32.mrf.mxu0
  %v2283 = vadd.f32 %v2234, %v2282
  %v2284 = vpop.f32.mrf.mxu0
  %v2285 = vadd.f32 %v2236, %v2284
  %2286 = vmatmul.bf16.gmra.mxu0 %v877
  %v2287 = vpop.f32.mrf.mxu0
  %v2288 = vadd.f32 %v2239, %v2287
  %v2289 = vpop.f32.mrf.mxu0
  %v2290 = vadd.f32 %v2241, %v2289
  %2291 = vmatmul.bf16.gmra.mxu0 %v893
  %v2292 = vpop.f32.mrf.mxu0
  %v2293 = vadd.f32 %v2244, %v2292
  %v2294 = vpop.f32.mrf.mxu0
  %v2295 = vadd.f32 %v2246, %v2294
  %2296 = vmatmul.bf16.gmra.mxu0 %v909
  %v2297 = vpop.f32.mrf.mxu0
  %v2298 = vadd.f32 %v2249, %v2297
  %v2299 = vpop.f32.mrf.mxu0
  %v2300 = vadd.f32 %v2251, %v2299
  %2301 = vdwg.mxu0
  %2302 = vmatpush.bf16.msra.mxu0 %v1643
  %2303 = vmatpush.bf16.msra.mxu0 %v1642
  %2304 = vmatpush.bf16.msra.mxu0 %v1641
  %2305 = vmatpush.bf16.msra.mxu0 %v1640
  %2306 = vmatpush.bf16.msra.mxu0 %v1639
  %2307 = vmatpush.bf16.msra.mxu0 %v1638
  %2308 = vmatpush.bf16.msra.mxu0 %v1637
  %2309 = vmatpush.bf16.msra.mxu0 %v1636
  %2310 = vmatmul.bf16.gmra.mxu0 %v798
  %v2311 = vpop.f32.mrf.mxu0
  %v2312 = vadd.f32 %v2263, %v2311
  %v2313 = vpop.f32.mrf.mxu0
  %v2314 = vadd.f32 %v2265, %v2313
  %2315 = vmatmul.bf16.gmra.mxu0 %v814
  %v2316 = vpop.f32.mrf.mxu0
  %v2317 = vadd.f32 %v2268, %v2316
  %v2318 = vpop.f32.mrf.mxu0
  %v2319 = vadd.f32 %v2270, %v2318
  %2320 = vmatmul.bf16.gmra.mxu0 %v830
  %v2321 = vpop.f32.mrf.mxu0
  %v2322 = vadd.f32 %v2273, %v2321
  %v2323 = vpop.f32.mrf.mxu0
  %v2324 = vadd.f32 %v2275, %v2323
  %2325 = vmatmul.bf16.gmra.mxu0 %v846
  %v2326 = vpop.f32.mrf.mxu0
  %v2327 = vadd.f32 %v2278, %v2326
  %v2328 = vpop.f32.mrf.mxu0
  %v2329 = vadd.f32 %v2280, %v2328
  %2330 = vmatmul.bf16.gmra.mxu0 %v862
  %v2331 = vpop.f32.mrf.mxu0
  %v2332 = vadd.f32 %v2283, %v2331
  %v2333 = vpop.f32.mrf.mxu0
  %v2334 = vadd.f32 %v2285, %v2333
  %2335 = vmatmul.bf16.gmra.mxu0 %v878
  %v2336 = vpop.f32.mrf.mxu0
  %v2337 = vadd.f32 %v2288, %v2336
  %v2338 = vpop.f32.mrf.mxu0
  %v2339 = vadd.f32 %v2290, %v2338
  %2340 = vmatmul.bf16.gmra.mxu0 %v894
  %v2341 = vpop.f32.mrf.mxu0
  %v2342 = vadd.f32 %v2293, %v2341
  %v2343 = vpop.f32.mrf.mxu0
  %v2344 = vadd.f32 %v2295, %v2343
  %2345 = vmatmul.bf16.gmra.mxu0 %v910
  %v2346 = vpop.f32.mrf.mxu0
  %v2347 = vadd.f32 %v2298, %v2346
  %v2348 = vpop.f32.mrf.mxu0
  %v2349 = vadd.f32 %v2300, %v2348
  %2350 = vdwg.mxu0
  %2351 = vmatpush.bf16.msra.mxu0 %v1651
  %2352 = vmatpush.bf16.msra.mxu0 %v1650
  %2353 = vmatpush.bf16.msra.mxu0 %v1649
  %2354 = vmatpush.bf16.msra.mxu0 %v1648
  %2355 = vmatpush.bf16.msra.mxu0 %v1647
  %2356 = vmatpush.bf16.msra.mxu0 %v1646
  %2357 = vmatpush.bf16.msra.mxu0 %v1645
  %2358 = vmatpush.bf16.msra.mxu0 %v1644
  %2359 = vmatmul.bf16.gmra.mxu0 %v799
  %v2360 = vpop.f32.mrf.mxu0
  %v2361 = vadd.f32 %v2312, %v2360
  %v2362 = vpop.f32.mrf.mxu0
  %v2363 = vadd.f32 %v2314, %v2362
  %2364 = vmatmul.bf16.gmra.mxu0 %v815
  %v2365 = vpop.f32.mrf.mxu0
  %v2366 = vadd.f32 %v2317, %v2365
  %v2367 = vpop.f32.mrf.mxu0
  %v2368 = vadd.f32 %v2319, %v2367
  %2369 = vmatmul.bf16.gmra.mxu0 %v831
  %v2370 = vpop.f32.mrf.mxu0
  %v2371 = vadd.f32 %v2322, %v2370
  %v2372 = vpop.f32.mrf.mxu0
  %v2373 = vadd.f32 %v2324, %v2372
  %2374 = vmatmul.bf16.gmra.mxu0 %v847
  %v2375 = vpop.f32.mrf.mxu0
  %v2376 = vadd.f32 %v2327, %v2375
  %v2377 = vpop.f32.mrf.mxu0
  %v2378 = vadd.f32 %v2329, %v2377
  %2379 = vmatmul.bf16.gmra.mxu0 %v863
  %v2380 = vpop.f32.mrf.mxu0
  %v2381 = vadd.f32 %v2332, %v2380
  %v2382 = vpop.f32.mrf.mxu0
  %v2383 = vadd.f32 %v2334, %v2382
  %2384 = vmatmul.bf16.gmra.mxu0 %v879
  %v2385 = vpop.f32.mrf.mxu0
  %v2386 = vadd.f32 %v2337, %v2385
  %v2387 = vpop.f32.mrf.mxu0
  %v2388 = vadd.f32 %v2339, %v2387
  %2389 = vmatmul.bf16.gmra.mxu0 %v895
  %v2390 = vpop.f32.mrf.mxu0
  %v2391 = vadd.f32 %v2342, %v2390
  %v2392 = vpop.f32.mrf.mxu0
  %v2393 = vadd.f32 %v2344, %v2392
  %2394 = vmatmul.bf16.gmra.mxu0 %v911
  %v2395 = vpop.f32.mrf.mxu0
  %v2396 = vadd.f32 %v2347, %v2395
  %v2397 = vpop.f32.mrf.mxu0
  %v2398 = vadd.f32 %v2349, %v2397
  %2399 = vdwg.mxu0
  %2400 = vmatpush.bf16.msra.mxu0 %v1659
  %2401 = vmatpush.bf16.msra.mxu0 %v1658
  %2402 = vmatpush.bf16.msra.mxu0 %v1657
  %2403 = vmatpush.bf16.msra.mxu0 %v1656
  %2404 = vmatpush.bf16.msra.mxu0 %v1655
  %2405 = vmatpush.bf16.msra.mxu0 %v1654
  %2406 = vmatpush.bf16.msra.mxu0 %v1653
  %2407 = vmatpush.bf16.msra.mxu0 %v1652
  %2408 = vmatmul.bf16.gmra.mxu0 %v800
  %v2409 = vpop.f32.mrf.mxu0
  %v2410 = vadd.f32 %v2361, %v2409
  %v2411 = vpop.f32.mrf.mxu0
  %v2412 = vadd.f32 %v2363, %v2411
  %2413 = vmatmul.bf16.gmra.mxu0 %v816
  %v2414 = vpop.f32.mrf.mxu0
  %v2415 = vadd.f32 %v2366, %v2414
  %v2416 = vpop.f32.mrf.mxu0
  %v2417 = vadd.f32 %v2368, %v2416
  %2418 = vmatmul.bf16.gmra.mxu0 %v832
  %v2419 = vpop.f32.mrf.mxu0
  %v2420 = vadd.f32 %v2371, %v2419
  %v2421 = vpop.f32.mrf.mxu0
  %v2422 = vadd.f32 %v2373, %v2421
  %2423 = vmatmul.bf16.gmra.mxu0 %v848
  %v2424 = vpop.f32.mrf.mxu0
  %v2425 = vadd.f32 %v2376, %v2424
  %v2426 = vpop.f32.mrf.mxu0
  %v2427 = vadd.f32 %v2378, %v2426
  %2428 = vmatmul.bf16.gmra.mxu0 %v864
  %v2429 = vpop.f32.mrf.mxu0
  %v2430 = vadd.f32 %v2381, %v2429
  %v2431 = vpop.f32.mrf.mxu0
  %v2432 = vadd.f32 %v2383, %v2431
  %2433 = vmatmul.bf16.gmra.mxu0 %v880
  %v2434 = vpop.f32.mrf.mxu0
  %v2435 = vadd.f32 %v2386, %v2434
  %v2436 = vpop.f32.mrf.mxu0
  %v2437 = vadd.f32 %v2388, %v2436
  %2438 = vmatmul.bf16.gmra.mxu0 %v896
  %v2439 = vpop.f32.mrf.mxu0
  %v2440 = vadd.f32 %v2391, %v2439
  %v2441 = vpop.f32.mrf.mxu0
  %v2442 = vadd.f32 %v2393, %v2441
  %2443 = vmatmul.bf16.gmra.mxu0 %v912
  %v2444 = vpop.f32.mrf.mxu0
  %v2445 = vadd.f32 %v2396, %v2444
  %v2446 = vpop.f32.mrf.mxu0
  %v2447 = vadd.f32 %v2398, %v2446
  %2448 = vdwg.mxu0
  %2449 = vmatpush.bf16.msra.mxu0 %v1667
  %2450 = vmatpush.bf16.msra.mxu0 %v1666
  %2451 = vmatpush.bf16.msra.mxu0 %v1665
  %2452 = vmatpush.bf16.msra.mxu0 %v1664
  %2453 = vmatpush.bf16.msra.mxu0 %v1663
  %2454 = vmatpush.bf16.msra.mxu0 %v1662
  %2455 = vmatpush.bf16.msra.mxu0 %v1661
  %2456 = vmatpush.bf16.msra.mxu0 %v1660
  %2457 = vmatmul.bf16.gmra.mxu0 %v801
  %v2458 = vpop.f32.mrf.mxu0
  %v2459 = vadd.f32 %v2410, %v2458
  %v2460 = vpop.f32.mrf.mxu0
  %v2461 = vadd.f32 %v2412, %v2460
  %2462 = vmatmul.bf16.gmra.mxu0 %v817
  %v2463 = vpop.f32.mrf.mxu0
  %v2464 = vadd.f32 %v2415, %v2463
  %v2465 = vpop.f32.mrf.mxu0
  %v2466 = vadd.f32 %v2417, %v2465
  %2467 = vmatmul.bf16.gmra.mxu0 %v833
  %v2468 = vpop.f32.mrf.mxu0
  %v2469 = vadd.f32 %v2420, %v2468
  %v2470 = vpop.f32.mrf.mxu0
  %v2471 = vadd.f32 %v2422, %v2470
  %2472 = vmatmul.bf16.gmra.mxu0 %v849
  %v2473 = vpop.f32.mrf.mxu0
  %v2474 = vadd.f32 %v2425, %v2473
  %v2475 = vpop.f32.mrf.mxu0
  %v2476 = vadd.f32 %v2427, %v2475
  %2477 = vmatmul.bf16.gmra.mxu0 %v865
  %v2478 = vpop.f32.mrf.mxu0
  %v2479 = vadd.f32 %v2430, %v2478
  %v2480 = vpop.f32.mrf.mxu0
  %v2481 = vadd.f32 %v2432, %v2480
  %2482 = vmatmul.bf16.gmra.mxu0 %v881
  %v2483 = vpop.f32.mrf.mxu0
  %v2484 = vadd.f32 %v2435, %v2483
  %v2485 = vpop.f32.mrf.mxu0
  %v2486 = vadd.f32 %v2437, %v2485
  %2487 = vmatmul.bf16.gmra.mxu0 %v897
  %v2488 = vpop.f32.mrf.mxu0
  %v2489 = vadd.f32 %v2440, %v2488
  %v2490 = vpop.f32.mrf.mxu0
  %v2491 = vadd.f32 %v2442, %v2490
  %2492 = vmatmul.bf16.gmra.mxu0 %v913
  %v2493 = vpop.f32.mrf.mxu0
  %v2494 = vadd.f32 %v2445, %v2493
  %v2495 = vpop.f32.mrf.mxu0
  %v2496 = vadd.f32 %v2447, %v2495
  %2497 = vdwg.mxu0
  %2498 = vmatpush.bf16.msra.mxu0 %v1675
  %2499 = vmatpush.bf16.msra.mxu0 %v1674
  %2500 = vmatpush.bf16.msra.mxu0 %v1673
  %2501 = vmatpush.bf16.msra.mxu0 %v1672
  %2502 = vmatpush.bf16.msra.mxu0 %v1671
  %2503 = vmatpush.bf16.msra.mxu0 %v1670
  %2504 = vmatpush.bf16.msra.mxu0 %v1669
  %2505 = vmatpush.bf16.msra.mxu0 %v1668
  %2506 = vmatmul.bf16.gmra.mxu0 %v802
  %v2507 = vpop.f32.mrf.mxu0
  %v2508 = vadd.f32 %v2459, %v2507
  %v2509 = vpop.f32.mrf.mxu0
  %v2510 = vadd.f32 %v2461, %v2509
  %2511 = vmatmul.bf16.gmra.mxu0 %v818
  %v2512 = vpop.f32.mrf.mxu0
  %v2513 = vadd.f32 %v2464, %v2512
  %v2514 = vpop.f32.mrf.mxu0
  %v2515 = vadd.f32 %v2466, %v2514
  %2516 = vmatmul.bf16.gmra.mxu0 %v834
  %v2517 = vpop.f32.mrf.mxu0
  %v2518 = vadd.f32 %v2469, %v2517
  %v2519 = vpop.f32.mrf.mxu0
  %v2520 = vadd.f32 %v2471, %v2519
  %2521 = vmatmul.bf16.gmra.mxu0 %v850
  %v2522 = vpop.f32.mrf.mxu0
  %v2523 = vadd.f32 %v2474, %v2522
  %v2524 = vpop.f32.mrf.mxu0
  %v2525 = vadd.f32 %v2476, %v2524
  %2526 = vmatmul.bf16.gmra.mxu0 %v866
  %v2527 = vpop.f32.mrf.mxu0
  %v2528 = vadd.f32 %v2479, %v2527
  %v2529 = vpop.f32.mrf.mxu0
  %v2530 = vadd.f32 %v2481, %v2529
  %2531 = vmatmul.bf16.gmra.mxu0 %v882
  %v2532 = vpop.f32.mrf.mxu0
  %v2533 = vadd.f32 %v2484, %v2532
  %v2534 = vpop.f32.mrf.mxu0
  %v2535 = vadd.f32 %v2486, %v2534
  %2536 = vmatmul.bf16.gmra.mxu0 %v898
  %v2537 = vpop.f32.mrf.mxu0
  %v2538 = vadd.f32 %v2489, %v2537
  %v2539 = vpop.f32.mrf.mxu0
  %v2540 = vadd.f32 %v2491, %v2539
  %2541 = vmatmul.bf16.gmra.mxu0 %v914
  %v2542 = vpop.f32.mrf.mxu0
  %v2543 = vadd.f32 %v2494, %v2542
  %v2544 = vpop.f32.mrf.mxu0
  %v2545 = vadd.f32 %v2496, %v2544
  %2546 = vdwg.mxu0
  %2547 = vmatpush.bf16.msra.mxu0 %v1683
  %2548 = vmatpush.bf16.msra.mxu0 %v1682
  %2549 = vmatpush.bf16.msra.mxu0 %v1681
  %2550 = vmatpush.bf16.msra.mxu0 %v1680
  %2551 = vmatpush.bf16.msra.mxu0 %v1679
  %2552 = vmatpush.bf16.msra.mxu0 %v1678
  %2553 = vmatpush.bf16.msra.mxu0 %v1677
  %2554 = vmatpush.bf16.msra.mxu0 %v1676
  %2555 = vmatmul.bf16.gmra.mxu0 %v803
  %v2556 = vpop.f32.mrf.mxu0
  %v2557 = vadd.f32 %v2508, %v2556
  %v2558 = vpop.f32.mrf.mxu0
  %v2559 = vadd.f32 %v2510, %v2558
  %2560 = vmatmul.bf16.gmra.mxu0 %v819
  %v2561 = vpop.f32.mrf.mxu0
  %v2562 = vadd.f32 %v2513, %v2561
  %v2563 = vpop.f32.mrf.mxu0
  %v2564 = vadd.f32 %v2515, %v2563
  %2565 = vmatmul.bf16.gmra.mxu0 %v835
  %v2566 = vpop.f32.mrf.mxu0
  %v2567 = vadd.f32 %v2518, %v2566
  %v2568 = vpop.f32.mrf.mxu0
  %v2569 = vadd.f32 %v2520, %v2568
  %2570 = vmatmul.bf16.gmra.mxu0 %v851
  %v2571 = vpop.f32.mrf.mxu0
  %v2572 = vadd.f32 %v2523, %v2571
  %v2573 = vpop.f32.mrf.mxu0
  %v2574 = vadd.f32 %v2525, %v2573
  %2575 = vmatmul.bf16.gmra.mxu0 %v867
  %v2576 = vpop.f32.mrf.mxu0
  %v2577 = vadd.f32 %v2528, %v2576
  %v2578 = vpop.f32.mrf.mxu0
  %v2579 = vadd.f32 %v2530, %v2578
  %2580 = vmatmul.bf16.gmra.mxu0 %v883
  %v2581 = vpop.f32.mrf.mxu0
  %v2582 = vadd.f32 %v2533, %v2581
  %v2583 = vpop.f32.mrf.mxu0
  %v2584 = vadd.f32 %v2535, %v2583
  %2585 = vmatmul.bf16.gmra.mxu0 %v899
  %v2586 = vpop.f32.mrf.mxu0
  %v2587 = vadd.f32 %v2538, %v2586
  %v2588 = vpop.f32.mrf.mxu0
  %v2589 = vadd.f32 %v2540, %v2588
  %2590 = vmatmul.bf16.gmra.mxu0 %v915
  %v2591 = vpop.f32.mrf.mxu0
  %v2592 = vadd.f32 %v2543, %v2591
  %v2593 = vpop.f32.mrf.mxu0
  %v2594 = vadd.f32 %v2545, %v2593
  %2595 = vdwg.mxu0
  %2596 = vst [vmem:[%s2] sm:$0xff] %v2557
  %2597 = vst [vmem:[%s2 + $0x8] sm:$0xff] %v2559
  %2598 = vst [vmem:[%s2 + $0x10] sm:$0xff] %v2562
  %2599 = vst [vmem:[%s2 + $0x18] sm:$0xff] %v2564
  %2600 = vst [vmem:[%s2 + $0x20] sm:$0xff] %v2567
  %2601 = vst [vmem:[%s2 + $0x28] sm:$0xff] %v2569
  %2602 = vst [vmem:[%s2 + $0x30] sm:$0xff] %v2572
  %2603 = vst [vmem:[%s2 + $0x38] sm:$0xff] %v2574
  %2604 = vst [vmem:[%s2 + $0x40] sm:$0xff] %v2577
  %2605 = vst [vmem:[%s2 + $0x48] sm:$0xff] %v2579
  %2606 = vst [vmem:[%s2 + $0x50] sm:$0xff] %v2582
  %2607 = vst [vmem:[%s2 + $0x58] sm:$0xff] %v2584
  %2608 = vst [vmem:[%s2 + $0x60] sm:$0xff] %v2587
  %2609 = vst [vmem:[%s2 + $0x68] sm:$0xff] %v2589
  %2610 = vst [vmem:[%s2 + $0x70] sm:$0xff] %v2592
  %2611 = vst [vmem:[%s2 + $0x78] sm:$0xff] %v2594
  %v2612 = vld [vmem:[%s3] sm:$0x1]
  %v2613 = vadd.f32 %v2557, %v2559
  %v2614 = vadd.f32 %v2613, %v2562
  %v2615 = vadd.f32 %v2614, %v2564
  %v2616 = vadd.f32 %v2615, %v2567
  %v2617 = vadd.f32 %v2616, %v2569
  %v2618 = vadd.f32 %v2617, %v2572
  %v2619 = vadd.f32 %v2618, %v2574
  %v2620 = vadd.f32 %v2619, %v2577
  %v2621 = vadd.f32 %v2620, %v2579
  %v2622 = vadd.f32 %v2621, %v2582
  %v2623 = vadd.f32 %v2622, %v2584
  %v2624 = vadd.f32 %v2623, %v2587
  %v2625 = vadd.f32 %v2624, %v2589
  %v2626 = vadd.f32 %v2625, %v2592
  %v2627 = vadd.f32 %v2626, %v2594
  %v2628 = vrot.slane %v2627, 4
  %v2629 = vadd.f32 %v2627, %v2628
  %v2630 = vrot.slane %v2629, 2
  %v2631 = vadd.f32 %v2629, %v2630
  %v2632 = vrot.slane %v2631, 1
  %v2633 = vadd.f32 %v2631, %v2632
  %v2634 = vadd.f32 %v2612, %v2633
  %2635 = vst [vmem:[%s3] sm:$0x1] %v2634
  %v2636 = vld [vmem:[%s4] sm:$0x1]
  %v2637 = vmul.f32 %v2557, %v2557
  %v2638 = vmul.f32 %v2559, %v2559
  %v2639 = vmul.f32 %v2562, %v2562
  %v2640 = vmul.f32 %v2564, %v2564
  %v2641 = vmul.f32 %v2567, %v2567
  %v2642 = vmul.f32 %v2569, %v2569
  %v2643 = vmul.f32 %v2572, %v2572
  %v2644 = vmul.f32 %v2574, %v2574
  %v2645 = vmul.f32 %v2577, %v2577
  %v2646 = vmul.f32 %v2579, %v2579
  %v2647 = vmul.f32 %v2582, %v2582
  %v2648 = vmul.f32 %v2584, %v2584
  %v2649 = vmul.f32 %v2587, %v2587
  %v2650 = vmul.f32 %v2589, %v2589
  %v2651 = vmul.f32 %v2592, %v2592
  %v2652 = vmul.f32 %v2594, %v2594
  %v2653 = vadd.f32 %v2637, %v2638
  %v2654 = vadd.f32 %v2653, %v2639
  %v2655 = vadd.f32 %v2654, %v2640
  %v2656 = vadd.f32 %v2655, %v2641
  %v2657 = vadd.f32 %v2656, %v2642
  %v2658 = vadd.f32 %v2657, %v2643
  %v2659 = vadd.f32 %v2658, %v2644
  %v2660 = vadd.f32 %v2659, %v2645
  %v2661 = vadd.f32 %v2660, %v2646
  %v2662 = vadd.f32 %v2661, %v2647
  %v2663 = vadd.f32 %v2662, %v2648
  %v2664 = vadd.f32 %v2663, %v2649
  %v2665 = vadd.f32 %v2664, %v2650
  %v2666 = vadd.f32 %v2665, %v2651
  %v2667 = vadd.f32 %v2666, %v2652
  %v2668 = vrot.slane %v2667, 4
  %v2669 = vadd.f32 %v2667, %v2668
  %v2670 = vrot.slane %v2669, 2
  %v2671 = vadd.f32 %v2669, %v2670
  %v2672 = vrot.slane %v2671, 1
  %v2673 = vadd.f32 %v2671, %v2672
  %v2674 = vadd.f32 %v2636, %v2673
  %2675 = vst [vmem:[%s4] sm:$0x1] %v2674
  // Predicated region
  $region14: #{patch_image_discriminator.7} parent=0 // pred_check
    _
  $region15: #{patch_image_discriminator.7} parent=0 // pred_check_branch
    %2677 = sbr.rel (0) target = $region17
  $region16: #{patch_image_discriminator.7} parent=0 // pred_region
    _
  $region17: #{patch_image_discriminator.7} parent=0 // pred_fallthru
    _
  // Predicated region
  $region18: #{patch_image_discriminator.7} parent=0 // pred_check
    _
  $region19: #{patch_image_discriminator.7} parent=0 // pred_check_branch
    %2679 = sbr.rel (0) target = $region21
  $region20: #{patch_image_discriminator.7} parent=0 // pred_region
    _
  $region21: #{patch_image_discriminator.7} parent=0 // pred_fallthru
    _
  // Predicated region
  $region22: #{patch_image_discriminator.7} parent=0 // pred_check
    _
  $region23: #{patch_image_discriminator.7} parent=0 // pred_check_branch
    %2681 = sbr.rel (0) target = $region25
  $region24: #{patch_image_discriminator.7} parent=0 // pred_region
    _
  $region25: #{patch_image_discriminator.7} parent=0 // pred_fallthru
    _
  // Predicated region
  $region26: #{patch_image_discriminator.7} parent=0 // pred_check
    _
  $region27: #{patch_image_discriminator.7} parent=0 // pred_check_branch
    %2683 = sbr.rel (0) target = $region29
  $region28: #{patch_image_discriminator.7} parent=0 // pred_region
    _
  $region29: #{patch_image_discriminator.7} parent=0 // pred_fallthru
    _
  // Predicated region
  $region30: #{patch_image_discriminator.7} parent=0 // pred_check
    _
  $region31: #{patch_image_discriminator.7} parent=0 // pred_check_branch
    %2685 = sbr.rel (0) target = $region33
  $region32: #{patch_image_discriminator.7} parent=0 // pred_region
    _
  $region33: #{patch_image_discriminator.7} parent=0 // pred_fallthru
    _
  // Predicated region
  $region34: #{patch_image_discriminator.7} parent=0 // pred_check
    _
  $region35: #{patch_image_discriminator.7} parent=0 // pred_check_branch
    %2687 = sbr.rel (0) target = $region37
  $region36: #{patch_image_discriminator.7} parent=0 // pred_region
    _
  $region37: #{patch_image_discriminator.7} parent=0 // pred_fallthru
    _

// kernel: patch_image_discriminator.10
$region0: #{patch_image_discriminator.10}
  #allocation0 [shape = 'u32[]', space=smem, size = 0x4, offset = 0x4, fixed_abs, tag = 'smem constant byte address 0x4 - core index']
  #allocation1 [shape = 'u32[72,128]{1,0:T(1,128)}', space=vmem, size = 0x9000, scoped, tag = 'internal scratch']
  %s0 = inlined_call_operand.vmem [shape: f32[32,128], index: 0, kind: input, shape index: {}]
  %s1 = inlined_call_operand.vmem [shape: f32[1,128], index: 1, kind: input, shape index: {}]
  %s2 = inlined_call_operand.vmem [shape: f32[1,128], index: 2, kind: input, shape index: {}]
  %s3 = inlined_call_operand.vmem [shape: bf16[32,128], index: 3, kind: output, shape index: {}]
  %s4 = sld [smem:[#allocation0]]
  $region22: #{patch_image_discriminator.10} parent=0
    _
  %s6 = ssub.s32 1, %s4
  %s7 = scalar_select 0, %s6, %s4
  // Predicated region
  $region2: #{patch_image_discriminator.10} parent=0 // pred_check
    _
  $region3: #{patch_image_discriminator.10} parent=0 // pred_check_branch
    %9 = sbr.rel (0) target = $region5
  $region4: #{patch_image_discriminator.10} parent=0 // pred_region
    _
  $region5: #{patch_image_discriminator.10} parent=0 // pred_fallthru
    _
  // Predicated region
  $region6: #{patch_image_discriminator.10} parent=0 // pred_check
    _
  $region7: #{patch_image_discriminator.10} parent=0 // pred_check_branch
    %11 = sbr.rel (0) target = $region9
  $region8: #{patch_image_discriminator.10} parent=0 // pred_region
    _
  $region9: #{patch_image_discriminator.10} parent=0 // pred_fallthru
    _
  // Predicated region
  $region10: #{patch_image_discriminator.10} parent=0 // pred_check
    _
  $region11: #{patch_image_discriminator.10} parent=0 // pred_check_branch
    %13 = sbr.rel (0) target = $region13
  $region12: #{patch_image_discriminator.10} parent=0 // pred_region
    _
  $region13: #{patch_image_discriminator.10} parent=0 // pred_fallthru
    _
  %v14 = vld [vmem:[%s0] sm:$0xff]
  %v15 = vld [vmem:[%s0 + $0x8] sm:$0xff]
  %v16 = vld [vmem:[%s0 + $0x10] sm:$0xff]
  %v17 = vld [vmem:[%s0 + $0x18] sm:$0xff]
  %v18 = vld [vmem:[%s1] sm:$0x1]
  %v20 = vperm.slane %v18, 0
  %v22 = vmul.f32 %v14, %v20
  %v23 = vmul.f32 %v15, %v20
  %v24 = vmul.f32 %v16, %v20
  %v25 = vmul.f32 %v17, %v20
  %v26 = vld [vmem:[%s2] sm:$0x1]
  %v28 = vperm.slane %v26, 0
  %v30 = vadd.f32 %v22, %v28
  %v31 = vadd.f32 %v23, %v28
  %v32 = vadd.f32 %v24, %v28
  %v33 = vadd.f32 %v25, %v28
  %v34 = vmul.f32 %v30, 0.2
  %v35 = vmul.f32 %v31, 0.2
  %v36 = vmul.f32 %v32, 0.2
  %v37 = vmul.f32 %v33, 0.2
  %v38 = vmax.f32 %v30, %v34
  %v39 = vmax.f32 %v31, %v35
  %v40 = vmax.f32 %v32, %v36
  %v41 = vmax.f32 %v33, %v37
  %v42 = vpack.c.bf16 %v38, %v38
  %v43 = vpack.c.bf16 %v39, %v39
  %v44 = vpack.c.bf16 %v40, %v40
  %v45 = vpack.c.bf16 %v41, %v41
  %46 = vst [vmem:[%s3] sm:$0xf] %v42
  %47 = vst [vmem:[%s3 + $0x4] sm:$0xf] %v43
  %48 = vst [vmem:[%s3 + $0x8] sm:$0xf] %v44
  %49 = vst [vmem:[%s3 + $0xc] sm:$0xf] %v45
  // Predicated region
  $region14: #{patch_image_discriminator.10} parent=0 // pred_check
    _
  $region15: #{patch_image_discriminator.10} parent=0 // pred_check_branch
    %51 = sbr.rel (0) target = $region17
  $region16: #{patch_image_discriminator.10} parent=0 // pred_region
    _
  $region17: #{patch_image_discriminator.10} parent=0 // pred_fallthru
    _
  // Predicated region
  $region18: #{patch_image_discriminator.10} parent=0 // pred_check
    _
  $region19: #{patch_image_discriminator.10} parent=0 // pred_check_branch
    %53 = sbr.rel (0) target = $region21
  $region20: #{patch_image_discriminator.10} parent=0 // pred_region
    _
  $region21: #{patch_image_discriminator.10} parent=0 // pred_fallthru
    _

// kernel: patch_image_discriminator.9
$region0: #{patch_image_discriminator.9}
  #allocation0 [shape = 'u32[]', space=smem, size = 0x4, offset = 0x4, fixed_abs, tag = 'smem constant byte address 0x4 - core index']
  #allocation1 [shape = 'u32[72,128]{1,0:T(1,128)}', space=vmem, size = 0x9000, scoped, tag = 'internal scratch']
  %s0 = inlined_call_operand.vmem [shape: bf16[32,2048], index: 0, kind: input, shape index: {}]
  %s1 = inlined_call_operand.vmem [shape: bf16[2048,128], index: 1, kind: input, shape index: {}]
  %s2 = inlined_call_operand.vmem [shape: f32[32,128], index: 2, kind: output, shape index: {0}]
  %s3 = inlined_call_operand.vmem [shape: f32[1,128], index: 3, kind: output, shape index: {1}]
  %s4 = inlined_call_operand.vmem [shape: f32[1,128], index: 4, kind: output, shape index: {2}]
  %5 = xla_tuple %s2, %s3, %s4
  %s6 = sld [smem:[#allocation0]]
  $region38: #{patch_image_discriminator.9} parent=0
    _
  %s8 = ssub.s32 1, %s6
  %s9 = scalar_select 0, %s8, %s6
  // Predicated region
  $region2: #{patch_image_discriminator.9} parent=0 // pred_check
    _
  $region3: #{patch_image_discriminator.9} parent=0 // pred_check_branch
    %11 = sbr.rel (0) target = $region5
  $region4: #{patch_image_discriminator.9} parent=0 // pred_region
    _
  $region5: #{patch_image_discriminator.9} parent=0 // pred_fallthru
    _
  // Predicated region
  $region6: #{patch_image_discriminator.9} parent=0 // pred_check
    _
  $region7: #{patch_image_discriminator.9} parent=0 // pred_check_branch
    %13 = sbr.rel (0) target = $region9
  $region8: #{patch_image_discriminator.9} parent=0 // pred_region
    _
  $region9: #{patch_image_discriminator.9} parent=0 // pred_fallthru
    _
  %p14 = scmp.eq.s32.totalorder 0, 0
  // Predicated region
  $region10: #{patch_image_discriminator.9} parent=0 // pred_check
    %p15 = pneg %p14
  $region11: #{patch_image_discriminator.9} parent=0 // pred_check_branch
    %17 = sbr.rel (%p15) target = $region13
  $region12: #{patch_image_discriminator.9} parent=0 // pred_region
    %18 = vst [vmem:[%s3] sm:$0x1] 0.0
    %19 = vst [vmem:[%s4] sm:$0x1] 0.0
  $region13: #{patch_image_discriminator.9} parent=0 // pred_fallthru
    _
  %v20 = vld [vmem:[%s0] sm:$0xff]
  %v21 = vld [vmem:[%s0 + $0x8] sm:$0xff]
  %v22 = vld [vmem:[%s0 + $0x10] sm:$0xff]
  %v23 = vld [vmem:[%s0 + $0x18] sm:$0xff]
  %v24 = vld [vmem:[%s0 + $0x20] sm:$0xff]
  %v25 = vld [vmem:[%s0 + $0x28] sm:$0xff]
  %v26 = vld [vmem:[%s0 + $0x30] sm:$0xff]
  %v27 = vld [vmem:[%s0 + $0x38] sm:$0xff]
  %v28 = vld [vmem:[%s0 + $0x40] sm:$0xff]
  %v29 = vld [vmem:[%s0 + $0x48] sm:$0xff]
  %v30 = vld [vmem:[%s0 + $0x50] sm:$0xff]
  %v31 = vld [vmem:[%s0 + $0x58] sm:$0xff]
  %v32 = vld [vmem:[%s0 + $0x60] sm:$0xff]
  %v33 = vld [vmem:[%s0 + $0x68] sm:$0xff]
  %v34 = vld [vmem:[%s0 + $0x70] sm:$0xff]
  %v35 = vld [vmem:[%s0 + $0x78] sm:$0xff]
  %v36 = vld [vmem:[%s0 + $0x80] sm:$0xff]
  %v37 = vld [vmem:[%s0 + $0x88] sm:$0xff]
  %v38 = vld [vmem:[%s0 + $0x90] sm:$0xff]
  %v39 = vld [vmem:[%s0 + $0x98] sm:$0xff]
  %v40 = vld [vmem:[%s0 + $0xa0] sm:$0xff]
  %v41 = vld [vmem:[%s0 + $0xa8] sm:$0xff]
  %v42 = vld [vmem:[%s0 + $0xb0] sm:$0xff]
  %v43 = vld [vmem:[%s0 + $0xb8] sm:$0xff]
  %v44 = vld [vmem:[%s0 + $0xc0] sm:$0xff]
  %v45 = vld [vmem:[%s0 + $0xc8] sm:$0xff]
  %v46 = vld [vmem:[%s0 + $0xd0] sm:$0xff]
  %v47 = vld [vmem:[%s0 + $0xd8] sm:$0xff]
  %v48 = vld [vmem:[%s0 + $0xe0] sm:$0xff]
  %v49 = vld [vmem:[%s0 + $0xe8] sm:$0xff]
  %v50 = vld [vmem:[%s0 + $0xf0] sm:$0xff]
  %v51 = vld [vmem:[%s0 + $0xf8] sm:$0xff]
  %v52 = vld [vmem:[%s1] sm:$0xf]
  %v53 = vld [vmem:[%s1 + $0x4] sm:$0xf]
  %v54 = vld [vmem:[%s1 + $0x8] sm:$0xf]
  %v55 = vld [vmem:[%s1 + $0xc] sm:$0xf]
  %v56 = vld [vmem:[%s1 + $0x10] sm:$0xf]
  %v57 = vld [vmem:[%s1 + $0x14] sm:$0xf]
  %v58 = vld [vmem:[%s1 + $0x18] sm:$0xf]
  %v59 = vld [vmem:[%s1 + $0x1c] sm:$0xf]
  %v60 = vld [vmem:[%s1 + $0x20] sm:$0xf]
  %v61 = vld [vmem:[%s1 + $0x24] sm:$0xf]
  %v62 = vld [vmem:[%s1 + $0x28] sm:$0xf]
  %v63 = vld [vmem:[%s1 + $0x2c] sm:$0xf]
  %v64 = vld [vmem:[%s1 + $0x30] sm:$0xf]
  %v65 = vld [vmem:[%s1 + $0x34] sm:$0xf]
  %v66 = vld [vmem:[%s1 + $0x38] sm:$0xf]
  %v67 = vld [vmem:[%s1 + $0x3c] sm:$0xf]
  %v68 = vld [vmem:[%s1 + $0x40] sm:$0xf]
  %v69 = vld [vmem:[%s1 + $0x44] sm:$0xf]
  %v70 = vld [vmem:[%s1 + $0x48] sm:$0xf]
  %v71 = vld [vmem:[%s1 + $0x4c] sm:$0xf]
  %v72 = vld [vmem:[%s1 + $0x50] sm:$0xf]
  %v73 = vld [vmem:[%s1 + $0x54] sm:$0xf]
  %v74 = vld [vmem:[%s1 + $0x58] sm:$0xf]
  %v75 = vld [vmem:[%s1 + $0x5c] sm:$0xf]
  %v76 = vld [vmem:[%s1 + $0x60] sm:$0xf]
  %v77 = vld [vmem:[%s1 + $0x64] sm:$0xf]
  %v78 = vld [vmem:[%s1 + $0x68] sm:$0xf]
  %v79 = vld [vmem:[%s1 + $0x6c] sm:$0xf]
  %v80 = vld [vmem:[%s1 + $0x70] sm:$0xf]
  %v81 = vld [vmem:[%s1 + $0x74] sm:$0xf]
  %v82 = vld [vmem:[%s1 + $0x78] sm:$0xf]
  %v83 = vld [vmem:[%s1 + $0x7c] sm:$0xf]
  %v84 = vld [vmem:[%s1 + $0x80] sm:$0xf]
  %v85 = vld [vmem:[%s1 + $0x84] sm:$0xf]
  %v86 = vld [vmem:[%s1 + $0x88] sm:$0xf]
  %v87 = vld [vmem:[%s1 + $0x8c] sm:$0xf]
  %v88 = vld [vmem:[%s1 + $0x90] sm:$0xf]
  %v89 = vld [vmem:[%s1 + $0x94] sm:$0xf]
  %v90 = vld [vmem:[%s1 + $0x98] sm:$0xf]
  %v91 = vld [vmem:[%s1 + $0x9c] sm:$0xf]
  %v92 = vld [vmem:[%s1 + $0xa0] sm:$0xf]
  %v93 = vld [vmem:[%s1 + $0xa4] sm:$0xf]
  %v94 = vld [vmem:[%s1 + $0xa8] sm:$0xf]
  %v95 = vld [vmem:[%s1 + $0xac] sm:$0xf]
  %v96 = vld [vmem:[%s1 + $0xb0] sm:$0xf]
  %v97 = vld [vmem:[%s1 + $0xb4] sm:$0xf]
  %v98 = vld [vmem:[%s1 + $0xb8] sm:$0xf]
  %v99 = vld [vmem:[%s1 + $0xbc] sm:$0xf]
  %v100 = vld [vmem:[%s1 + $0xc0] sm:$0xf]
  %v101 = vld [vmem:[%s1 + $0xc4] sm:$0xf]
  %v102 = vld [vmem:[%s1 + $0xc8] sm:$0xf]
  %v103 = vld [vmem:[%s1 + $0xcc] sm:$0xf]
  %v104 = vld [vmem:[%s1 + $0xd0] sm:$0xf]
  %v105 = vld [vmem:[%s1 + $0xd4] sm:$0xf]
  %v106 = vld [vmem:[%s1 + $0xd8] sm:$0xf]
  %v107 = vld [vmem:[%s1 + $0xdc] sm:$0xf]
  %v108 = vld [vmem:[%s1 + $0xe0] sm:$0xf]
  %v109 = vld [vmem:[%s1 + $0xe4] sm:$0xf]
  %v110 = vld [vmem:[%s1 + $0xe8] sm:$0xf]
  %v111 = vld [vmem:[%s1 + $0xec] sm:$0xf]
  %v112 = vld [vmem:[%s1 + $0xf0] sm:$0xf]
  %v113 = vld [vmem:[%s1 + $0xf4] sm:$0xf]
  %v114 = vld [vmem:[%s1 + $0xf8] sm:$0xf]
  %v115 = vld [vmem:[%s1 + $0xfc] sm:$0xf]
  %v116 = vld [vmem:[%s1 + $0x100] sm:$0xf]
  %v117 = vld [vmem:[%s1 + $0x104] sm:$0xf]
  %v118 = vld [vmem:[%s1 + $0x108] sm:$0xf]
  %v119 = vld [vmem:[%s1 + $0x10c] sm:$0xf]
  %v120 = vld [vmem:[%s1 + $0x110] sm:$0xf]
  %v121 = vld [vmem:[%s1 + $0x114] sm:$0xf]
  %v122 = vld [vmem:[%s1 + $0x118] sm:$0xf]
  %v123 = vld [vmem:[%s1 + $0x11c] sm:$0xf]
  %v124 = vld [vmem:[%s1 + $0x120] sm:$0xf]
  %v125 = vld [vmem:[%s1 + $0x124] sm:$0xf]
  %v126 = vld [vmem:[%s1 + $0x128] sm:$0xf]
  %v127 = vld [vmem:[%s1 + $0x12c] sm:$0xf]
  %v128 = vld [vmem:[%s1 + $0x130] sm:$0xf]
  %v129 = vld [vmem:[%s1 + $0x134] sm:$0xf]
  %v130 = vld [vmem:[%s1 + $0x138] sm:$0xf]
  %v131 = vld [vmem:[%s1 + $0x13c] sm:$0xf]
  %v132 = vld [vmem:[%s1 + $0x140] sm:$0xf]
  %v133 = vld [vmem:[%s1 + $0x144] sm:$0xf]
  %v134 = vld [vmem:[%s1 + $0x148] sm:$0xf]
  %v135 = vld [vmem:[%s1 + $0x14c] sm:$0xf]
  %v136 = vld [vmem:[%s1 + $0x150] sm:$0xf]
  %v137 = vld [vmem:[%s1 + $0x154] sm:$0xf]
  %v138 = vld [vmem:[%s1 + $0x158] sm:$0xf]
  %v139 = vld [vmem:[%s1 + $0x15c] sm:$0xf]
  %v140 = vld [vmem:[%s1 + $0x160] sm:$0xf]
  %v141 = vld [vmem:[%s1 + $0x164] sm:$0xf]
  %v142 = vld [vmem:[%s1 + $0x168] sm:$0xf]
  %v143 = vld [vmem:[%s1 + $0x16c] sm:$0xf]
  %v144 = vld [vmem:[%s1 + $0x170] sm:$0xf]
  %v145 = vld [vmem:[%s1 + $0x174] sm:$0xf]
  %v146 = vld [vmem:[%s1 + $0x178] sm:$0xf]
  %v147 = vld [vmem:[%s1 + $0x17c] sm:$0xf]
  %v148 = vld [vmem:[%s1 + $0x180] sm:$0xf]
  %v149 = vld [vmem:[%s1 + $0x184] sm:$0xf]
  %v150 = vld [vmem:[%s1 + $0x188] sm:$0xf]
  %v151 = vld [vmem:[%s1 + $0x18c] sm:$0xf]
  %v152 = vld [vmem:[%s1 + $0x190] sm:$0xf]
  %v153 = vld [vmem:[%s1 + $0x194] sm:$0xf]
  %v154 = vld [vmem:[%s1 + $0x198] sm:$0xf]
  %v155 = vld [vmem:[%s1 + $0x19c] sm:$0xf]
  %v156 = vld [vmem:[%s1 + $0x1a0] sm:$0xf]
  %v157 = vld [vmem:[%s1 + $0x1a4] sm:$0xf]
  %v158 = vld [vmem:[%s1 + $0x1a8] sm:$0xf]
  %v159 = vld [vmem:[%s1 + $0x1ac] sm:$0xf]
  %v160 = vld [vmem:[%s1 + $0x1b0] sm:$0xf]
  %v161 = vld [vmem:[%s1 + $0x1b4] sm:$0xf]
  %v162 = vld [vmem:[%s1 + $0x1b8] sm:$0xf]
  %v163 = vld [vmem:[%s1 + $0x1bc] sm:$0xf]
  %v164 = vld [vmem:[%s1 + $0x1c0] sm:$0xf]
  %v165 = vld [vmem:[%s1 + $0x1c4] sm:$0xf]
  %v166 = vld [vmem:[%s1 + $0x1c8] sm:$0xf]
  %v167 = vld [vmem:[%s1 + $0x1cc] sm:$0xf]
  %v168 = vld [vmem:[%s1 + $0x1d0] sm:$0xf]
  %v169 = vld [vmem:[%s1 + $0x1d4] sm:$0xf]
  %v170 = vld [vmem:[%s1 + $0x1d8] sm:$0xf]
  %v171 = vld [vmem:[%s1 + $0x1dc] sm:$0xf]
  %v172 = vld [vmem:[%s1 + $0x1e0] sm:$0xf]
  %v173 = vld [vmem:[%s1 + $0x1e4] sm:$0xf]
  %v174 = vld [vmem:[%s1 + $0x1e8] sm:$0xf]
  %v175 = vld [vmem:[%s1 + $0x1ec] sm:$0xf]
  %v176 = vld [vmem:[%s1 + $0x1f0] sm:$0xf]
  %v177 = vld [vmem:[%s1 + $0x1f4] sm:$0xf]
  %v178 = vld [vmem:[%s1 + $0x1f8] sm:$0xf]
  %v179 = vld [vmem:[%s1 + $0x1fc] sm:$0xf]
  %v180 = vld [vmem:[%s1 + $0x200] sm:$0xf]
  %v181 = vld [vmem:[%s1 + $0x204] sm:$0xf]
  %v182 = vld [vmem:[%s1 + $0x208] sm:$0xf]
  %v183 = vld [vmem:[%s1 + $0x20c] sm:$0xf]
  %v184 = vld [vmem:[%s1 + $0x210] sm:$0xf]
  %v185 = vld [vmem:[%s1 + $0x214] sm:$0xf]
  %v186 = vld [vmem:[%s1 + $0x218] sm:$0xf]
  %v187 = vld [vmem:[%s1 + $0x21c] sm:$0xf]
  %v188 = vld [vmem:[%s1 + $0x220] sm:$0xf]
  %v189 = vld [vmem:[%s1 + $0x224] sm:$0xf]
  %v190 = vld [vmem:[%s1 + $0x228] sm:$0xf]
  %v191 = vld [vmem:[%s1 + $0x22c] sm:$0xf]
  %v192 = vld [vmem:[%s1 + $0x230] sm:$0xf]
  %v193 = vld [vmem:[%s1 + $0x234] sm:$0xf]
  %v194 = vld [vmem:[%s1 + $0x238] sm:$0xf]
  %v195 = vld [vmem:[%s1 + $0x23c] sm:$0xf]
  %v196 = vld [vmem:[%s1 + $0x240] sm:$0xf]
  %v197 = vld [vmem:[%s1 + $0x244] sm:$0xf]
  %v198 = vld [vmem:[%s1 + $0x248] sm:$0xf]
  %v199 = vld [vmem:[%s1 + $0x24c] sm:$0xf]
  %v200 = vld [vmem:[%s1 + $0x250] sm:$0xf]
  %v201 = vld [vmem:[%s1 + $0x254] sm:$0xf]
  %v202 = vld [vmem:[%s1 + $0x258] sm:$0xf]
  %v203 = vld [vmem:[%s1 + $0x25c] sm:$0xf]
  %v204 = vld [vmem:[%s1 + $0x260] sm:$0xf]
  %v205 = vld [vmem:[%s1 + $0x264] sm:$0xf]
  %v206 = vld [vmem:[%s1 + $0x268] sm:$0xf]
  %v207 = vld [vmem:[%s1 + $0x26c] sm:$0xf]
  %v208 = vld [vmem:[%s1 + $0x270] sm:$0xf]
  %v209 = vld [vmem:[%s1 + $0x274] sm:$0xf]
  %v210 = vld [vmem:[%s1 + $0x278] sm:$0xf]
  %v211 = vld [vmem:[%s1 + $0x27c] sm:$0xf]
  %v212 = vld [vmem:[%s1 + $0x280] sm:$0xf]
  %v213 = vld [vmem:[%s1 + $0x284] sm:$0xf]
  %v214 = vld [vmem:[%s1 + $0x288] sm:$0xf]
  %v215 = vld [vmem:[%s1 + $0x28c] sm:$0xf]
  %v216 = vld [vmem:[%s1 + $0x290] sm:$0xf]
  %v217 = vld [vmem:[%s1 + $0x294] sm:$0xf]
  %v218 = vld [vmem:[%s1 + $0x298] sm:$0xf]
  %v219 = vld [vmem:[%s1 + $0x29c] sm:$0xf]
  %v220 = vld [vmem:[%s1 + $0x2a0] sm:$0xf]
  %v221 = vld [vmem:[%s1 + $0x2a4] sm:$0xf]
  %v222 = vld [vmem:[%s1 + $0x2a8] sm:$0xf]
  %v223 = vld [vmem:[%s1 + $0x2ac] sm:$0xf]
  %v224 = vld [vmem:[%s1 + $0x2b0] sm:$0xf]
  %v225 = vld [vmem:[%s1 + $0x2b4] sm:$0xf]
  %v226 = vld [vmem:[%s1 + $0x2b8] sm:$0xf]
  %v227 = vld [vmem:[%s1 + $0x2bc] sm:$0xf]
  %v228 = vld [vmem:[%s1 + $0x2c0] sm:$0xf]
  %v229 = vld [vmem:[%s1 + $0x2c4] sm:$0xf]
  %v230 = vld [vmem:[%s1 + $0x2c8] sm:$0xf]
  %v231 = vld [vmem:[%s1 + $0x2cc] sm:$0xf]
  %v232 = vld [vmem:[%s1 + $0x2d0] sm:$0xf]
  %v233 = vld [vmem:[%s1 + $0x2d4] sm:$0xf]
  %v234 = vld [vmem:[%s1 + $0x2d8] sm:$0xf]
  %v235 = vld [vmem:[%s1 + $0x2dc] sm:$0xf]
  %v236 = vld [vmem:[%s1 + $0x2e0] sm:$0xf]
  %v237 = vld [vmem:[%s1 + $0x2e4] sm:$0xf]
  %v238 = vld [vmem:[%s1 + $0x2e8] sm:$0xf]
  %v239 = vld [vmem:[%s1 + $0x2ec] sm:$0xf]
  %v240 = vld [vmem:[%s1 + $0x2f0] sm:$0xf]
  %v241 = vld [vmem:[%s1 + $0x2f4] sm:$0xf]
  %v242 = vld [vmem:[%s1 + $0x2f8] sm:$0xf]
  %v243 = vld [vmem:[%s1 + $0x2fc] sm:$0xf]
  %v244 = vld [vmem:[%s1 + $0x300] sm:$0xf]
  %v245 = vld [vmem:[%s1 + $0x304] sm:$0xf]
  %v246 = vld [vmem:[%s1 + $0x308] sm:$0xf]
  %v247 = vld [vmem:[%s1 + $0x30c] sm:$0xf]
  %v248 = vld [vmem:[%s1 + $0x310] sm:$0xf]
  %v249 = vld [vmem:[%s1 + $0x314] sm:$0xf]
  %v250 = vld [vmem:[%s1 + $0x318] sm:$0xf]
  %v251 = vld [vmem:[%s1 + $0x31c] sm:$0xf]
  %v252 = vld [vmem:[%s1 + $0x320] sm:$0xf]
  %v253 = vld [vmem:[%s1 + $0x324] sm:$0xf]
  %v254 = vld [vmem:[%s1 + $0x328] sm:$0xf]
  %v255 = vld [vmem:[%s1 + $0x32c] sm:$0xf]
  %v256 = vld [vmem:[%s1 + $0x330] sm:$0xf]
  %v257 = vld [vmem:[%s1 + $0x334] sm:$0xf]
  %v258 = vld [vmem:[%s1 + $0x338] sm:$0xf]
  %v259 = vld [vmem:[%s1 + $0x33c] sm:$0xf]
  %v260 = vld [vmem:[%s1 + $0x340] sm:$0xf]
  %v261 = vld [vmem:[%s1 + $0x344] sm:$0xf]
  %v262 = vld [vmem:[%s1 + $0x348] sm:$0xf]
  %v263 = vld [vmem:[%s1 + $0x34c] sm:$0xf]
  %v264 = vld [vmem:[%s1 + $0x350] sm:$0xf]
  %v265 = vld [vmem:[%s1 + $0x354] sm:$0xf]
  %v266 = vld [vmem:[%s1 + $0x358] sm:$0xf]
  %v267 = vld [vmem:[%s1 + $0x35c] sm:$0xf]
  %v268 = vld [vmem:[%s1 + $0x360] sm:$0xf]
  %v269 = vld [vmem:[%s1 + $0x364] sm:$0xf]
  %v270 = vld [vmem:[%s1 + $0x368] sm:$0xf]
  %v271 = vld [vmem:[%s1 + $0x36c] sm:$0xf]
  %v272 = vld [vmem:[%s1 + $0x370] sm:$0xf]
  %v273 = vld [vmem:[%s1 + $0x374] sm:$0xf]
  %v274 = vld [vmem:[%s1 + $0x378] sm:$0xf]
  %v275 = vld [vmem:[%s1 + $0x37c] sm:$0xf]
  %v276 = vld [vmem:[%s1 + $0x380] sm:$0xf]
  %v277 = vld [vmem:[%s1 + $0x384] sm:$0xf]
  %v278 = vld [vmem:[%s1 + $0x388] sm:$0xf]
  %v279 = vld [vmem:[%s1 + $0x38c] sm:$0xf]
  %v280 = vld [vmem:[%s1 + $0x390] sm:$0xf]
  %v281 = vld [vmem:[%s1 + $0x394] sm:$0xf]
  %v282 = vld [vmem:[%s1 + $0x398] sm:$0xf]
  %v283 = vld [vmem:[%s1 + $0x39c] sm:$0xf]
  %v284 = vld [vmem:[%s1 + $0x3a0] sm:$0xf]
  %v285 = vld [vmem:[%s1 + $0x3a4] sm:$0xf]
  %v286 = vld [vmem:[%s1 + $0x3a8] sm:$0xf]
  %v287 = vld [vmem:[%s1 + $0x3ac] sm:$0xf]
  %v288 = vld [vmem:[%s1 + $0x3b0] sm:$0xf]
  %v289 = vld [vmem:[%s1 + $0x3b4] sm:$0xf]
  %v290 = vld [vmem:[%s1 + $0x3b8] sm:$0xf]
  %v291 = vld [vmem:[%s1 + $0x3bc] sm:$0xf]
  %v292 = vld [vmem:[%s1 + $0x3c0] sm:$0xf]
  %v293 = vld [vmem:[%s1 + $0x3c4] sm:$0xf]
  %v294 = vld [vmem:[%s1 + $0x3c8] sm:$0xf]
  %v295 = vld [vmem:[%s1 + $0x3cc] sm:$0xf]
  %v296 = vld [vmem:[%s1 + $0x3d0] sm:$0xf]
  %v297 = vld [vmem:[%s1 + $0x3d4] sm:$0xf]
  %v298 = vld [vmem:[%s1 + $0x3d8] sm:$0xf]
  %v299 = vld [vmem:[%s1 + $0x3dc] sm:$0xf]
  %v300 = vld [vmem:[%s1 + $0x3e0] sm:$0xf]
  %v301 = vld [vmem:[%s1 + $0x3e4] sm:$0xf]
  %v302 = vld [vmem:[%s1 + $0x3e8] sm:$0xf]
  %v303 = vld [vmem:[%s1 + $0x3ec] sm:$0xf]
  %v304 = vld [vmem:[%s1 + $0x3f0] sm:$0xf]
  %v305 = vld [vmem:[%s1 + $0x3f4] sm:$0xf]
  %v306 = vld [vmem:[%s1 + $0x3f8] sm:$0xf]
  %v307 = vld [vmem:[%s1 + $0x3fc] sm:$0xf]
  %v340 = vunpack.c.l.b16 %v20
  %v341 = vunpack.c.h.b16 %v20
  %v342 = vunpack.c.l.b16 %v21
  %v343 = vunpack.c.h.b16 %v21
  %v344 = vunpack.c.l.b16 %v22
  %v345 = vunpack.c.h.b16 %v22
  %v346 = vunpack.c.l.b16 %v23
  %v347 = vunpack.c.h.b16 %v23
  %v348 = vunpack.c.l.b16 %v24
  %v349 = vunpack.c.h.b16 %v24
  %v350 = vunpack.c.l.b16 %v25
  %v351 = vunpack.c.h.b16 %v25
  %v352 = vunpack.c.l.b16 %v26
  %v353 = vunpack.c.h.b16 %v26
  %v354 = vunpack.c.l.b16 %v27
  %v355 = vunpack.c.h.b16 %v27
  %v356 = vunpack.c.l.b16 %v28
  %v357 = vunpack.c.h.b16 %v28
  %v358 = vunpack.c.l.b16 %v29
  %v359 = vunpack.c.h.b16 %v29
  %v360 = vunpack.c.l.b16 %v30
  %v361 = vunpack.c.h.b16 %v30
  %v362 = vunpack.c.l.b16 %v31
  %v363 = vunpack.c.h.b16 %v31
  %v364 = vunpack.c.l.b16 %v32
  %v365 = vunpack.c.h.b16 %v32
  %v366 = vunpack.c.l.b16 %v33
  %v367 = vunpack.c.h.b16 %v33
  %v368 = vunpack.c.l.b16 %v34
  %v369 = vunpack.c.h.b16 %v34
  %v370 = vunpack.c.l.b16 %v35
  %v371 = vunpack.c.h.b16 %v35
  %v372 = vunpack.c.l.b16 %v36
  %v373 = vunpack.c.h.b16 %v36
  %v374 = vunpack.c.l.b16 %v37
  %v375 = vunpack.c.h.b16 %v37
  %v376 = vunpack.c.l.b16 %v38
  %v377 = vunpack.c.h.b16 %v38
  %v378 = vunpack.c.l.b16 %v39
  %v379 = vunpack.c.h.b16 %v39
  %v380 = vunpack.c.l.b16 %v40
  %v381 = vunpack.c.h.b16 %v40
  %v382 = vunpack.c.l.b16 %v41
  %v383 = vunpack.c.h.b16 %v41
  %v384 = vunpack.c.l.b16 %v42
  %v385 = vunpack.c.h.b16 %v42
  %v386 = vunpack.c.l.b16 %v43
  %v387 = vunpack.c.h.b16 %v43
  %v388 = vunpack.c.l.b16 %v44
  %v389 = vunpack.c.h.b16 %v44
  %v390 = vunpack.c.l.b16 %v45
  %v391 = vunpack.c.h.b16 %v45
  %v392 = vunpack.c.l.b16 %v46
  %v393 = vunpack.c.h.b16 %v46
  %v394 = vunpack.c.l.b16 %v47
  %v395 = vunpack.c.h.b16 %v47
  %v396 = vunpack.c.l.b16 %v48
  %v397 = vunpack.c.h.b16 %v48
  %v398 = vunpack.c.l.b16 %v49
  %v399 = vunpack.c.h.b16 %v49
  %v400 = vunpack.c.l.b16 %v50
  %v401 = vunpack.c.h.b16 %v50
  %v402 = vunpack.c.l.b16 %v51
  %v403 = vunpack.c.h.b16 %v51
  %v404 = vpack.c.b16 %v356, %v340
  %v405 = vpack.c.b16 %v357, %v341
  %v406 = vpack.c.b16 %v358, %v342
  %v407 = vpack.c.b16 %v359, %v343
  %v408 = vpack.c.b16 %v360, %v344
  %v409 = vpack.c.b16 %v361, %v345
  %v410 = vpack.c.b16 %v362, %v346
  %v411 = vpack.c.b16 %v363, %v347
  %v412 = vpack.c.b16 %v364, %v348
  %v413 = vpack.c.b16 %v365, %v349
  %v414 = vpack.c.b16 %v366, %v350
  %v415 = vpack.c.b16 %v367, %v351
  %v416 = vpack.c.b16 %v368, %v352
  %v417 = vpack.c.b16 %v369, %v353
  %v418 = vpack.c.b16 %v370, %v354
  %v419 = vpack.c.b16 %v371, %v355
  %v420 = vpack.c.b16 %v388, %v372
  %v421 = vpack.c.b16 %v389, %v373
  %v422 = vpack.c.b16 %v390, %v374
  %v423 = vpack.c.b16 %v391, %v375
  %v424 = vpack.c.b16 %v392, %v376
  %v425 = vpack.c.b16 %v393, %v377
  %v426 = vpack.c.b16 %v394, %v378
  %v427 = vpack.c.b16 %v395, %v379
  %v428 = vpack.c.b16 %v396, %v380
  %v429 = vpack.c.b16 %v397, %v381
  %v430 = vpack.c.b16 %v398, %v382
  %v431 = vpack.c.b16 %v399, %v383
  %v432 = vpack.c.b16 %v400, %v384
  %v433 = vpack.c.b16 %v401, %v385
  %v434 = vpack.c.b16 %v402, %v386
  %v435 = vpack.c.b16 %v403, %v387
  %v724 = vunpack.c.l.b16 %v52
  %v725 = vunpack.c.l.b16 %v53
  %v726 = vunpack.c.l.b16 %v54
  %v727 = vunpack.c.l.b16 %v55
  %v728 = vunpack.c.l.b16 %v56
  %v729 = vunpack.c.l.b16 %v57
  %v730 = vunpack.c.l.b16 %v58
  %v731 = vunpack.c.l.b16 %v59
  %v732 = vunpack.c.l.b16 %v60
  %v733 = vunpack.c.l.b16 %v61
  %v734 = vunpack.c.l.b16 %v62
  %v735 = vunpack.c.l.b16 %v63
  %v736 = vunpack.c.l.b16 %v64
  %v737 = vunpack.c.l.b16 %v65
  %v738 = vunpack.c.l.b16 %v66
  %v739 = vunpack.c.l.b16 %v67
  %v740 = vunpack.c.l.b16 %v68
  %v741 = vunpack.c.l.b16 %v69
  %v742 = vunpack.c.l.b16 %v70
  %v743 = vunpack.c.l.b16 %v71
  %v744 = vunpack.c.l.b16 %v72
  %v745 = vunpack.c.l.b16 %v73
  %v746 = vunpack.c.l.b16 %v74
  %v747 = vunpack.c.l.b16 %v75
  %v748 = vunpack.c.l.b16 %v76
  %v749 = vunpack.c.l.b16 %v77
  %v750 = vunpack.c.l.b16 %v78
  %v751 = vunpack.c.l.b16 %v79
  %v752 = vunpack.c.l.b16 %v80
  %v753 = vunpack.c.l.b16 %v81
  %v754 = vunpack.c.l.b16 %v82
  %v755 = vunpack.c.l.b16 %v83
  %v756 = vunpack.c.l.b16 %v84
  %v757 = vunpack.c.l.b16 %v85
  %v758 = vunpack.c.l.b16 %v86
  %v759 = vunpack.c.l.b16 %v87
  %v760 = vunpack.c.l.b16 %v88
  %v761 = vunpack.c.l.b16 %v89
  %v762 = vunpack.c.l.b16 %v90
  %v763 = vunpack.c.l.b16 %v91
  %v764 = vunpack.c.l.b16 %v92
  %v765 = vunpack.c.l.b16 %v93
  %v766 = vunpack.c.l.b16 %v94
  %v767 = vunpack.c.l.b16 %v95
  %v768 = vunpack.c.l.b16 %v96
  %v769 = vunpack.c.l.b16 %v97
  %v770 = vunpack.c.l.b16 %v98
  %v771 = vunpack.c.l.b16 %v99
  %v772 = vunpack.c.l.b16 %v100
  %v773 = vunpack.c.l.b16 %v101
  %v774 = vunpack.c.l.b16 %v102
  %v775 = vunpack.c.l.b16 %v103
  %v776 = vunpack.c.l.b16 %v104
  %v777 = vunpack.c.l.b16 %v105
  %v778 = vunpack.c.l.b16 %v106
  %v779 = vunpack.c.l.b16 %v107
  %v780 = vunpack.c.l.b16 %v108
  %v781 = vunpack.c.l.b16 %v109
  %v782 = vunpack.c.l.b16 %v110
  %v783 = vunpack.c.l.b16 %v111
  %v784 = vunpack.c.l.b16 %v112
  %v785 = vunpack.c.l.b16 %v113
  %v786 = vunpack.c.l.b16 %v114
  %v787 = vunpack.c.l.b16 %v115
  %v788 = vunpack.c.l.b16 %v116
  %v789 = vunpack.c.l.b16 %v117
  %v790 = vunpack.c.l.b16 %v118
  %v791 = vunpack.c.l.b16 %v119
  %v792 = vunpack.c.l.b16 %v120
  %v793 = vunpack.c.l.b16 %v121
  %v794 = vunpack.c.l.b16 %v122
  %v795 = vunpack.c.l.b16 %v123
  %v796 = vunpack.c.l.b16 %v124
  %v797 = vunpack.c.l.b16 %v125
  %v798 = vunpack.c.l.b16 %v126
  %v799 = vunpack.c.l.b16 %v127
  %v800 = vunpack.c.l.b16 %v128
  %v801 = vunpack.c.l.b16 %v129
  %v802 = vunpack.c.l.b16 %v130
  %v803 = vunpack.c.l.b16 %v131
  %v804 = vunpack.c.l.b16 %v132
  %v805 = vunpack.c.l.b16 %v133
  %v806 = vunpack.c.l.b16 %v134
  %v807 = vunpack.c.l.b16 %v135
  %v808 = vunpack.c.l.b16 %v136
  %v809 = vunpack.c.l.b16 %v137
  %v810 = vunpack.c.l.b16 %v138
  %v811 = vunpack.c.l.b16 %v139
  %v812 = vunpack.c.l.b16 %v140
  %v813 = vunpack.c.l.b16 %v141
  %v814 = vunpack.c.l.b16 %v142
  %v815 = vunpack.c.l.b16 %v143
  %v816 = vunpack.c.l.b16 %v144
  %v817 = vunpack.c.l.b16 %v145
  %v818 = vunpack.c.l.b16 %v146
  %v819 = vunpack.c.l.b16 %v147
  %v820 = vunpack.c.l.b16 %v148
  %v821 = vunpack.c.l.b16 %v149
  %v822 = vunpack.c.l.b16 %v150
  %v823 = vunpack.c.l.b16 %v151
  %v824 = vunpack.c.l.b16 %v152
  %v825 = vunpack.c.l.b16 %v153
  %v826 = vunpack.c.l.b16 %v154
  %v827 = vunpack.c.l.b16 %v155
  %v828 = vunpack.c.l.b16 %v156
  %v829 = vunpack.c.l.b16 %v157
  %v830 = vunpack.c.l.b16 %v158
  %v831 = vunpack.c.l.b16 %v159
  %v832 = vunpack.c.l.b16 %v160
  %v833 = vunpack.c.l.b16 %v161
  %v834 = vunpack.c.l.b16 %v162
  %v835 = vunpack.c.l.b16 %v163
  %v836 = vunpack.c.l.b16 %v164
  %v837 = vunpack.c.l.b16 %v165
  %v838 = vunpack.c.l.b16 %v166
  %v839 = vunpack.c.l.b16 %v167
  %v840 = vunpack.c.l.b16 %v168
  %v841 = vunpack.c.l.b16 %v169
  %v842 = vunpack.c.l.b16 %v170
  %v843 = vunpack.c.l.b16 %v171
  %v844 = vunpack.c.l.b16 %v172
  %v845 = vunpack.c.l.b16 %v173
  %v846 = vunpack.c.l.b16 %v174
  %v847 = vunpack.c.l.b16 %v175
  %v848 = vunpack.c.l.b16 %v176
  %v849 = vunpack.c.l.b16 %v177
  %v850 = vunpack.c.l.b16 %v178
  %v851 = vunpack.c.l.b16 %v179
  %v852 = vunpack.c.l.b16 %v180
  %v853 = vunpack.c.l.b16 %v181
  %v854 = vunpack.c.l.b16 %v182
  %v855 = vunpack.c.l.b16 %v183
  %v856 = vunpack.c.l.b16 %v184
  %v857 = vunpack.c.l.b16 %v185
  %v858 = vunpack.c.l.b16 %v186
  %v859 = vunpack.c.l.b16 %v187
  %v860 = vunpack.c.l.b16 %v188
  %v861 = vunpack.c.l.b16 %v189
  %v862 = vunpack.c.l.b16 %v190
  %v863 = vunpack.c.l.b16 %v191
  %v864 = vunpack.c.l.b16 %v192
  %v865 = vunpack.c.l.b16 %v193
  %v866 = vunpack.c.l.b16 %v194
  %v867 = vunpack.c.l.b16 %v195
  %v868 = vunpack.c.l.b16 %v196
  %v869 = vunpack.c.l.b16 %v197
  %v870 = vunpack.c.l.b16 %v198
  %v871 = vunpack.c.l.b16 %v199
  %v872 = vunpack.c.l.b16 %v200
  %v873 = vunpack.c.l.b16 %v201
  %v874 = vunpack.c.l.b16 %v202
  %v875 = vunpack.c.l.b16 %v203
  %v876 = vunpack.c.l.b16 %v204
  %v877 = vunpack.c.l.b16 %v205
  %v878 = vunpack.c.l.b16 %v206
  %v879 = vunpack.c.l.b16 %v207
  %v880 = vunpack.c.l.b16 %v208
  %v881 = vunpack.c.l.b16 %v209
  %v882 = vunpack.c.l.b16 %v210
  %v883 = vunpack.c.l.b16 %v211
  %v884 = vunpack.c.l.b16 %v212
  %v885 = vunpack.c.l.b16 %v213
  %v886 = vunpack.c.l.b16 %v214
  %v887 = vunpack.c.l.b16 %v215
  %v888 = vunpack.c.l.b16 %v216
  %v889 = vunpack.c.l.b16 %v217
  %v890 = vunpack.c.l.b16 %v218
  %v891 = vunpack.c.l.b16 %v219
  %v892 = vunpack.c.l.b16 %v220
  %v893 = vunpack.c.l.b16 %v221
  %v894 = vunpack.c.l.b16 %v222
  %v895 = vunpack.c.l.b16 %v223
  %v896 = vunpack.c.l.b16 %v224
  %v897 = vunpack.c.l.b16 %v225
  %v898 = vunpack.c.l.b16 %v226
  %v899 = vunpack.c.l.b16 %v227
  %v900 = vunpack.c.l.b16 %v228
  %v901 = vunpack.c.l.b16 %v229
  %v902 = vunpack.c.l.b16 %v230
  %v903 = vunpack.c.l.b16 %v231
  %v904 = vunpack.c.l.b16 %v232
  %v905 = vunpack.c.l.b16 %v233
  %v906 = vunpack.c.l.b16 %v234
  %v907 = vunpack.c.l.b16 %v235
  %v908 = vunpack.c.l.b16 %v236
  %v909 = vunpack.c.l.b16 %v237
  %v910 = vunpack.c.l.b16 %v238
  %v911 = vunpack.c.l.b16 %v239
  %v912 = vunpack.c.l.b16 %v240
  %v913 = vunpack.c.l.b16 %v241
  %v914 = vunpack.c.l.b16 %v242
  %v915 = vunpack.c.l.b16 %v243
  %v916 = vunpack.c.l.b16 %v244
  %v917 = vunpack.c.l.b16 %v245
  %v918 = vunpack.c.l.b16 %v246
  %v919 = vunpack.c.l.b16 %v247
  %v920 = vunpack.c.l.b16 %v248
  %v921 = vunpack.c.l.b16 %v249
  %v922 = vunpack.c.l.b16 %v250
  %v923 = vunpack.c.l.b16 %v251
  %v924 = vunpack.c.l.b16 %v252
  %v925 = vunpack.c.l.b16 %v253
  %v926 = vunpack.c.l.b16 %v254
  %v927 = vunpack.c.l.b16 %v255
  %v928 = vunpack.c.l.b16 %v256
  %v929 = vunpack.c.l.b16 %v257
  %v930 = vunpack.c.l.b16 %v258
  %v931 = vunpack.c.l.b16 %v259
  %v932 = vunpack.c.l.b16 %v260
  %v933 = vunpack.c.l.b16 %v261
  %v934 = vunpack.c.l.b16 %v262
  %v935 = vunpack.c.l.b16 %v263
  %v936 = vunpack.c.l.b16 %v264
  %v937 = vunpack.c.l.b16 %v265
  %v938 = vunpack.c.l.b16 %v266
  %v939 = vunpack.c.l.b16 %v267
  %v940 = vunpack.c.l.b16 %v268
  %v941 = vunpack.c.l.b16 %v269
  %v942 = vunpack.c.l.b16 %v270
  %v943 = vunpack.c.l.b16 %v271
  %v944 = vunpack.c.l.b16 %v272
  %v945 = vunpack.c.l.b16 %v273
  %v946 = vunpack.c.l.b16 %v274
  %v947 = vunpack.c.l.b16 %v275
  %v948 = vunpack.c.l.b16 %v276
  %v949 = vunpack.c.l.b16 %v277
  %v950 = vunpack.c.l.b16 %v278
  %v951 = vunpack.c.l.b16 %v279
  %v952 = vunpack.c.l.b16 %v280
  %v953 = vunpack.c.l.b16 %v281
  %v954 = vunpack.c.l.b16 %v282
  %v955 = vunpack.c.l.b16 %v283
  %v956 = vunpack.c.l.b16 %v284
  %v957 = vunpack.c.l.b16 %v285
  %v958 = vunpack.c.l.b16 %v286
  %v959 = vunpack.c.l.b16 %v287
  %v960 = vunpack.c.l.b16 %v288
  %v961 = vunpack.c.l.b16 %v289
  %v962 = vunpack.c.l.b16 %v290
  %v963 = vunpack.c.l.b16 %v291
  %v964 = vunpack.c.l.b16 %v292
  %v965 = vunpack.c.l.b16 %v293
  %v966 = vunpack.c.l.b16 %v294
  %v967 = vunpack.c.l.b16 %v295
  %v968 = vunpack.c.l.b16 %v296
  %v969 = vunpack.c.l.b16 %v297
  %v970 = vunpack.c.l.b16 %v298
  %v971 = vunpack.c.l.b16 %v299
  %v972 = vunpack.c.l.b16 %v300
  %v973 = vunpack.c.l.b16 %v301
  %v974 = vunpack.c.l.b16 %v302
  %v975 = vunpack.c.l.b16 %v303
  %v976 = vunpack.c.l.b16 %v304
  %v977 = vunpack.c.l.b16 %v305
  %v978 = vunpack.c.l.b16 %v306
  %v979 = vunpack.c.l.b16 %v307
  %v980 = vpack.c.b16 %v725, %v724
  %v981 = vpack.c.b16 %v727, %v726
  %v982 = vpack.c.b16 %v729, %v728
  %v983 = vpack.c.b16 %v731, %v730
  %v984 = vpack.c.b16 %v733, %v732
  %v985 = vpack.c.b16 %v735, %v734
  %v986 = vpack.c.b16 %v737, %v736
  %v987 = vpack.c.b16 %v739, %v738
  %v988 = vpack.c.b16 %v741, %v740
  %v989 = vpack.c.b16 %v743, %v742
  %v990 = vpack.c.b16 %v745, %v744
  %v991 = vpack.c.b16 %v747, %v746
  %v992 = vpack.c.b16 %v749, %v748
  %v993 = vpack.c.b16 %v751, %v750
  %v994 = vpack.c.b16 %v753, %v752
  %v995 = vpack.c.b16 %v755, %v754
  %v996 = vpack.c.b16 %v757, %v756
  %v997 = vpack.c.b16 %v759, %v758
  %v998 = vpack.c.b16 %v761, %v760
  %v999 = vpack.c.b16 %v763, %v762
  %v1000 = vpack.c.b16 %v765, %v764
  %v1001 = vpack.c.b16 %v767, %v766
  %v1002 = vpack.c.b16 %v769, %v768
  %v1003 = vpack.c.b16 %v771, %v770
  %v1004 = vpack.c.b16 %v773, %v772
  %v1005 = vpack.c.b16 %v775, %v774
  %v1006 = vpack.c.b16 %v777, %v776
  %v1007 = vpack.c.b16 %v779, %v778
  %v1008 = vpack.c.b16 %v781, %v780
  %v1009 = vpack.c.b16 %v783, %v782
  %v1010 = vpack.c.b16 %v785, %v784
  %v1011 = vpack.c.b16 %v787, %v786
  %v1012 = vpack.c.b16 %v789, %v788
  %v1013 = vpack.c.b16 %v791, %v790
  %v1014 = vpack.c.b16 %v793, %v792
  %v1015 = vpack.c.b16 %v795, %v794
  %v1016 = vpack.c.b16 %v797, %v796
  %v1017 = vpack.c.b16 %v799, %v798
  %v1018 = vpack.c.b16 %v801, %v800
  %v1019 = vpack.c.b16 %v803, %v802
  %v1020 = vpack.c.b16 %v805, %v804
  %v1021 = vpack.c.b16 %v807, %v806
  %v1022 = vpack.c.b16 %v809, %v808
  %v1023 = vpack.c.b16 %v811, %v810
  %v1024 = vpack.c.b16 %v813, %v812
  %v1025 = vpack.c.b16 %v815, %v814
  %v1026 = vpack.c.b16 %v817, %v816
  %v1027 = vpack.c.b16 %v819, %v818
  %v1028 = vpack.c.b16 %v821, %v820
  %v1029 = vpack.c.b16 %v823, %v822
  %v1030 = vpack.c.b16 %v825, %v824
  %v1031 = vpack.c.b16 %v827, %v826
  %v1032 = vpack.c.b16 %v829, %v828
  %v1033 = vpack.c.b16 %v831, %v830
  %v1034 = vpack.c.b16 %v833, %v832
  %v1035 = vpack.c.b16 %v835, %v834
  %v1036 = vpack.c.b16 %v837, %v836
  %v1037 = vpack.c.b16 %v839, %v838
  %v1038 = vpack.c.b16 %v841, %v840
  %v1039 = vpack.c.b16 %v843, %v842
  %v1040 = vpack.c.b16 %v845, %v844
  %v1041 = vpack.c.b16 %v847, %v846
  %v1042 = vpack.c.b16 %v849, %v848
  %v1043 = vpack.c.b16 %v851, %v850
  %v1044 = vpack.c.b16 %v853, %v852
  %v1045 = vpack.c.b16 %v855, %v854
  %v1046 = vpack.c.b16 %v857, %v856
  %v1047 = vpack.c.b16 %v859, %v858
  %v1048 = vpack.c.b16 %v861, %v860
  %v1049 = vpack.c.b16 %v863, %v862
  %v1050 = vpack.c.b16 %v865, %v864
  %v1051 = vpack.c.b16 %v867, %v866
  %v1052 = vpack.c.b16 %v869, %v868
  %v1053 = vpack.c.b16 %v871, %v870
  %v1054 = vpack.c.b16 %v873, %v872
  %v1055 = vpack.c.b16 %v875, %v874
  %v1056 = vpack.c.b16 %v877, %v876
  %v1057 = vpack.c.b16 %v879, %v878
  %v1058 = vpack.c.b16 %v881, %v880
  %v1059 = vpack.c.b16 %v883, %v882
  %v1060 = vpack.c.b16 %v885, %v884
  %v1061 = vpack.c.b16 %v887, %v886
  %v1062 = vpack.c.b16 %v889, %v888
  %v1063 = vpack.c.b16 %v891, %v890
  %v1064 = vpack.c.b16 %v893, %v892
  %v1065 = vpack.c.b16 %v895, %v894
  %v1066 = vpack.c.b16 %v897, %v896
  %v1067 = vpack.c.b16 %v899, %v898
  %v1068 = vpack.c.b16 %v901, %v900
  %v1069 = vpack.c.b16 %v903, %v902
  %v1070 = vpack.c.b16 %v905, %v904
  %v1071 = vpack.c.b16 %v907, %v906
  %v1072 = vpack.c.b16 %v909, %v908
  %v1073 = vpack.c.b16 %v911, %v910
  %v1074 = vpack.c.b16 %v913, %v912
  %v1075 = vpack.c.b16 %v915, %v914
  %v1076 = vpack.c.b16 %v917, %v916
  %v1077 = vpack.c.b16 %v919, %v918
  %v1078 = vpack.c.b16 %v921, %v920
  %v1079 = vpack.c.b16 %v923, %v922
  %v1080 = vpack.c.b16 %v925, %v924
  %v1081 = vpack.c.b16 %v927, %v926
  %v1082 = vpack.c.b16 %v929, %v928
  %v1083 = vpack.c.b16 %v931, %v930
  %v1084 = vpack.c.b16 %v933, %v932
  %v1085 = vpack.c.b16 %v935, %v934
  %v1086 = vpack.c.b16 %v937, %v936
  %v1087 = vpack.c.b16 %v939, %v938
  %v1088 = vpack.c.b16 %v941, %v940
  %v1089 = vpack.c.b16 %v943, %v942
  %v1090 = vpack.c.b16 %v945, %v944
  %v1091 = vpack.c.b16 %v947, %v946
  %v1092 = vpack.c.b16 %v949, %v948
  %v1093 = vpack.c.b16 %v951, %v950
  %v1094 = vpack.c.b16 %v953, %v952
  %v1095 = vpack.c.b16 %v955, %v954
  %v1096 = vpack.c.b16 %v957, %v956
  %v1097 = vpack.c.b16 %v959, %v958
  %v1098 = vpack.c.b16 %v961, %v960
  %v1099 = vpack.c.b16 %v963, %v962
  %v1100 = vpack.c.b16 %v965, %v964
  %v1101 = vpack.c.b16 %v967, %v966
  %v1102 = vpack.c.b16 %v969, %v968
  %v1103 = vpack.c.b16 %v971, %v970
  %v1104 = vpack.c.b16 %v973, %v972
  %v1105 = vpack.c.b16 %v975, %v974
  %v1106 = vpack.c.b16 %v977, %v976
  %v1107 = vpack.c.b16 %v979, %v978
  %1236 = vmatpush.bf16.msra.mxu0 %v987
  %1237 = vmatpush.bf16.msra.mxu0 %v986
  %1238 = vmatpush.bf16.msra.mxu0 %v985
  %1239 = vmatpush.bf16.msra.mxu0 %v984
  %1240 = vmatpush.bf16.msra.mxu0 %v983
  %1241 = vmatpush.bf16.msra.mxu0 %v982
  %1242 = vmatpush.bf16.msra.mxu0 %v981
  %1243 = vmatpush.bf16.msra.mxu0 %v980
  %1244 = vmatmul.bf16.gmra.mxu0 %v404
  %v1245 = vpop.f32.mrf.mxu0
  %v1246 = vadd.f32 0.0, %v1245
  %v1247 = vpop.f32.mrf.mxu0
  %v1248 = vadd.f32 0.0, %v1247
  %1249 = vmatmul.bf16.gmra.mxu0 %v420
  %v1250 = vpop.f32.mrf.mxu0
  %v1251 = vadd.f32 0.0, %v1250
  %v1252 = vpop.f32.mrf.mxu0
  %v1253 = vadd.f32 0.0, %v1252
  %1254 = vdwg.mxu0
  %1255 = vmatpush.bf16.msra.mxu0 %v995
  %1256 = vmatpush.bf16.msra.mxu0 %v994
  %1257 = vmatpush.bf16.msra.mxu0 %v993
  %1258 = vmatpush.bf16.msra.mxu0 %v992
  %1259 = vmatpush.bf16.msra.mxu0 %v991
  %1260 = vmatpush.bf16.msra.mxu0 %v990
  %1261 = vmatpush.bf16.msra.mxu0 %v989
  %1262 = vmatpush.bf16.msra.mxu0 %v988
  %1263 = vmatmul.bf16.gmra.mxu0 %v405
  %v1264 = vpop.f32.mrf.mxu0
  %v1265 = vadd.f32 %v1246, %v1264
  %v1266 = vpop.f32.mrf.mxu0
  %v1267 = vadd.f32 %v1248, %v1266
  %1268 = vmatmul.bf16.gmra.mxu0 %v421
  %v1269 = vpop.f32.mrf.mxu0
  %v1270 = vadd.f32 %v1251, %v1269
  %v1271 = vpop.f32.mrf.mxu0
  %v1272 = vadd.f32 %v1253, %v1271
  %1273 = vdwg.mxu0
  %1274 = vmatpush.bf16.msra.mxu0 %v1003
  %1275 = vmatpush.bf16.msra.mxu0 %v1002
  %1276 = vmatpush.bf16.msra.mxu0 %v1001
  %1277 = vmatpush.bf16.msra.mxu0 %v1000
  %1278 = vmatpush.bf16.msra.mxu0 %v999
  %1279 = vmatpush.bf16.msra.mxu0 %v998
  %1280 = vmatpush.bf16.msra.mxu0 %v997
  %1281 = vmatpush.bf16.msra.mxu0 %v996
  %1282 = vmatmul.bf16.gmra.mxu0 %v406
  %v1283 = vpop.f32.mrf.mxu0
  %v1284 = vadd.f32 %v1265, %v1283
  %v1285 = vpop.f32.mrf.mxu0
  %v1286 = vadd.f32 %v1267, %v1285
  %1287 = vmatmul.bf16.gmra.mxu0 %v422
  %v1288 = vpop.f32.mrf.mxu0
  %v1289 = vadd.f32 %v1270, %v1288
  %v1290 = vpop.f32.mrf.mxu0
  %v1291 = vadd.f32 %v1272, %v1290
  %1292 = vdwg.mxu0
  %1293 = vmatpush.bf16.msra.mxu0 %v1011
  %1294 = vmatpush.bf16.msra.mxu0 %v1010
  %1295 = vmatpush.bf16.msra.mxu0 %v1009
  %1296 = vmatpush.bf16.msra.mxu0 %v1008
  %1297 = vmatpush.bf16.msra.mxu0 %v1007
  %1298 = vmatpush.bf16.msra.mxu0 %v1006
  %1299 = vmatpush.bf16.msra.mxu0 %v1005
  %1300 = vmatpush.bf16.msra.mxu0 %v1004
  %1301 = vmatmul.bf16.gmra.mxu0 %v407
  %v1302 = vpop.f32.mrf.mxu0
  %v1303 = vadd.f32 %v1284, %v1302
  %v1304 = vpop.f32.mrf.mxu0
  %v1305 = vadd.f32 %v1286, %v1304
  %1306 = vmatmul.bf16.gmra.mxu0 %v423
  %v1307 = vpop.f32.mrf.mxu0
  %v1308 = vadd.f32 %v1289, %v1307
  %v1309 = vpop.f32.mrf.mxu0
  %v1310 = vadd.f32 %v1291, %v1309
  %1311 = vdwg.mxu0
  %1312 = vmatpush.bf16.msra.mxu0 %v1019
  %1313 = vmatpush.bf16.msra.mxu0 %v1018
  %1314 = vmatpush.bf16.msra.mxu0 %v1017
  %1315 = vmatpush.bf16.msra.mxu0 %v1016
  %1316 = vmatpush.bf16.msra.mxu0 %v1015
  %1317 = vmatpush.bf16.msra.mxu0 %v1014
  %1318 = vmatpush.bf16.msra.mxu0 %v1013
  %1319 = vmatpush.bf16.msra.mxu0 %v1012
  %1320 = vmatmul.bf16.gmra.mxu0 %v408
  %v1321 = vpop.f32.mrf.mxu0
  %v1322 = vadd.f32 %v1303, %v1321
  %v1323 = vpop.f32.mrf.mxu0
  %v1324 = vadd.f32 %v1305, %v1323
  %1325 = vmatmul.bf16.gmra.mxu0 %v424
  %v1326 = vpop.f32.mrf.mxu0
  %v1327 = vadd.f32 %v1308, %v1326
  %v1328 = vpop.f32.mrf.mxu0
  %v1329 = vadd.f32 %v1310, %v1328
  %1330 = vdwg.mxu0
  %1331 = vmatpush.bf16.msra.mxu0 %v1027
  %1332 = vmatpush.bf16.msra.mxu0 %v1026
  %1333 = vmatpush.bf16.msra.mxu0 %v1025
  %1334 = vmatpush.bf16.msra.mxu0 %v1024
  %1335 = vmatpush.bf16.msra.mxu0 %v1023
  %1336 = vmatpush.bf16.msra.mxu0 %v1022
  %1337 = vmatpush.bf16.msra.mxu0 %v1021
  %1338 = vmatpush.bf16.msra.mxu0 %v1020
  %1339 = vmatmul.bf16.gmra.mxu0 %v409
  %v1340 = vpop.f32.mrf.mxu0
  %v1341 = vadd.f32 %v1322, %v1340
  %v1342 = vpop.f32.mrf.mxu0
  %v1343 = vadd.f32 %v1324, %v1342
  %1344 = vmatmul.bf16.gmra.mxu0 %v425
  %v1345 = vpop.f32.mrf.mxu0
  %v1346 = vadd.f32 %v1327, %v1345
  %v1347 = vpop.f32.mrf.mxu0
  %v1348 = vadd.f32 %v1329, %v1347
  %1349 = vdwg.mxu0
  %1350 = vmatpush.bf16.msra.mxu0 %v1035
  %1351 = vmatpush.bf16.msra.mxu0 %v1034
  %1352 = vmatpush.bf16.msra.mxu0 %v1033
  %1353 = vmatpush.bf16.msra.mxu0 %v1032
  %1354 = vmatpush.bf16.msra.mxu0 %v1031
  %1355 = vmatpush.bf16.msra.mxu0 %v1030
  %1356 = vmatpush.bf16.msra.mxu0 %v1029
  %1357 = vmatpush.bf16.msra.mxu0 %v1028
  %1358 = vmatmul.bf16.gmra.mxu0 %v410
  %v1359 = vpop.f32.mrf.mxu0
  %v1360 = vadd.f32 %v1341, %v1359
  %v1361 = vpop.f32.mrf.mxu0
  %v1362 = vadd.f32 %v1343, %v1361
  %1363 = vmatmul.bf16.gmra.mxu0 %v426
  %v1364 = vpop.f32.mrf.mxu0
  %v1365 = vadd.f32 %v1346, %v1364
  %v1366 = vpop.f32.mrf.mxu0
  %v1367 = vadd.f32 %v1348, %v1366
  %1368 = vdwg.mxu0
  %1369 = vmatpush.bf16.msra.mxu0 %v1043
  %1370 = vmatpush.bf16.msra.mxu0 %v1042
  %1371 = vmatpush.bf16.msra.mxu0 %v1041
  %1372 = vmatpush.bf16.msra.mxu0 %v1040
  %1373 = vmatpush.bf16.msra.mxu0 %v1039
  %1374 = vmatpush.bf16.msra.mxu0 %v1038
  %1375 = vmatpush.bf16.msra.mxu0 %v1037
  %1376 = vmatpush.bf16.msra.mxu0 %v1036
  %1377 = vmatmul.bf16.gmra.mxu0 %v411
  %v1378 = vpop.f32.mrf.mxu0
  %v1379 = vadd.f32 %v1360, %v1378
  %v1380 = vpop.f32.mrf.mxu0
  %v1381 = vadd.f32 %v1362, %v1380
  %1382 = vmatmul.bf16.gmra.mxu0 %v427
  %v1383 = vpop.f32.mrf.mxu0
  %v1384 = vadd.f32 %v1365, %v1383
  %v1385 = vpop.f32.mrf.mxu0
  %v1386 = vadd.f32 %v1367, %v1385
  %1387 = vdwg.mxu0
  %1388 = vmatpush.bf16.msra.mxu0 %v1051
  %1389 = vmatpush.bf16.msra.mxu0 %v1050
  %1390 = vmatpush.bf16.msra.mxu0 %v1049
  %1391 = vmatpush.bf16.msra.mxu0 %v1048
  %1392 = vmatpush.bf16.msra.mxu0 %v1047
  %1393 = vmatpush.bf16.msra.mxu0 %v1046
  %1394 = vmatpush.bf16.msra.mxu0 %v1045
  %1395 = vmatpush.bf16.msra.mxu0 %v1044
  %1396 = vmatmul.bf16.gmra.mxu0 %v412
  %v1397 = vpop.f32.mrf.mxu0
  %v1398 = vadd.f32 %v1379, %v1397
  %v1399 = vpop.f32.mrf.mxu0
  %v1400 = vadd.f32 %v1381, %v1399
  %1401 = vmatmul.bf16.gmra.mxu0 %v428
  %v1402 = vpop.f32.mrf.mxu0
  %v1403 = vadd.f32 %v1384, %v1402
  %v1404 = vpop.f32.mrf.mxu0
  %v1405 = vadd.f32 %v1386, %v1404
  %1406 = vdwg.mxu0
  %1407 = vmatpush.bf16.msra.mxu0 %v1059
  %1408 = vmatpush.bf16.msra.mxu0 %v1058
  %1409 = vmatpush.bf16.msra.mxu0 %v1057
  %1410 = vmatpush.bf16.msra.mxu0 %v1056
  %1411 = vmatpush.bf16.msra.mxu0 %v1055
  %1412 = vmatpush.bf16.msra.mxu0 %v1054
  %1413 = vmatpush.bf16.msra.mxu0 %v1053
  %1414 = vmatpush.bf16.msra.mxu0 %v1052
  %1415 = vmatmul.bf16.gmra.mxu0 %v413
  %v1416 = vpop.f32.mrf.mxu0
  %v1417 = vadd.f32 %v1398, %v1416
  %v1418 = vpop.f32.mrf.mxu0
  %v1419 = vadd.f32 %v1400, %v1418
  %1420 = vmatmul.bf16.gmra.mxu0 %v429
  %v1421 = vpop.f32.mrf.mxu0
  %v1422 = vadd.f32 %v1403, %v1421
  %v1423 = vpop.f32.mrf.mxu0
  %v1424 = vadd.f32 %v1405, %v1423
  %1425 = vdwg.mxu0
  %1426 = vmatpush.bf16.msra.mxu0 %v1067
  %1427 = vmatpush.bf16.msra.mxu0 %v1066
  %1428 = vmatpush.bf16.msra.mxu0 %v1065
  %1429 = vmatpush.bf16.msra.mxu0 %v1064
  %1430 = vmatpush.bf16.msra.mxu0 %v1063
  %1431 = vmatpush.bf16.msra.mxu0 %v1062
  %1432 = vmatpush.bf16.msra.mxu0 %v1061
  %1433 = vmatpush.bf16.msra.mxu0 %v1060
  %1434 = vmatmul.bf16.gmra.mxu0 %v414
  %v1435 = vpop.f32.mrf.mxu0
  %v1436 = vadd.f32 %v1417, %v1435
  %v1437 = vpop.f32.mrf.mxu0
  %v1438 = vadd.f32 %v1419, %v1437
  %1439 = vmatmul.bf16.gmra.mxu0 %v430
  %v1440 = vpop.f32.mrf.mxu0
  %v1441 = vadd.f32 %v1422, %v1440
  %v1442 = vpop.f32.mrf.mxu0
  %v1443 = vadd.f32 %v1424, %v1442
  %1444 = vdwg.mxu0
  %1445 = vmatpush.bf16.msra.mxu0 %v1075
  %1446 = vmatpush.bf16.msra.mxu0 %v1074
  %1447 = vmatpush.bf16.msra.mxu0 %v1073
  %1448 = vmatpush.bf16.msra.mxu0 %v1072
  %1449 = vmatpush.bf16.msra.mxu0 %v1071
  %1450 = vmatpush.bf16.msra.mxu0 %v1070
  %1451 = vmatpush.bf16.msra.mxu0 %v1069
  %1452 = vmatpush.bf16.msra.mxu0 %v1068
  %1453 = vmatmul.bf16.gmra.mxu0 %v415
  %v1454 = vpop.f32.mrf.mxu0
  %v1455 = vadd.f32 %v1436, %v1454
  %v1456 = vpop.f32.mrf.mxu0
  %v1457 = vadd.f32 %v1438, %v1456
  %1458 = vmatmul.bf16.gmra.mxu0 %v431
  %v1459 = vpop.f32.mrf.mxu0
  %v1460 = vadd.f32 %v1441, %v1459
  %v1461 = vpop.f32.mrf.mxu0
  %v1462 = vadd.f32 %v1443, %v1461
  %1463 = vdwg.mxu0
  %1464 = vmatpush.bf16.msra.mxu0 %v1083
  %1465 = vmatpush.bf16.msra.mxu0 %v1082
  %1466 = vmatpush.bf16.msra.mxu0 %v1081
  %1467 = vmatpush.bf16.msra.mxu0 %v1080
  %1468 = vmatpush.bf16.msra.mxu0 %v1079
  %1469 = vmatpush.bf16.msra.mxu0 %v1078
  %1470 = vmatpush.bf16.msra.mxu0 %v1077
  %1471 = vmatpush.bf16.msra.mxu0 %v1076
  %1472 = vmatmul.bf16.gmra.mxu0 %v416
  %v1473 = vpop.f32.mrf.mxu0
  %v1474 = vadd.f32 %v1455, %v1473
  %v1475 = vpop.f32.mrf.mxu0
  %v1476 = vadd.f32 %v1457, %v1475
  %1477 = vmatmul.bf16.gmra.mxu0 %v432
  %v1478 = vpop.f32.mrf.mxu0
  %v1479 = vadd.f32 %v1460, %v1478
  %v1480 = vpop.f32.mrf.mxu0
  %v1481 = vadd.f32 %v1462, %v1480
  %1482 = vdwg.mxu0
  %1483 = vmatpush.bf16.msra.mxu0 %v1091
  %1484 = vmatpush.bf16.msra.mxu0 %v1090
  %1485 = vmatpush.bf16.msra.mxu0 %v1089
  %1486 = vmatpush.bf16.msra.mxu0 %v1088
  %1487 = vmatpush.bf16.msra.mxu0 %v1087
  %1488 = vmatpush.bf16.msra.mxu0 %v1086
  %1489 = vmatpush.bf16.msra.mxu0 %v1085
  %1490 = vmatpush.bf16.msra.mxu0 %v1084
  %1491 = vmatmul.bf16.gmra.mxu0 %v417
  %v1492 = vpop.f32.mrf.mxu0
  %v1493 = vadd.f32 %v1474, %v1492
  %v1494 = vpop.f32.mrf.mxu0
  %v1495 = vadd.f32 %v1476, %v1494
  %1496 = vmatmul.bf16.gmra.mxu0 %v433
  %v1497 = vpop.f32.mrf.mxu0
  %v1498 = vadd.f32 %v1479, %v1497
  %v1499 = vpop.f32.mrf.mxu0
  %v1500 = vadd.f32 %v1481, %v1499
  %1501 = vdwg.mxu0
  %1502 = vmatpush.bf16.msra.mxu0 %v1099
  %1503 = vmatpush.bf16.msra.mxu0 %v1098
  %1504 = vmatpush.bf16.msra.mxu0 %v1097
  %1505 = vmatpush.bf16.msra.mxu0 %v1096
  %1506 = vmatpush.bf16.msra.mxu0 %v1095
  %1507 = vmatpush.bf16.msra.mxu0 %v1094
  %1508 = vmatpush.bf16.msra.mxu0 %v1093
  %1509 = vmatpush.bf16.msra.mxu0 %v1092
  %1510 = vmatmul.bf16.gmra.mxu0 %v418
  %v1511 = vpop.f32.mrf.mxu0
  %v1512 = vadd.f32 %v1493, %v1511
  %v1513 = vpop.f32.mrf.mxu0
  %v1514 = vadd.f32 %v1495, %v1513
  %1515 = vmatmul.bf16.gmra.mxu0 %v434
  %v1516 = vpop.f32.mrf.mxu0
  %v1517 = vadd.f32 %v1498, %v1516
  %v1518 = vpop.f32.mrf.mxu0
  %v1519 = vadd.f32 %v1500, %v1518
  %1520 = vdwg.mxu0
  %1521 = vmatpush.bf16.msra.mxu0 %v1107
  %1522 = vmatpush.bf16.msra.mxu0 %v1106
  %1523 = vmatpush.bf16.msra.mxu0 %v1105
  %1524 = vmatpush.bf16.msra.mxu0 %v1104
  %1525 = vmatpush.bf16.msra.mxu0 %v1103
  %1526 = vmatpush.bf16.msra.mxu0 %v1102
  %1527 = vmatpush.bf16.msra.mxu0 %v1101
  %1528 = vmatpush.bf16.msra.mxu0 %v1100
  %1529 = vmatmul.bf16.gmra.mxu0 %v419
  %v1530 = vpop.f32.mrf.mxu0
  %v1531 = vadd.f32 %v1512, %v1530
  %v1532 = vpop.f32.mrf.mxu0
  %v1533 = vadd.f32 %v1514, %v1532
  %1534 = vmatmul.bf16.gmra.mxu0 %v435
  %v1535 = vpop.f32.mrf.mxu0
  %v1536 = vadd.f32 %v1517, %v1535
  %v1537 = vpop.f32.mrf.mxu0
  %v1538 = vadd.f32 %v1519, %v1537
  %1539 = vdwg.mxu0
  %1540 = vst [vmem:[%s2] sm:$0xff] %v1531
  %1541 = vst [vmem:[%s2 + $0x8] sm:$0xff] %v1533
  %1542 = vst [vmem:[%s2 + $0x10] sm:$0xff] %v1536
  %1543 = vst [vmem:[%s2 + $0x18] sm:$0xff] %v1538
  %v1544 = vld [vmem:[%s3] sm:$0x1]
  %v1545 = vadd.f32 %v1531, %v1533
  %v1546 = vadd.f32 %v1545, %v1536
  %v1547 = vadd.f32 %v1546, %v1538
  %v1548 = vrot.slane %v1547, 4
  %v1549 = vadd.f32 %v1547, %v1548
  %v1550 = vrot.slane %v1549, 2
  %v1551 = vadd.f32 %v1549, %v1550
  %v1552 = vrot.slane %v1551, 1
  %v1553 = vadd.f32 %v1551, %v1552
  %v1554 = vadd.f32 %v1544, %v1553
  %1555 = vst [vmem:[%s3] sm:$0x1] %v1554
  %v1556 = vld [vmem:[%s4] sm:$0x1]
  %v1557 = vmul.f32 %v1531, %v1531
  %v1558 = vmul.f32 %v1533, %v1533
  %v1559 = vmul.f32 %v1536, %v1536
  %v1560 = vmul.f32 %v1538, %v1538
  %v1561 = vadd.f32 %v1557, %v1558
  %v1562 = vadd.f32 %v1561, %v1559
  %v1563 = vadd.f32 %v1562, %v1560
  %v1564 = vrot.slane %v1563, 4
  %v1565 = vadd.f32 %v1563, %v1564
  %v1566 = vrot.slane %v1565, 2
  %v1567 = vadd.f32 %v1565, %v1566
  %v1568 = vrot.slane %v1567, 1
  %v1569 = vadd.f32 %v1567, %v1568
  %v1570 = vadd.f32 %v1556, %v1569
  %1571 = vst [vmem:[%s4] sm:$0x1] %v1570
  // Predicated region
  $region14: #{patch_image_discriminator.9} parent=0 // pred_check
    _
  $region15: #{patch_image_discriminator.9} parent=0 // pred_check_branch
    %1573 = sbr.rel (0) target = $region17
  $region16: #{patch_image_discriminator.9} parent=0 // pred_region
    _
  $region17: #{patch_image_discriminator.9} parent=0 // pred_fallthru
    _
  // Predicated region
  $region18: #{patch_image_discriminator.9} parent=0 // pred_check
    _
  $region19: #{patch_image_discriminator.9} parent=0 // pred_check_branch
    %1575 = sbr.rel (0) target = $region21
  $region20: #{patch_image_discriminator.9} parent=0 // pred_region
    _
  $region21: #{patch_image_discriminator.9} parent=0 // pred_fallthru
    _
  // Predicated region
  $region22: #{patch_image_discriminator.9} parent=0 // pred_check
    _
  $region23: #{patch_image_discriminator.9} parent=0 // pred_check_branch
    %1577 = sbr.rel (0) target = $region25
  $region24: #{patch_image_discriminator.9} parent=0 // pred_region
    _
  $region25: #{patch_image_discriminator.9} parent=0 // pred_fallthru
    _
  // Predicated region
  $region26: #{patch_image_discriminator.9} parent=0 // pred_check
    _
  $region27: #{patch_image_discriminator.9} parent=0 // pred_check_branch
    %1579 = sbr.rel (0) target = $region29
  $region28: #{patch_image_discriminator.9} parent=0 // pred_region
    _
  $region29: #{patch_image_discriminator.9} parent=0 // pred_fallthru
    _
  // Predicated region
  $region30: #{patch_image_discriminator.9} parent=0 // pred_check
    _
  $region31: #{patch_image_discriminator.9} parent=0 // pred_check_branch
    %1581 = sbr.rel (0) target = $region33
  $region32: #{patch_image_discriminator.9} parent=0 // pred_region
    _
  $region33: #{patch_image_discriminator.9} parent=0 // pred_fallthru
    _
  // Predicated region
  $region34: #{patch_image_discriminator.9} parent=0 // pred_check
    _
  $region35: #{patch_image_discriminator.9} parent=0 // pred_check_branch
    %1583 = sbr.rel (0) target = $region37
  $region36: #{patch_image_discriminator.9} parent=0 // pred_region
    _
  $region37: #{patch_image_discriminator.9} parent=0 // pred_fallthru
    _

// kernel: patch_image_discriminator.11
$region0: #{patch_image_discriminator.11}
  #allocation0 [shape = 'u32[]', space=smem, size = 0x4, offset = 0x4, fixed_abs, tag = 'smem constant byte address 0x4 - core index']
  #allocation1 [shape = 'u32[72,128]{1,0:T(1,128)}', space=vmem, size = 0x9000, scoped, tag = 'internal scratch']
  %s0 = inlined_call_operand.vmem [shape: bf16[8,2048], index: 0, kind: input, shape index: {}]
  %s1 = inlined_call_operand.vmem [shape: bf16[2048,128], index: 1, kind: input, shape index: {}]
  %s2 = inlined_call_operand.vmem [shape: f32[8,128], index: 2, kind: output, shape index: {}]
  %s3 = sld [smem:[#allocation0]]
  $region18: #{patch_image_discriminator.11} parent=0
    _
  %s5 = ssub.s32 1, %s3
  %s6 = scalar_select 0, %s5, %s3
  // Predicated region
  $region2: #{patch_image_discriminator.11} parent=0 // pred_check
    _
  $region3: #{patch_image_discriminator.11} parent=0 // pred_check_branch
    %8 = sbr.rel (0) target = $region5
  $region4: #{patch_image_discriminator.11} parent=0 // pred_region
    _
  $region5: #{patch_image_discriminator.11} parent=0 // pred_fallthru
    _
  // Predicated region
  $region6: #{patch_image_discriminator.11} parent=0 // pred_check
    _
  $region7: #{patch_image_discriminator.11} parent=0 // pred_check_branch
    %10 = sbr.rel (0) target = $region9
  $region8: #{patch_image_discriminator.11} parent=0 // pred_region
    _
  $region9: #{patch_image_discriminator.11} parent=0 // pred_fallthru
    _
  %v11 = vld [vmem:[%s0] sm:$0xff]
  %v12 = vld [vmem:[%s0 + $0x8] sm:$0xff]
  %v13 = vld [vmem:[%s0 + $0x10] sm:$0xff]
  %v14 = vld [vmem:[%s0 + $0x18] sm:$0xff]
  %v15 = vld [vmem:[%s0 + $0x20] sm:$0xff]
  %v16 = vld [vmem:[%s0 + $0x28] sm:$0xff]
  %v17 = vld [vmem:[%s0 + $0x30] sm:$0xff]
  %v18 = vld [vmem:[%s0 + $0x38] sm:$0xff]
  %v19 = vld [vmem:[%s1] sm:$0xf]
  %v20 = vld [vmem:[%s1 + $0x4] sm:$0xf]
  %v21 = vld [vmem:[%s1 + $0x8] sm:$0xf]
  %v22 = vld [vmem:[%s1 + $0xc] sm:$0xf]
  %v23 = vld [vmem:[%s1 + $0x10] sm:$0xf]
  %v24 = vld [vmem:[%s1 + $0x14] sm:$0xf]
  %v25 = vld [vmem:[%s1 + $0x18] sm:$0xf]
  %v26 = vld [vmem:[%s1 + $0x1c] sm:$0xf]
  %v27 = vld [vmem:[%s1 + $0x20] sm:$0xf]
  %v28 = vld [vmem:[%s1 + $0x24] sm:$0xf]
  %v29 = vld [vmem:[%s1 + $0x28] sm:$0xf]
  %v30 = vld [vmem:[%s1 + $0x2c] sm:$0xf]
  %v31 = vld [vmem:[%s1 + $0x30] sm:$0xf]
  %v32 = vld [vmem:[%s1 + $0x34] sm:$0xf]
  %v33 = vld [vmem:[%s1 + $0x38] sm:$0xf]
  %v34 = vld [vmem:[%s1 + $0x3c] sm:$0xf]
  %v35 = vld [vmem:[%s1 + $0x40] sm:$0xf]
  %v36 = vld [vmem:[%s1 + $0x44] sm:$0xf]
  %v37 = vld [vmem:[%s1 + $0x48] sm:$0xf]
  %v38 = vld [vmem:[%s1 + $0x4c] sm:$0xf]
  %v39 = vld [vmem:[%s1 + $0x50] sm:$0xf]
  %v40 = vld [vmem:[%s1 + $0x54] sm:$0xf]
  %v41 = vld [vmem:[%s1 + $0x58] sm:$0xf]
  %v42 = vld [vmem:[%s1 + $0x5c] sm:$0xf]
  %v43 = vld [vmem:[%s1 + $0x60] sm:$0xf]
  %v44 = vld [vmem:[%s1 + $0x64] sm:$0xf]
  %v45 = vld [vmem:[%s1 + $0x68] sm:$0xf]
  %v46 = vld [vmem:[%s1 + $0x6c] sm:$0xf]
  %v47 = vld [vmem:[%s1 + $0x70] sm:$0xf]
  %v48 = vld [vmem:[%s1 + $0x74] sm:$0xf]
  %v49 = vld [vmem:[%s1 + $0x78] sm:$0xf]
  %v50 = vld [vmem:[%s1 + $0x7c] sm:$0xf]
  %v51 = vld [vmem:[%s1 + $0x80] sm:$0xf]
  %v52 = vld [vmem:[%s1 + $0x84] sm:$0xf]
  %v53 = vld [vmem:[%s1 + $0x88] sm:$0xf]
  %v54 = vld [vmem:[%s1 + $0x8c] sm:$0xf]
  %v55 = vld [vmem:[%s1 + $0x90] sm:$0xf]
  %v56 = vld [vmem:[%s1 + $0x94] sm:$0xf]
  %v57 = vld [vmem:[%s1 + $0x98] sm:$0xf]
  %v58 = vld [vmem:[%s1 + $0x9c] sm:$0xf]
  %v59 = vld [vmem:[%s1 + $0xa0] sm:$0xf]
  %v60 = vld [vmem:[%s1 + $0xa4] sm:$0xf]
  %v61 = vld [vmem:[%s1 + $0xa8] sm:$0xf]
  %v62 = vld [vmem:[%s1 + $0xac] sm:$0xf]
  %v63 = vld [vmem:[%s1 + $0xb0] sm:$0xf]
  %v64 = vld [vmem:[%s1 + $0xb4] sm:$0xf]
  %v65 = vld [vmem:[%s1 + $0xb8] sm:$0xf]
  %v66 = vld [vmem:[%s1 + $0xbc] sm:$0xf]
  %v67 = vld [vmem:[%s1 + $0xc0] sm:$0xf]
  %v68 = vld [vmem:[%s1 + $0xc4] sm:$0xf]
  %v69 = vld [vmem:[%s1 + $0xc8] sm:$0xf]
  %v70 = vld [vmem:[%s1 + $0xcc] sm:$0xf]
  %v71 = vld [vmem:[%s1 + $0xd0] sm:$0xf]
  %v72 = vld [vmem:[%s1 + $0xd4] sm:$0xf]
  %v73 = vld [vmem:[%s1 + $0xd8] sm:$0xf]
  %v74 = vld [vmem:[%s1 + $0xdc] sm:$0xf]
  %v75 = vld [vmem:[%s1 + $0xe0] sm:$0xf]
  %v76 = vld [vmem:[%s1 + $0xe4] sm:$0xf]
  %v77 = vld [vmem:[%s1 + $0xe8] sm:$0xf]
  %v78 = vld [vmem:[%s1 + $0xec] sm:$0xf]
  %v79 = vld [vmem:[%s1 + $0xf0] sm:$0xf]
  %v80 = vld [vmem:[%s1 + $0xf4] sm:$0xf]
  %v81 = vld [vmem:[%s1 + $0xf8] sm:$0xf]
  %v82 = vld [vmem:[%s1 + $0xfc] sm:$0xf]
  %v83 = vld [vmem:[%s1 + $0x100] sm:$0xf]
  %v84 = vld [vmem:[%s1 + $0x104] sm:$0xf]
  %v85 = vld [vmem:[%s1 + $0x108] sm:$0xf]
  %v86 = vld [vmem:[%s1 + $0x10c] sm:$0xf]
  %v87 = vld [vmem:[%s1 + $0x110] sm:$0xf]
  %v88 = vld [vmem:[%s1 + $0x114] sm:$0xf]
  %v89 = vld [vmem:[%s1 + $0x118] sm:$0xf]
  %v90 = vld [vmem:[%s1 + $0x11c] sm:$0xf]
  %v91 = vld [vmem:[%s1 + $0x120] sm:$0xf]
  %v92 = vld [vmem:[%s1 + $0x124] sm:$0xf]
  %v93 = vld [vmem:[%s1 + $0x128] sm:$0xf]
  %v94 = vld [vmem:[%s1 + $0x12c] sm:$0xf]
  %v95 = vld [vmem:[%s1 + $0x130] sm:$0xf]
  %v96 = vld [vmem:[%s1 + $0x134] sm:$0xf]
  %v97 = vld [vmem:[%s1 + $0x138] sm:$0xf]
  %v98 = vld [vmem:[%s1 + $0x13c] sm:$0xf]
  %v99 = vld [vmem:[%s1 + $0x140] sm:$0xf]
  %v100 = vld [vmem:[%s1 + $0x144] sm:$0xf]
  %v101 = vld [vmem:[%s1 + $0x148] sm:$0xf]
  %v102 = vld [vmem:[%s1 + $0x14c] sm:$0xf]
  %v103 = vld [vmem:[%s1 + $0x150] sm:$0xf]
  %v104 = vld [vmem:[%s1 + $0x154] sm:$0xf]
  %v105 = vld [vmem:[%s1 + $0x158] sm:$0xf]
  %v106 = vld [vmem:[%s1 + $0x15c] sm:$0xf]
  %v107 = vld [vmem:[%s1 + $0x160] sm:$0xf]
  %v108 = vld [vmem:[%s1 + $0x164] sm:$0xf]
  %v109 = vld [vmem:[%s1 + $0x168] sm:$0xf]
  %v110 = vld [vmem:[%s1 + $0x16c] sm:$0xf]
  %v111 = vld [vmem:[%s1 + $0x170] sm:$0xf]
  %v112 = vld [vmem:[%s1 + $0x174] sm:$0xf]
  %v113 = vld [vmem:[%s1 + $0x178] sm:$0xf]
  %v114 = vld [vmem:[%s1 + $0x17c] sm:$0xf]
  %v115 = vld [vmem:[%s1 + $0x180] sm:$0xf]
  %v116 = vld [vmem:[%s1 + $0x184] sm:$0xf]
  %v117 = vld [vmem:[%s1 + $0x188] sm:$0xf]
  %v118 = vld [vmem:[%s1 + $0x18c] sm:$0xf]
  %v119 = vld [vmem:[%s1 + $0x190] sm:$0xf]
  %v120 = vld [vmem:[%s1 + $0x194] sm:$0xf]
  %v121 = vld [vmem:[%s1 + $0x198] sm:$0xf]
  %v122 = vld [vmem:[%s1 + $0x19c] sm:$0xf]
  %v123 = vld [vmem:[%s1 + $0x1a0] sm:$0xf]
  %v124 = vld [vmem:[%s1 + $0x1a4] sm:$0xf]
  %v125 = vld [vmem:[%s1 + $0x1a8] sm:$0xf]
  %v126 = vld [vmem:[%s1 + $0x1ac] sm:$0xf]
  %v127 = vld [vmem:[%s1 + $0x1b0] sm:$0xf]
  %v128 = vld [vmem:[%s1 + $0x1b4] sm:$0xf]
  %v129 = vld [vmem:[%s1 + $0x1b8] sm:$0xf]
  %v130 = vld [vmem:[%s1 + $0x1bc] sm:$0xf]
  %v131 = vld [vmem:[%s1 + $0x1c0] sm:$0xf]
  %v132 = vld [vmem:[%s1 + $0x1c4] sm:$0xf]
  %v133 = vld [vmem:[%s1 + $0x1c8] sm:$0xf]
  %v134 = vld [vmem:[%s1 + $0x1cc] sm:$0xf]
  %v135 = vld [vmem:[%s1 + $0x1d0] sm:$0xf]
  %v136 = vld [vmem:[%s1 + $0x1d4] sm:$0xf]
  %v137 = vld [vmem:[%s1 + $0x1d8] sm:$0xf]
  %v138 = vld [vmem:[%s1 + $0x1dc] sm:$0xf]
  %v139 = vld [vmem:[%s1 + $0x1e0] sm:$0xf]
  %v140 = vld [vmem:[%s1 + $0x1e4] sm:$0xf]
  %v141 = vld [vmem:[%s1 + $0x1e8] sm:$0xf]
  %v142 = vld [vmem:[%s1 + $0x1ec] sm:$0xf]
  %v143 = vld [vmem:[%s1 + $0x1f0] sm:$0xf]
  %v144 = vld [vmem:[%s1 + $0x1f4] sm:$0xf]
  %v145 = vld [vmem:[%s1 + $0x1f8] sm:$0xf]
  %v146 = vld [vmem:[%s1 + $0x1fc] sm:$0xf]
  %v147 = vld [vmem:[%s1 + $0x200] sm:$0xf]
  %v148 = vld [vmem:[%s1 + $0x204] sm:$0xf]
  %v149 = vld [vmem:[%s1 + $0x208] sm:$0xf]
  %v150 = vld [vmem:[%s1 + $0x20c] sm:$0xf]
  %v151 = vld [vmem:[%s1 + $0x210] sm:$0xf]
  %v152 = vld [vmem:[%s1 + $0x214] sm:$0xf]
  %v153 = vld [vmem:[%s1 + $0x218] sm:$0xf]
  %v154 = vld [vmem:[%s1 + $0x21c] sm:$0xf]
  %v155 = vld [vmem:[%s1 + $0x220] sm:$0xf]
  %v156 = vld [vmem:[%s1 + $0x224] sm:$0xf]
  %v157 = vld [vmem:[%s1 + $0x228] sm:$0xf]
  %v158 = vld [vmem:[%s1 + $0x22c] sm:$0xf]
  %v159 = vld [vmem:[%s1 + $0x230] sm:$0xf]
  %v160 = vld [vmem:[%s1 + $0x234] sm:$0xf]
  %v161 = vld [vmem:[%s1 + $0x238] sm:$0xf]
  %v162 = vld [vmem:[%s1 + $0x23c] sm:$0xf]
  %v163 = vld [vmem:[%s1 + $0x240] sm:$0xf]
  %v164 = vld [vmem:[%s1 + $0x244] sm:$0xf]
  %v165 = vld [vmem:[%s1 + $0x248] sm:$0xf]
  %v166 = vld [vmem:[%s1 + $0x24c] sm:$0xf]
  %v167 = vld [vmem:[%s1 + $0x250] sm:$0xf]
  %v168 = vld [vmem:[%s1 + $0x254] sm:$0xf]
  %v169 = vld [vmem:[%s1 + $0x258] sm:$0xf]
  %v170 = vld [vmem:[%s1 + $0x25c] sm:$0xf]
  %v171 = vld [vmem:[%s1 + $0x260] sm:$0xf]
  %v172 = vld [vmem:[%s1 + $0x264] sm:$0xf]
  %v173 = vld [vmem:[%s1 + $0x268] sm:$0xf]
  %v174 = vld [vmem:[%s1 + $0x26c] sm:$0xf]
  %v175 = vld [vmem:[%s1 + $0x270] sm:$0xf]
  %v176 = vld [vmem:[%s1 + $0x274] sm:$0xf]
  %v177 = vld [vmem:[%s1 + $0x278] sm:$0xf]
  %v178 = vld [vmem:[%s1 + $0x27c] sm:$0xf]
  %v179 = vld [vmem:[%s1 + $0x280] sm:$0xf]
  %v180 = vld [vmem:[%s1 + $0x284] sm:$0xf]
  %v181 = vld [vmem:[%s1 + $0x288] sm:$0xf]
  %v182 = vld [vmem:[%s1 + $0x28c] sm:$0xf]
  %v183 = vld [vmem:[%s1 + $0x290] sm:$0xf]
  %v184 = vld [vmem:[%s1 + $0x294] sm:$0xf]
  %v185 = vld [vmem:[%s1 + $0x298] sm:$0xf]
  %v186 = vld [vmem:[%s1 + $0x29c] sm:$0xf]
  %v187 = vld [vmem:[%s1 + $0x2a0] sm:$0xf]
  %v188 = vld [vmem:[%s1 + $0x2a4] sm:$0xf]
  %v189 = vld [vmem:[%s1 + $0x2a8] sm:$0xf]
  %v190 = vld [vmem:[%s1 + $0x2ac] sm:$0xf]
  %v191 = vld [vmem:[%s1 + $0x2b0] sm:$0xf]
  %v192 = vld [vmem:[%s1 + $0x2b4] sm:$0xf]
  %v193 = vld [vmem:[%s1 + $0x2b8] sm:$0xf]
  %v194 = vld [vmem:[%s1 + $0x2bc] sm:$0xf]
  %v195 = vld [vmem:[%s1 + $0x2c0] sm:$0xf]
  %v196 = vld [vmem:[%s1 + $0x2c4] sm:$0xf]
  %v197 = vld [vmem:[%s1 + $0x2c8] sm:$0xf]
  %v198 = vld [vmem:[%s1 + $0x2cc] sm:$0xf]
  %v199 = vld [vmem:[%s1 + $0x2d0] sm:$0xf]
  %v200 = vld [vmem:[%s1 + $0x2d4] sm:$0xf]
  %v201 = vld [vmem:[%s1 + $0x2d8] sm:$0xf]
  %v202 = vld [vmem:[%s1 + $0x2dc] sm:$0xf]
  %v203 = vld [vmem:[%s1 + $0x2e0] sm:$0xf]
  %v204 = vld [vmem:[%s1 + $0x2e4] sm:$0xf]
  %v205 = vld [vmem:[%s1 + $0x2e8] sm:$0xf]
  %v206 = vld [vmem:[%s1 + $0x2ec] sm:$0xf]
  %v207 = vld [vmem:[%s1 + $0x2f0] sm:$0xf]
  %v208 = vld [vmem:[%s1 + $0x2f4] sm:$0xf]
  %v209 = vld [vmem:[%s1 + $0x2f8] sm:$0xf]
  %v210 = vld [vmem:[%s1 + $0x2fc] sm:$0xf]
  %v211 = vld [vmem:[%s1 + $0x300] sm:$0xf]
  %v212 = vld [vmem:[%s1 + $0x304] sm:$0xf]
  %v213 = vld [vmem:[%s1 + $0x308] sm:$0xf]
  %v214 = vld [vmem:[%s1 + $0x30c] sm:$0xf]
  %v215 = vld [vmem:[%s1 + $0x310] sm:$0xf]
  %v216 = vld [vmem:[%s1 + $0x314] sm:$0xf]
  %v217 = vld [vmem:[%s1 + $0x318] sm:$0xf]
  %v218 = vld [vmem:[%s1 + $0x31c] sm:$0xf]
  %v219 = vld [vmem:[%s1 + $0x320] sm:$0xf]
  %v220 = vld [vmem:[%s1 + $0x324] sm:$0xf]
  %v221 = vld [vmem:[%s1 + $0x328] sm:$0xf]
  %v222 = vld [vmem:[%s1 + $0x32c] sm:$0xf]
  %v223 = vld [vmem:[%s1 + $0x330] sm:$0xf]
  %v224 = vld [vmem:[%s1 + $0x334] sm:$0xf]
  %v225 = vld [vmem:[%s1 + $0x338] sm:$0xf]
  %v226 = vld [vmem:[%s1 + $0x33c] sm:$0xf]
  %v227 = vld [vmem:[%s1 + $0x340] sm:$0xf]
  %v228 = vld [vmem:[%s1 + $0x344] sm:$0xf]
  %v229 = vld [vmem:[%s1 + $0x348] sm:$0xf]
  %v230 = vld [vmem:[%s1 + $0x34c] sm:$0xf]
  %v231 = vld [vmem:[%s1 + $0x350] sm:$0xf]
  %v232 = vld [vmem:[%s1 + $0x354] sm:$0xf]
  %v233 = vld [vmem:[%s1 + $0x358] sm:$0xf]
  %v234 = vld [vmem:[%s1 + $0x35c] sm:$0xf]
  %v235 = vld [vmem:[%s1 + $0x360] sm:$0xf]
  %v236 = vld [vmem:[%s1 + $0x364] sm:$0xf]
  %v237 = vld [vmem:[%s1 + $0x368] sm:$0xf]
  %v238 = vld [vmem:[%s1 + $0x36c] sm:$0xf]
  %v239 = vld [vmem:[%s1 + $0x370] sm:$0xf]
  %v240 = vld [vmem:[%s1 + $0x374] sm:$0xf]
  %v241 = vld [vmem:[%s1 + $0x378] sm:$0xf]
  %v242 = vld [vmem:[%s1 + $0x37c] sm:$0xf]
  %v243 = vld [vmem:[%s1 + $0x380] sm:$0xf]
  %v244 = vld [vmem:[%s1 + $0x384] sm:$0xf]
  %v245 = vld [vmem:[%s1 + $0x388] sm:$0xf]
  %v246 = vld [vmem:[%s1 + $0x38c] sm:$0xf]
  %v247 = vld [vmem:[%s1 + $0x390] sm:$0xf]
  %v248 = vld [vmem:[%s1 + $0x394] sm:$0xf]
  %v249 = vld [vmem:[%s1 + $0x398] sm:$0xf]
  %v250 = vld [vmem:[%s1 + $0x39c] sm:$0xf]
  %v251 = vld [vmem:[%s1 + $0x3a0] sm:$0xf]
  %v252 = vld [vmem:[%s1 + $0x3a4] sm:$0xf]
  %v253 = vld [vmem:[%s1 + $0x3a8] sm:$0xf]
  %v254 = vld [vmem:[%s1 + $0x3ac] sm:$0xf]
  %v255 = vld [vmem:[%s1 + $0x3b0] sm:$0xf]
  %v256 = vld [vmem:[%s1 + $0x3b4] sm:$0xf]
  %v257 = vld [vmem:[%s1 + $0x3b8] sm:$0xf]
  %v258 = vld [vmem:[%s1 + $0x3bc] sm:$0xf]
  %v259 = vld [vmem:[%s1 + $0x3c0] sm:$0xf]
  %v260 = vld [vmem:[%s1 + $0x3c4] sm:$0xf]
  %v261 = vld [vmem:[%s1 + $0x3c8] sm:$0xf]
  %v262 = vld [vmem:[%s1 + $0x3cc] sm:$0xf]
  %v263 = vld [vmem:[%s1 + $0x3d0] sm:$0xf]
  %v264 = vld [vmem:[%s1 + $0x3d4] sm:$0xf]
  %v265 = vld [vmem:[%s1 + $0x3d8] sm:$0xf]
  %v266 = vld [vmem:[%s1 + $0x3dc] sm:$0xf]
  %v267 = vld [vmem:[%s1 + $0x3e0] sm:$0xf]
  %v268 = vld [vmem:[%s1 + $0x3e4] sm:$0xf]
  %v269 = vld [vmem:[%s1 + $0x3e8] sm:$0xf]
  %v270 = vld [vmem:[%s1 + $0x3ec] sm:$0xf]
  %v271 = vld [vmem:[%s1 + $0x3f0] sm:$0xf]
  %v272 = vld [vmem:[%s1 + $0x3f4] sm:$0xf]
  %v273 = vld [vmem:[%s1 + $0x3f8] sm:$0xf]
  %v274 = vld [vmem:[%s1 + $0x3fc] sm:$0xf]
  %v283 = vunpack.c.l.b16 %v11
  %v284 = vunpack.c.h.b16 %v11
  %v285 = vunpack.c.l.b16 %v12
  %v286 = vunpack.c.h.b16 %v12
  %v287 = vunpack.c.l.b16 %v13
  %v288 = vunpack.c.h.b16 %v13
  %v289 = vunpack.c.l.b16 %v14
  %v290 = vunpack.c.h.b16 %v14
  %v291 = vunpack.c.l.b16 %v15
  %v292 = vunpack.c.h.b16 %v15
  %v293 = vunpack.c.l.b16 %v16
  %v294 = vunpack.c.h.b16 %v16
  %v295 = vunpack.c.l.b16 %v17
  %v296 = vunpack.c.h.b16 %v17
  %v297 = vunpack.c.l.b16 %v18
  %v298 = vunpack.c.h.b16 %v18
  %v299 = vpack.c.b16 %v283, %v283
  %v300 = vpack.c.b16 %v284, %v284
  %v301 = vpack.c.b16 %v285, %v285
  %v302 = vpack.c.b16 %v286, %v286
  %v303 = vpack.c.b16 %v287, %v287
  %v304 = vpack.c.b16 %v288, %v288
  %v305 = vpack.c.b16 %v289, %v289
  %v306 = vpack.c.b16 %v290, %v290
  %v307 = vpack.c.b16 %v291, %v291
  %v308 = vpack.c.b16 %v292, %v292
  %v309 = vpack.c.b16 %v293, %v293
  %v310 = vpack.c.b16 %v294, %v294
  %v311 = vpack.c.b16 %v295, %v295
  %v312 = vpack.c.b16 %v296, %v296
  %v313 = vpack.c.b16 %v297, %v297
  %v314 = vpack.c.b16 %v298, %v298
  %v587 = vunpack.c.l.b16 %v19
  %v588 = vunpack.c.l.b16 %v20
  %v589 = vunpack.c.l.b16 %v21
  %v590 = vunpack.c.l.b16 %v22
  %v591 = vunpack.c.l.b16 %v23
  %v592 = vunpack.c.l.b16 %v24
  %v593 = vunpack.c.l.b16 %v25
  %v594 = vunpack.c.l.b16 %v26
  %v595 = vunpack.c.l.b16 %v27
  %v596 = vunpack.c.l.b16 %v28
  %v597 = vunpack.c.l.b16 %v29
  %v598 = vunpack.c.l.b16 %v30
  %v599 = vunpack.c.l.b16 %v31
  %v600 = vunpack.c.l.b16 %v32
  %v601 = vunpack.c.l.b16 %v33
  %v602 = vunpack.c.l.b16 %v34
  %v603 = vunpack.c.l.b16 %v35
  %v604 = vunpack.c.l.b16 %v36
  %v605 = vunpack.c.l.b16 %v37
  %v606 = vunpack.c.l.b16 %v38
  %v607 = vunpack.c.l.b16 %v39
  %v608 = vunpack.c.l.b16 %v40
  %v609 = vunpack.c.l.b16 %v41
  %v610 = vunpack.c.l.b16 %v42
  %v611 = vunpack.c.l.b16 %v43
  %v612 = vunpack.c.l.b16 %v44
  %v613 = vunpack.c.l.b16 %v45
  %v614 = vunpack.c.l.b16 %v46
  %v615 = vunpack.c.l.b16 %v47
  %v616 = vunpack.c.l.b16 %v48
  %v617 = vunpack.c.l.b16 %v49
  %v618 = vunpack.c.l.b16 %v50
  %v619 = vunpack.c.l.b16 %v51
  %v620 = vunpack.c.l.b16 %v52
  %v621 = vunpack.c.l.b16 %v53
  %v622 = vunpack.c.l.b16 %v54
  %v623 = vunpack.c.l.b16 %v55
  %v624 = vunpack.c.l.b16 %v56
  %v625 = vunpack.c.l.b16 %v57
  %v626 = vunpack.c.l.b16 %v58
  %v627 = vunpack.c.l.b16 %v59
  %v628 = vunpack.c.l.b16 %v60
  %v629 = vunpack.c.l.b16 %v61
  %v630 = vunpack.c.l.b16 %v62
  %v631 = vunpack.c.l.b16 %v63
  %v632 = vunpack.c.l.b16 %v64
  %v633 = vunpack.c.l.b16 %v65
  %v634 = vunpack.c.l.b16 %v66
  %v635 = vunpack.c.l.b16 %v67
  %v636 = vunpack.c.l.b16 %v68
  %v637 = vunpack.c.l.b16 %v69
  %v638 = vunpack.c.l.b16 %v70
  %v639 = vunpack.c.l.b16 %v71
  %v640 = vunpack.c.l.b16 %v72
  %v641 = vunpack.c.l.b16 %v73
  %v642 = vunpack.c.l.b16 %v74
  %v643 = vunpack.c.l.b16 %v75
  %v644 = vunpack.c.l.b16 %v76
  %v645 = vunpack.c.l.b16 %v77
  %v646 = vunpack.c.l.b16 %v78
  %v647 = vunpack.c.l.b16 %v79
  %v648 = vunpack.c.l.b16 %v80
  %v649 = vunpack.c.l.b16 %v81
  %v650 = vunpack.c.l.b16 %v82
  %v651 = vunpack.c.l.b16 %v83
  %v652 = vunpack.c.l.b16 %v84
  %v653 = vunpack.c.l.b16 %v85
  %v654 = vunpack.c.l.b16 %v86
  %v655 = vunpack.c.l.b16 %v87
  %v656 = vunpack.c.l.b16 %v88
  %v657 = vunpack.c.l.b16 %v89
  %v658 = vunpack.c.l.b16 %v90
  %v659 = vunpack.c.l.b16 %v91
  %v660 = vunpack.c.l.b16 %v92
  %v661 = vunpack.c.l.b16 %v93
  %v662 = vunpack.c.l.b16 %v94
  %v663 = vunpack.c.l.b16 %v95
  %v664 = vunpack.c.l.b16 %v96
  %v665 = vunpack.c.l.b16 %v97
  %v666 = vunpack.c.l.b16 %v98
  %v667 = vunpack.c.l.b16 %v99
  %v668 = vunpack.c.l.b16 %v100
  %v669 = vunpack.c.l.b16 %v101
  %v670 = vunpack.c.l.b16 %v102
  %v671 = vunpack.c.l.b16 %v103
  %v672 = vunpack.c.l.b16 %v104
  %v673 = vunpack.c.l.b16 %v105
  %v674 = vunpack.c.l.b16 %v106
  %v675 = vunpack.c.l.b16 %v107
  %v676 = vunpack.c.l.b16 %v108
  %v677 = vunpack.c.l.b16 %v109
  %v678 = vunpack.c.l.b16 %v110
  %v679 = vunpack.c.l.b16 %v111
  %v680 = vunpack.c.l.b16 %v112
  %v681 = vunpack.c.l.b16 %v113
  %v682 = vunpack.c.l.b16 %v114
  %v683 = vunpack.c.l.b16 %v115
  %v684 = vunpack.c.l.b16 %v116
  %v685 = vunpack.c.l.b16 %v117
  %v686 = vunpack.c.l.b16 %v118
  %v687 = vunpack.c.l.b16 %v119
  %v688 = vunpack.c.l.b16 %v120
  %v689 = vunpack.c.l.b16 %v121
  %v690 = vunpack.c.l.b16 %v122
  %v691 = vunpack.c.l.b16 %v123
  %v692 = vunpack.c.l.b16 %v124
  %v693 = vunpack.c.l.b16 %v125
  %v694 = vunpack.c.l.b16 %v126
  %v695 = vunpack.c.l.b16 %v127
  %v696 = vunpack.c.l.b16 %v128
  %v697 = vunpack.c.l.b16 %v129
  %v698 = vunpack.c.l.b16 %v130
  %v699 = vunpack.c.l.b16 %v131
  %v700 = vunpack.c.l.b16 %v132
  %v701 = vunpack.c.l.b16 %v133
  %v702 = vunpack.c.l.b16 %v134
  %v703 = vunpack.c.l.b16 %v135
  %v704 = vunpack.c.l.b16 %v136
  %v705 = vunpack.c.l.b16 %v137
  %v706 = vunpack.c.l.b16 %v138
  %v707 = vunpack.c.l.b16 %v139
  %v708 = vunpack.c.l.b16 %v140
  %v709 = vunpack.c.l.b16 %v141
  %v710 = vunpack.c.l.b16 %v142
  %v711 = vunpack.c.l.b16 %v143
  %v712 = vunpack.c.l.b16 %v144
  %v713 = vunpack.c.l.b16 %v145
  %v714 = vunpack.c.l.b16 %v146
  %v715 = vunpack.c.l.b16 %v147
  %v716 = vunpack.c.l.b16 %v148
  %v717 = vunpack.c.l.b16 %v149
  %v718 = vunpack.c.l.b16 %v150
  %v719 = vunpack.c.l.b16 %v151
  %v720 = vunpack.c.l.b16 %v152
  %v721 = vunpack.c.l.b16 %v153
  %v722 = vunpack.c.l.b16 %v154
  %v723 = vunpack.c.l.b16 %v155
  %v724 = vunpack.c.l.b16 %v156
  %v725 = vunpack.c.l.b16 %v157
  %v726 = vunpack.c.l.b16 %v158
  %v727 = vunpack.c.l.b16 %v159
  %v728 = vunpack.c.l.b16 %v160
  %v729 = vunpack.c.l.b16 %v161
  %v730 = vunpack.c.l.b16 %v162
  %v731 = vunpack.c.l.b16 %v163
  %v732 = vunpack.c.l.b16 %v164
  %v733 = vunpack.c.l.b16 %v165
  %v734 = vunpack.c.l.b16 %v166
  %v735 = vunpack.c.l.b16 %v167
  %v736 = vunpack.c.l.b16 %v168
  %v737 = vunpack.c.l.b16 %v169
  %v738 = vunpack.c.l.b16 %v170
  %v739 = vunpack.c.l.b16 %v171
  %v740 = vunpack.c.l.b16 %v172
  %v741 = vunpack.c.l.b16 %v173
  %v742 = vunpack.c.l.b16 %v174
  %v743 = vunpack.c.l.b16 %v175
  %v744 = vunpack.c.l.b16 %v176
  %v745 = vunpack.c.l.b16 %v177
  %v746 = vunpack.c.l.b16 %v178
  %v747 = vunpack.c.l.b16 %v179
  %v748 = vunpack.c.l.b16 %v180
  %v749 = vunpack.c.l.b16 %v181
  %v750 = vunpack.c.l.b16 %v182
  %v751 = vunpack.c.l.b16 %v183
  %v752 = vunpack.c.l.b16 %v184
  %v753 = vunpack.c.l.b16 %v185
  %v754 = vunpack.c.l.b16 %v186
  %v755 = vunpack.c.l.b16 %v187
  %v756 = vunpack.c.l.b16 %v188
  %v757 = vunpack.c.l.b16 %v189
  %v758 = vunpack.c.l.b16 %v190
  %v759 = vunpack.c.l.b16 %v191
  %v760 = vunpack.c.l.b16 %v192
  %v761 = vunpack.c.l.b16 %v193
  %v762 = vunpack.c.l.b16 %v194
  %v763 = vunpack.c.l.b16 %v195
  %v764 = vunpack.c.l.b16 %v196
  %v765 = vunpack.c.l.b16 %v197
  %v766 = vunpack.c.l.b16 %v198
  %v767 = vunpack.c.l.b16 %v199
  %v768 = vunpack.c.l.b16 %v200
  %v769 = vunpack.c.l.b16 %v201
  %v770 = vunpack.c.l.b16 %v202
  %v771 = vunpack.c.l.b16 %v203
  %v772 = vunpack.c.l.b16 %v204
  %v773 = vunpack.c.l.b16 %v205
  %v774 = vunpack.c.l.b16 %v206
  %v775 = vunpack.c.l.b16 %v207
  %v776 = vunpack.c.l.b16 %v208
  %v777 = vunpack.c.l.b16 %v209
  %v778 = vunpack.c.l.b16 %v210
  %v779 = vunpack.c.l.b16 %v211
  %v780 = vunpack.c.l.b16 %v212
  %v781 = vunpack.c.l.b16 %v213
  %v782 = vunpack.c.l.b16 %v214
  %v783 = vunpack.c.l.b16 %v215
  %v784 = vunpack.c.l.b16 %v216
  %v785 = vunpack.c.l.b16 %v217
  %v786 = vunpack.c.l.b16 %v218
  %v787 = vunpack.c.l.b16 %v219
  %v788 = vunpack.c.l.b16 %v220
  %v789 = vunpack.c.l.b16 %v221
  %v790 = vunpack.c.l.b16 %v222
  %v791 = vunpack.c.l.b16 %v223
  %v792 = vunpack.c.l.b16 %v224
  %v793 = vunpack.c.l.b16 %v225
  %v794 = vunpack.c.l.b16 %v226
  %v795 = vunpack.c.l.b16 %v227
  %v796 = vunpack.c.l.b16 %v228
  %v797 = vunpack.c.l.b16 %v229
  %v798 = vunpack.c.l.b16 %v230
  %v799 = vunpack.c.l.b16 %v231
  %v800 = vunpack.c.l.b16 %v232
  %v801 = vunpack.c.l.b16 %v233
  %v802 = vunpack.c.l.b16 %v234
  %v803 = vunpack.c.l.b16 %v235
  %v804 = vunpack.c.l.b16 %v236
  %v805 = vunpack.c.l.b16 %v237
  %v806 = vunpack.c.l.b16 %v238
  %v807 = vunpack.c.l.b16 %v239
  %v808 = vunpack.c.l.b16 %v240
  %v809 = vunpack.c.l.b16 %v241
  %v810 = vunpack.c.l.b16 %v242
  %v811 = vunpack.c.l.b16 %v243
  %v812 = vunpack.c.l.b16 %v244
  %v813 = vunpack.c.l.b16 %v245
  %v814 = vunpack.c.l.b16 %v246
  %v815 = vunpack.c.l.b16 %v247
  %v816 = vunpack.c.l.b16 %v248
  %v817 = vunpack.c.l.b16 %v249
  %v818 = vunpack.c.l.b16 %v250
  %v819 = vunpack.c.l.b16 %v251
  %v820 = vunpack.c.l.b16 %v252
  %v821 = vunpack.c.l.b16 %v253
  %v822 = vunpack.c.l.b16 %v254
  %v823 = vunpack.c.l.b16 %v255
  %v824 = vunpack.c.l.b16 %v256
  %v825 = vunpack.c.l.b16 %v257
  %v826 = vunpack.c.l.b16 %v258
  %v827 = vunpack.c.l.b16 %v259
  %v828 = vunpack.c.l.b16 %v260
  %v829 = vunpack.c.l.b16 %v261
  %v830 = vunpack.c.l.b16 %v262
  %v831 = vunpack.c.l.b16 %v263
  %v832 = vunpack.c.l.b16 %v264
  %v833 = vunpack.c.l.b16 %v265
  %v834 = vunpack.c.l.b16 %v266
  %v835 = vunpack.c.l.b16 %v267
  %v836 = vunpack.c.l.b16 %v268
  %v837 = vunpack.c.l.b16 %v269
  %v838 = vunpack.c.l.b16 %v270
  %v839 = vunpack.c.l.b16 %v271
  %v840 = vunpack.c.l.b16 %v272
  %v841 = vunpack.c.l.b16 %v273
  %v842 = vunpack.c.l.b16 %v274
  %v843 = vpack.c.b16 %v588, %v587
  %v844 = vpack.c.b16 %v590, %v589
  %v845 = vpack.c.b16 %v592, %v591
  %v846 = vpack.c.b16 %v594, %v593
  %v847 = vpack.c.b16 %v596, %v595
  %v848 = vpack.c.b16 %v598, %v597
  %v849 = vpack.c.b16 %v600, %v599
  %v850 = vpack.c.b16 %v602, %v601
  %v851 = vpack.c.b16 %v604, %v603
  %v852 = vpack.c.b16 %v606, %v605
  %v853 = vpack.c.b16 %v608, %v607
  %v854 = vpack.c.b16 %v610, %v609
  %v855 = vpack.c.b16 %v612, %v611
  %v856 = vpack.c.b16 %v614, %v613
  %v857 = vpack.c.b16 %v616, %v615
  %v858 = vpack.c.b16 %v618, %v617
  %v859 = vpack.c.b16 %v620, %v619
  %v860 = vpack.c.b16 %v622, %v621
  %v861 = vpack.c.b16 %v624, %v623
  %v862 = vpack.c.b16 %v626, %v625
  %v863 = vpack.c.b16 %v628, %v627
  %v864 = vpack.c.b16 %v630, %v629
  %v865 = vpack.c.b16 %v632, %v631
  %v866 = vpack.c.b16 %v634, %v633
  %v867 = vpack.c.b16 %v636, %v635
  %v868 = vpack.c.b16 %v638, %v637
  %v869 = vpack.c.b16 %v640, %v639
  %v870 = vpack.c.b16 %v642, %v641
  %v871 = vpack.c.b16 %v644, %v643
  %v872 = vpack.c.b16 %v646, %v645
  %v873 = vpack.c.b16 %v648, %v647
  %v874 = vpack.c.b16 %v650, %v649
  %v875 = vpack.c.b16 %v652, %v651
  %v876 = vpack.c.b16 %v654, %v653
  %v877 = vpack.c.b16 %v656, %v655
  %v878 = vpack.c.b16 %v658, %v657
  %v879 = vpack.c.b16 %v660, %v659
  %v880 = vpack.c.b16 %v662, %v661
  %v881 = vpack.c.b16 %v664, %v663
  %v882 = vpack.c.b16 %v666, %v665
  %v883 = vpack.c.b16 %v668, %v667
  %v884 = vpack.c.b16 %v670, %v669
  %v885 = vpack.c.b16 %v672, %v671
  %v886 = vpack.c.b16 %v674, %v673
  %v887 = vpack.c.b16 %v676, %v675
  %v888 = vpack.c.b16 %v678, %v677
  %v889 = vpack.c.b16 %v680, %v679
  %v890 = vpack.c.b16 %v682, %v681
  %v891 = vpack.c.b16 %v684, %v683
  %v892 = vpack.c.b16 %v686, %v685
  %v893 = vpack.c.b16 %v688, %v687
  %v894 = vpack.c.b16 %v690, %v689
  %v895 = vpack.c.b16 %v692, %v691
  %v896 = vpack.c.b16 %v694, %v693
  %v897 = vpack.c.b16 %v696, %v695
  %v898 = vpack.c.b16 %v698, %v697
  %v899 = vpack.c.b16 %v700, %v699
  %v900 = vpack.c.b16 %v702, %v701
  %v901 = vpack.c.b16 %v704, %v703
  %v902 = vpack.c.b16 %v706, %v705
  %v903 = vpack.c.b16 %v708, %v707
  %v904 = vpack.c.b16 %v710, %v709
  %v905 = vpack.c.b16 %v712, %v711
  %v906 = vpack.c.b16 %v714, %v713
  %v907 = vpack.c.b16 %v716, %v715
  %v908 = vpack.c.b16 %v718, %v717
  %v909 = vpack.c.b16 %v720, %v719
  %v910 = vpack.c.b16 %v722, %v721
  %v911 = vpack.c.b16 %v724, %v723
  %v912 = vpack.c.b16 %v726, %v725
  %v913 = vpack.c.b16 %v728, %v727
  %v914 = vpack.c.b16 %v730, %v729
  %v915 = vpack.c.b16 %v732, %v731
  %v916 = vpack.c.b16 %v734, %v733
  %v917 = vpack.c.b16 %v736, %v735
  %v918 = vpack.c.b16 %v738, %v737
  %v919 = vpack.c.b16 %v740, %v739
  %v920 = vpack.c.b16 %v742, %v741
  %v921 = vpack.c.b16 %v744, %v743
  %v922 = vpack.c.b16 %v746, %v745
  %v923 = vpack.c.b16 %v748, %v747
  %v924 = vpack.c.b16 %v750, %v749
  %v925 = vpack.c.b16 %v752, %v751
  %v926 = vpack.c.b16 %v754, %v753
  %v927 = vpack.c.b16 %v756, %v755
  %v928 = vpack.c.b16 %v758, %v757
  %v929 = vpack.c.b16 %v760, %v759
  %v930 = vpack.c.b16 %v762, %v761
  %v931 = vpack.c.b16 %v764, %v763
  %v932 = vpack.c.b16 %v766, %v765
  %v933 = vpack.c.b16 %v768, %v767
  %v934 = vpack.c.b16 %v770, %v769
  %v935 = vpack.c.b16 %v772, %v771
  %v936 = vpack.c.b16 %v774, %v773
  %v937 = vpack.c.b16 %v776, %v775
  %v938 = vpack.c.b16 %v778, %v777
  %v939 = vpack.c.b16 %v780, %v779
  %v940 = vpack.c.b16 %v782, %v781
  %v941 = vpack.c.b16 %v784, %v783
  %v942 = vpack.c.b16 %v786, %v785
  %v943 = vpack.c.b16 %v788, %v787
  %v944 = vpack.c.b16 %v790, %v789
  %v945 = vpack.c.b16 %v792, %v791
  %v946 = vpack.c.b16 %v794, %v793
  %v947 = vpack.c.b16 %v796, %v795
  %v948 = vpack.c.b16 %v798, %v797
  %v949 = vpack.c.b16 %v800, %v799
  %v950 = vpack.c.b16 %v802, %v801
  %v951 = vpack.c.b16 %v804, %v803
  %v952 = vpack.c.b16 %v806, %v805
  %v953 = vpack.c.b16 %v808, %v807
  %v954 = vpack.c.b16 %v810, %v809
  %v955 = vpack.c.b16 %v812, %v811
  %v956 = vpack.c.b16 %v814, %v813
  %v957 = vpack.c.b16 %v816, %v815
  %v958 = vpack.c.b16 %v818, %v817
  %v959 = vpack.c.b16 %v820, %v819
  %v960 = vpack.c.b16 %v822, %v821
  %v961 = vpack.c.b16 %v824, %v823
  %v962 = vpack.c.b16 %v826, %v825
  %v963 = vpack.c.b16 %v828, %v827
  %v964 = vpack.c.b16 %v830, %v829
  %v965 = vpack.c.b16 %v832, %v831
  %v966 = vpack.c.b16 %v834, %v833
  %v967 = vpack.c.b16 %v836, %v835
  %v968 = vpack.c.b16 %v838, %v837
  %v969 = vpack.c.b16 %v840, %v839
  %v970 = vpack.c.b16 %v842, %v841
  %1099 = vmatpush.bf16.msra.mxu0 %v850
  %1100 = vmatpush.bf16.msra.mxu0 %v849
  %1101 = vmatpush.bf16.msra.mxu0 %v848
  %1102 = vmatpush.bf16.msra.mxu0 %v847
  %1103 = vmatpush.bf16.msra.mxu0 %v846
  %1104 = vmatpush.bf16.msra.mxu0 %v845
  %1105 = vmatpush.bf16.msra.mxu0 %v844
  %1106 = vmatpush.bf16.msra.mxu0 %v843
  %1107 = vmatmul.bf16.gmra.mxu0 %v299
  %v1108 = vpop.f32.mrf.mxu0
  %v1109 = vadd.f32 0.0, %v1108
  %v1110 = vpop.f32.mrf.mxu0
  %1111 = vdwg.mxu0
  %1112 = vmatpush.bf16.msra.mxu0 %v858
  %1113 = vmatpush.bf16.msra.mxu0 %v857
  %1114 = vmatpush.bf16.msra.mxu0 %v856
  %1115 = vmatpush.bf16.msra.mxu0 %v855
  %1116 = vmatpush.bf16.msra.mxu0 %v854
  %1117 = vmatpush.bf16.msra.mxu0 %v853
  %1118 = vmatpush.bf16.msra.mxu0 %v852
  %1119 = vmatpush.bf16.msra.mxu0 %v851
  %1120 = vmatmul.bf16.gmra.mxu0 %v300
  %v1121 = vpop.f32.mrf.mxu0
  %v1122 = vadd.f32 %v1109, %v1121
  %v1123 = vpop.f32.mrf.mxu0
  %1124 = vdwg.mxu0
  %1125 = vmatpush.bf16.msra.mxu0 %v866
  %1126 = vmatpush.bf16.msra.mxu0 %v865
  %1127 = vmatpush.bf16.msra.mxu0 %v864
  %1128 = vmatpush.bf16.msra.mxu0 %v863
  %1129 = vmatpush.bf16.msra.mxu0 %v862
  %1130 = vmatpush.bf16.msra.mxu0 %v861
  %1131 = vmatpush.bf16.msra.mxu0 %v860
  %1132 = vmatpush.bf16.msra.mxu0 %v859
  %1133 = vmatmul.bf16.gmra.mxu0 %v301
  %v1134 = vpop.f32.mrf.mxu0
  %v1135 = vadd.f32 %v1122, %v1134
  %v1136 = vpop.f32.mrf.mxu0
  %1137 = vdwg.mxu0
  %1138 = vmatpush.bf16.msra.mxu0 %v874
  %1139 = vmatpush.bf16.msra.mxu0 %v873
  %1140 = vmatpush.bf16.msra.mxu0 %v872
  %1141 = vmatpush.bf16.msra.mxu0 %v871
  %1142 = vmatpush.bf16.msra.mxu0 %v870
  %1143 = vmatpush.bf16.msra.mxu0 %v869
  %1144 = vmatpush.bf16.msra.mxu0 %v868
  %1145 = vmatpush.bf16.msra.mxu0 %v867
  %1146 = vmatmul.bf16.gmra.mxu0 %v302
  %v1147 = vpop.f32.mrf.mxu0
  %v1148 = vadd.f32 %v1135, %v1147
  %v1149 = vpop.f32.mrf.mxu0
  %1150 = vdwg.mxu0
  %1151 = vmatpush.bf16.msra.mxu0 %v882
  %1152 = vmatpush.bf16.msra.mxu0 %v881
  %1153 = vmatpush.bf16.msra.mxu0 %v880
  %1154 = vmatpush.bf16.msra.mxu0 %v879
  %1155 = vmatpush.bf16.msra.mxu0 %v878
  %1156 = vmatpush.bf16.msra.mxu0 %v877
  %1157 = vmatpush.bf16.msra.mxu0 %v876
  %1158 = vmatpush.bf16.msra.mxu0 %v875
  %1159 = vmatmul.bf16.gmra.mxu0 %v303
  %v1160 = vpop.f32.mrf.mxu0
  %v1161 = vadd.f32 %v1148, %v1160
  %v1162 = vpop.f32.mrf.mxu0
  %1163 = vdwg.mxu0
  %1164 = vmatpush.bf16.msra.mxu0 %v890
  %1165 = vmatpush.bf16.msra.mxu0 %v889
  %1166 = vmatpush.bf16.msra.mxu0 %v888
  %1167 = vmatpush.bf16.msra.mxu0 %v887
  %1168 = vmatpush.bf16.msra.mxu0 %v886
  %1169 = vmatpush.bf16.msra.mxu0 %v885
  %1170 = vmatpush.bf16.msra.mxu0 %v884
  %1171 = vmatpush.bf16.msra.mxu0 %v883
  %1172 = vmatmul.bf16.gmra.mxu0 %v304
  %v1173 = vpop.f32.mrf.mxu0
  %v1174 = vadd.f32 %v1161, %v1173
  %v1175 = vpop.f32.mrf.mxu0
  %1176 = vdwg.mxu0
  %1177 = vmatpush.bf16.msra.mxu0 %v898
  %1178 = vmatpush.bf16.msra.mxu0 %v897
  %1179 = vmatpush.bf16.msra.mxu0 %v896
  %1180 = vmatpush.bf16.msra.mxu0 %v895
  %1181 = vmatpush.bf16.msra.mxu0 %v894
  %1182 = vmatpush.bf16.msra.mxu0 %v893
  %1183 = vmatpush.bf16.msra.mxu0 %v892
  %1184 = vmatpush.bf16.msra.mxu0 %v891
  %1185 = vmatmul.bf16.gmra.mxu0 %v305
  %v1186 = vpop.f32.mrf.mxu0
  %v1187 = vadd.f32 %v1174, %v1186
  %v1188 = vpop.f32.mrf.mxu0
  %1189 = vdwg.mxu0
  %1190 = vmatpush.bf16.msra.mxu0 %v906
  %1191 = vmatpush.bf16.msra.mxu0 %v905
  %1192 = vmatpush.bf16.msra.mxu0 %v904
  %1193 = vmatpush.bf16.msra.mxu0 %v903
  %1194 = vmatpush.bf16.msra.mxu0 %v902
  %1195 = vmatpush.bf16.msra.mxu0 %v901
  %1196 = vmatpush.bf16.msra.mxu0 %v900
  %1197 = vmatpush.bf16.msra.mxu0 %v899
  %1198 = vmatmul.bf16.gmra.mxu0 %v306
  %v1199 = vpop.f32.mrf.mxu0
  %v1200 = vadd.f32 %v1187, %v1199
  %v1201 = vpop.f32.mrf.mxu0
  %1202 = vdwg.mxu0
  %1203 = vmatpush.bf16.msra.mxu0 %v914
  %1204 = vmatpush.bf16.msra.mxu0 %v913
  %1205 = vmatpush.bf16.msra.mxu0 %v912
  %1206 = vmatpush.bf16.msra.mxu0 %v911
  %1207 = vmatpush.bf16.msra.mxu0 %v910
  %1208 = vmatpush.bf16.msra.mxu0 %v909
  %1209 = vmatpush.bf16.msra.mxu0 %v908
  %1210 = vmatpush.bf16.msra.mxu0 %v907
  %1211 = vmatmul.bf16.gmra.mxu0 %v307
  %v1212 = vpop.f32.mrf.mxu0
  %v1213 = vadd.f32 %v1200, %v1212
  %v1214 = vpop.f32.mrf.mxu0
  %1215 = vdwg.mxu0
  %1216 = vmatpush.bf16.msra.mxu0 %v922
  %1217 = vmatpush.bf16.msra.mxu0 %v921
  %1218 = vmatpush.bf16.msra.mxu0 %v920
  %1219 = vmatpush.bf16.msra.mxu0 %v919
  %1220 = vmatpush.bf16.msra.mxu0 %v918
  %1221 = vmatpush.bf16.msra.mxu0 %v917
  %1222 = vmatpush.bf16.msra.mxu0 %v916
  %1223 = vmatpush.bf16.msra.mxu0 %v915
  %1224 = vmatmul.bf16.gmra.mxu0 %v308
  %v1225 = vpop.f32.mrf.mxu0
  %v1226 = vadd.f32 %v1213, %v1225
  %v1227 = vpop.f32.mrf.mxu0
  %1228 = vdwg.mxu0
  %1229 = vmatpush.bf16.msra.mxu0 %v930
  %1230 = vmatpush.bf16.msra.mxu0 %v929
  %1231 = vmatpush.bf16.msra.mxu0 %v928
  %1232 = vmatpush.bf16.msra.mxu0 %v927
  %1233 = vmatpush.bf16.msra.mxu0 %v926
  %1234 = vmatpush.bf16.msra.mxu0 %v925
  %1235 = vmatpush.bf16.msra.mxu0 %v924
  %1236 = vmatpush.bf16.msra.mxu0 %v923
  %1237 = vmatmul.bf16.gmra.mxu0 %v309
  %v1238 = vpop.f32.mrf.mxu0
  %v1239 = vadd.f32 %v1226, %v1238
  %v1240 = vpop.f32.mrf.mxu0
  %1241 = vdwg.mxu0
  %1242 = vmatpush.bf16.msra.mxu0 %v938
  %1243 = vmatpush.bf16.msra.mxu0 %v937
  %1244 = vmatpush.bf16.msra.mxu0 %v936
  %1245 = vmatpush.bf16.msra.mxu0 %v935
  %1246 = vmatpush.bf16.msra.mxu0 %v934
  %1247 = vmatpush.bf16.msra.mxu0 %v933
  %1248 = vmatpush.bf16.msra.mxu0 %v932
  %1249 = vmatpush.bf16.msra.mxu0 %v931
  %1250 = vmatmul.bf16.gmra.mxu0 %v310
  %v1251 = vpop.f32.mrf.mxu0
  %v1252 = vadd.f32 %v1239, %v1251
  %v1253 = vpop.f32.mrf.mxu0
  %1254 = vdwg.mxu0
  %1255 = vmatpush.bf16.msra.mxu0 %v946
  %1256 = vmatpush.bf16.msra.mxu0 %v945
  %1257 = vmatpush.bf16.msra.mxu0 %v944
  %1258 = vmatpush.bf16.msra.mxu0 %v943
  %1259 = vmatpush.bf16.msra.mxu0 %v942
  %1260 = vmatpush.bf16.msra.mxu0 %v941
  %1261 = vmatpush.bf16.msra.mxu0 %v940
  %1262 = vmatpush.bf16.msra.mxu0 %v939
  %1263 = vmatmul.bf16.gmra.mxu0 %v311
  %v1264 = vpop.f32.mrf.mxu0
  %v1265 = vadd.f32 %v1252, %v1264
  %v1266 = vpop.f32.mrf.mxu0
  %1267 = vdwg.mxu0
  %1268 = vmatpush.bf16.msra.mxu0 %v954
  %1269 = vmatpush.bf16.msra.mxu0 %v953
  %1270 = vmatpush.bf16.msra.mxu0 %v952
  %1271 = vmatpush.bf16.msra.mxu0 %v951
  %1272 = vmatpush.bf16.msra.mxu0 %v950
  %1273 = vmatpush.bf16.msra.mxu0 %v949
  %1274 = vmatpush.bf16.msra.mxu0 %v948
  %1275 = vmatpush.bf16.msra.mxu0 %v947
  %1276 = vmatmul.bf16.gmra.mxu0 %v312
  %v1277 = vpop.f32.mrf.mxu0
  %v1278 = vadd.f32 %v1265, %v1277
  %v1279 = vpop.f32.mrf.mxu0
  %1280 = vdwg.mxu0
  %1281 = vmatpush.bf16.msra.mxu0 %v962
  %1282 = vmatpush.bf16.msra.mxu0 %v961
  %1283 = vmatpush.bf16.msra.mxu0 %v960
  %1284 = vmatpush.bf16.msra.mxu0 %v959
  %1285 = vmatpush.bf16.msra.mxu0 %v958
  %1286 = vmatpush.bf16.msra.mxu0 %v957
  %1287 = vmatpush.bf16.msra.mxu0 %v956
  %1288 = vmatpush.bf16.msra.mxu0 %v955
  %1289 = vmatmul.bf16.gmra.mxu0 %v313
  %v1290 = vpop.f32.mrf.mxu0
  %v1291 = vadd.f32 %v1278, %v1290
  %v1292 = vpop.f32.mrf.mxu0
  %1293 = vdwg.mxu0
  %1294 = vmatpush.bf16.msra.mxu0 %v970
  %1295 = vmatpush.bf16.msra.mxu0 %v969
  %1296 = vmatpush.bf16.msra.mxu0 %v968
  %1297 = vmatpush.bf16.msra.mxu0 %v967
  %1298 = vmatpush.bf16.msra.mxu0 %v966
  %1299 = vmatpush.bf16.msra.mxu0 %v965
  %1300 = vmatpush.bf16.msra.mxu0 %v964
  %1301 = vmatpush.bf16.msra.mxu0 %v963
  %1302 = vmatmul.bf16.gmra.mxu0 %v314
  %v1303 = vpop.f32.mrf.mxu0
  %v1304 = vadd.f32 %v1291, %v1303
  %v1305 = vpop.f32.mrf.mxu0
  %1306 = vdwg.mxu0
  %1307 = vst [vmem:[%s2] sm:$0xff] %v1304
  // Predicated region
  $region10: #{patch_image_discriminator.11} parent=0 // pred_check
    _
  $region11: #{patch_image_discriminator.11} parent=0 // pred_check_branch
    %1309 = sbr.rel (0) target = $region13
  $region12: #{patch_image_discriminator.11} parent=0 // pred_region
    _
  $region13: #{patch_image_discriminator.11} parent=0 // pred_fallthru
    _
  // Predicated region
  $region14: #{patch_image_discriminator.11} parent=0 // pred_check
    _
  $region15: #{patch_image_discriminator.11} parent=0 // pred_check_branch
    %1311 = sbr.rel (0) target = $region17
  $region16: #{patch_image_discriminator.11} parent=0 // pred_region
    _
  $region17: #{patch_image_discriminator.11} parent=0 // pred_fallthru
    _

</llo_original>
